<compile_context>
chip_gen: v7x
topology: tpu7x:2x2x1
jax: 0.10.0
libtpu: 0.0.40
codegen_flags: <defaults>
</compile_context>

<pallas_src>
import math

import jax
import jax.numpy as jnp
from jax.experimental import pallas as pl
from jax.experimental.pallas import tpu as pltpu

_MIB = 1024 * 1024


def _round_up(v, m):
    return ((v + m - 1) // m) * m


def _cdiv(a, b):
    return -(-a // b)


# ---------------------------------------------------------------------------
# One-time feature probe: does this JAX build support BlockSpec(pipeline_mode=)?
# Narrow constructor check only -- never swallows kernel lowering/compile errors.
# ---------------------------------------------------------------------------
def _probe_pipeline_mode():
    if not hasattr(pl, "Buffered"):
        return False
    try:
        pl.BlockSpec((8, 128), lambda i: (i, 0), pipeline_mode=pl.Buffered(1))
        return True
    except TypeError:
        return False


_HAS_PIPELINE_MODE = _probe_pipeline_mode()


def _spec(shape, index_map, buffers=None):
    """BlockSpec with an optional explicit pipeline depth."""
    if buffers is not None and _HAS_PIPELINE_MODE:
        return pl.BlockSpec(shape, index_map, pipeline_mode=pl.Buffered(buffers))
    return pl.BlockSpec(shape, index_map)


# ---------------------------------------------------------------------------
# Chip profile (VMEM budgets + batch-tile targets). Heuristic only: it never
# changes the math, only tiling choices.
# ---------------------------------------------------------------------------
def _chip_profile():
    kind = ""
    try:
        kind = jax.devices()[0].device_kind.lower()
    except Exception:  # heuristic only; never affects correctness
        pass
    vmem_phys = 128 * _MIB
    try:
        vmem_phys = int(pltpu.get_tpu_info().vmem_capacity_bytes)
    except Exception:  # heuristic only; never affects correctness
        pass

    if "v7" in kind or vmem_phys <= 80 * _MIB:
        # v7x: 64 MiB VMEM per TC, 2 TCs/chip, ~311 flops/byte weight-stream roofline.
        return dict(tile_budget=46 * _MIB, vmem_cap=54 * _MIB,
                    tm_tiled=512, tm_resident=256, two_tc=True)
    if "v6" in kind:
        # v6e: 128 MiB VMEM, ~656 flops/byte roofline -> tm>=768 on the H-tiled path.
        return dict(tile_budget=96 * _MIB, vmem_cap=112 * _MIB,
                    tm_tiled=768, tm_resident=256, two_tc=False)
    if "v5" in kind:
        # v5e: 128 MiB VMEM, ~240 flops/byte roofline -> tm=256 already MXU-bound.
        return dict(tile_budget=96 * _MIB, vmem_cap=112 * _MIB,
                    tm_tiled=256, tm_resident=256, two_tc=False)
    # Unknown chip: scale conservatively from reported VMEM.
    return dict(tile_budget=min(96 * _MIB, int(vmem_phys * 0.72)),
                vmem_cap=min(112 * _MIB, int(vmem_phys * 0.85)),
                tm_tiled=512, tm_resident=256, two_tc=False)


# ---------------------------------------------------------------------------
# Rough VMEM footprint estimators (weights + biases + pipelined I/O + scratch)
# ---------------------------------------------------------------------------
def _vmem_resident_bytes(d, h, tm, w_bytes, out_bytes, n_wbuf):
    weights = n_wbuf * 2 * d * h * w_bytes                 # We^T + Wd^T slabs
    biases = n_wbuf * h * 4 + d * 4
    io = 2 * tm * d * (4 + out_bytes)                      # x + out, double-buffered
    temps = tm * h * (4 + w_bytes) + tm * d * w_bytes      # enc f32 + enc cast + x cast
    return weights + biases + io + temps


def _vmem_tiled_bytes(d, th, tm, w_bytes, out_bytes, n_wbuf):
    weights = n_wbuf * 2 * d * th * w_bytes
    biases = n_wbuf * th * 4 + d * 4
    io = 2 * tm * d * (4 + out_bytes)
    scratch = tm * d * (4 + w_bytes)                       # f32 accumulator + cached x cast
    temps = tm * th * (4 + w_bytes)                        # enc f32 + enc cast
    return weights + biases + io + scratch + temps


def _auto_hidden_tile(d, hidden, tm, w_bytes, out_bytes, budget, n_wbuf=2):
    """Largest multiple-of-128 divisor of H whose slabs fit the VMEM budget."""
    cands = [c for c in range(128, hidden, 128) if hidden % c == 0]
    for th in sorted(cands, reverse=True):
        if _vmem_tiled_bytes(d, th, tm, w_bytes, out_bytes, n_wbuf) <= budget:
            return th
    return cands[0] if cands else hidden


# ---------------------------------------------------------------------------
# Kernels
# ---------------------------------------------------------------------------
def _sae_kernel_resident(x_ref, we_ref, be_ref, wd_ref, bd_ref, o_ref):
    """Weights fully resident in VMEM (nh == 1): one batch tile per grid step.

    No accumulator round-trip -- the second matmul + decoder bias are written
    straight to o_ref.
    """
    x = x_ref[...].astype(we_ref.dtype)
    enc = jnp.dot(x, we_ref[...], preferred_element_type=jnp.float32)
    enc = jnp.maximum(enc + be_ref[...], 0.0)              # fused Linear + ReLU (f32)
    dec = jnp.dot(enc.astype(wd_ref.dtype), wd_ref[...],
                  preferred_element_type=jnp.float32)
    o_ref[...] = (dec + bd_ref[...]).astype(o_ref.dtype)


def _sae_kernel_tiled(x_ref, we_ref, be_ref, wd_ref, bd_ref, o_ref, acc_ref, xb_ref):
    """Hidden dim tiled on a trailing 'arbitrary' grid axis, f32 VMEM accumulator.

    The bf16 cast of the x tile is cached in xb_ref at h == 0 and reused for the
    remaining hidden steps (frees VALU slots under the MXU).
    """
    h = pl.program_id(1)

    @pl.when(h == 0)
    def _init():
        acc_ref[...] = jnp.zeros_like(acc_ref)
        xb_ref[...] = x_ref[...].astype(xb_ref.dtype)

    enc = jnp.dot(xb_ref[...], we_ref[...], preferred_element_type=jnp.float32)
    enc = jnp.maximum(enc + be_ref[...], 0.0)
    acc_ref[...] += jnp.dot(enc.astype(wd_ref.dtype), wd_ref[...],
                            preferred_element_type=jnp.float32)

    @pl.when(h == pl.num_programs(1) - 1)
    def _finalize():
        o_ref[...] = (acc_ref[...] + bd_ref[...]).astype(o_ref.dtype)


# ---------------------------------------------------------------------------
# Parameter preparation (once, outside the hot path)
# ---------------------------------------------------------------------------
def prepare_sae_params(w_enc, b_enc, w_dec, b_dec, *,
                       compute_dtype=jnp.bfloat16, pad_to=128):
    """Transpose / cast / pad weights ONCE, outside the per-call hot path.

    PyTorch layout in:  w_enc (H, D), b_enc (H,), w_dec (D, H), b_dec (D,)
    Kernel layout out:  We^T (Dp, Hp), b_enc (1, Hp), Wd^T (Hp, Dp), b_dec (1, Dp)
    with D/H zero-padded to multiples of `pad_to` (lane-dense unmasked stores).
    compute_dtype=bfloat16 feeds the MXU natively and halves weight HBM/VMEM
    traffic; pass jnp.float32 for f32-faithful PyTorch numerics (slower).
    Zero padding is exact: padded hidden units see relu(0 + 0) = 0 and padded
    output features are sliced off by the forward wrapper.
    """
    w_enc = jnp.asarray(w_enc)
    w_dec = jnp.asarray(w_dec)
    hidden, d_in = w_enc.shape
    d_pad = _round_up(d_in, pad_to) if pad_to else d_in
    h_pad = _round_up(hidden, pad_to) if pad_to else hidden

    we_t = jnp.transpose(w_enc).astype(compute_dtype)       # (D, H)
    wd_t = jnp.transpose(w_dec).astype(compute_dtype)       # (H, D)
    be = jnp.asarray(b_enc, jnp.float32).reshape(1, -1)     # (1, H)
    bd = jnp.asarray(b_dec, jnp.float32).reshape(1, -1)     # (1, D)
    if (d_pad, h_pad) != (d_in, hidden):
        we_t = jnp.pad(we_t, ((0, d_pad - d_in), (0, h_pad - hidden)))
        wd_t = jnp.pad(wd_t, ((0, h_pad - hidden), (0, d_pad - d_in)))
        be = jnp.pad(be, ((0, 0), (0, h_pad - hidden)))
        bd = jnp.pad(bd, ((0, 0), (0, d_pad - d_in)))
    return we_t, be, wd_t, bd


# ---------------------------------------------------------------------------
# Forward wrapper
# ---------------------------------------------------------------------------
def sparse_autoencoder_forward(x, params, *, tm=None, th=None, out_dtype=None):
    """decoded = relu(x @ W_enc.T + b_enc) @ W_dec.T + b_dec, fused on TPU.

    x: (B, D) activations. params: output of prepare_sae_params.
    tm: batch tile (None -> chip-aware choice: resident path 256; H-tiled path
        v6e 768 / v7x 512 / v5e 256). th: hidden tile (None -> keep weights
        resident if they fit the chip's VMEM budget, else the largest
        multiple-of-128 divisor of H that fits). out_dtype: output dtype
        (None -> x.dtype; pass bf16 to cut output HBM traffic ~25%).
    """
    we_t, be, wd_t, bd = params
    b, d_in = x.shape
    d_pad, hidden = we_t.shape
    if not (d_pad >= d_in and d_pad - d_in < 128):
        raise ValueError(f"x feature dim {d_in} incompatible with prepared D={d_pad}")
    out_dtype = x.dtype if out_dtype is None else jnp.dtype(out_dtype)
    w_bytes = jnp.dtype(we_t.dtype).itemsize
    out_bytes = jnp.dtype(out_dtype).itemsize
    prof = _chip_profile()
    n_wbuf_res = 1 if _HAS_PIPELINE_MODE else 2   # resident weights single-buffered?

    # ---- feature padding (prepared params are already 128-padded) ------------
    if d_pad != d_in:
        x = jnp.pad(x, ((0, 0), (0, d_pad - d_in)))

    # ---- batch tile -----------------------------------------------------------
    auto_tm = tm is None
    resident_ok = _vmem_resident_bytes(d_pad, hidden, prof["tm_resident"], w_bytes,
                                       out_bytes, n_wbuf_res) <= prof["tile_budget"]
    if auto_tm:
        tm = prof["tm_resident"] if resident_ok else prof["tm_tiled"]
    tm = _round_up(max(8, int(tm)), 8)
    tm = min(tm, _round_up(b, 8))
    if prof["two_tc"] and b > 16:
        # keep nb >= 2 so the 'parallel' batch axis can shard across both TensorCores
        tm = min(tm, max(8, _round_up(_cdiv(b, 2), 8)))
    nb = _cdiv(b, tm)
    if auto_tm and resident_ok:
        # resident path is x/out-HBM-bound: shave tm to minimize padded rows
        # (never done on the H-tiled path, where intensity == tm flops/weight-byte)
        tm = min(tm, _round_up(_cdiv(b, nb), 8))
    b_pad = nb * tm
    if b_pad != b:
        x = jnp.pad(x, ((0, b_pad - b), (0, 0)))

    # ---- hidden tiling --------------------------------------------------------
    if th is None:
        if _vmem_resident_bytes(d_pad, hidden, tm, w_bytes, out_bytes,
                                n_wbuf_res) <= prof["tile_budget"]:
            th = hidden
        else:
            th = _auto_hidden_tile(d_pad, hidden, tm, w_bytes, out_bytes,
                                   prof["tile_budget"])
    if hidden % th != 0:
        raise ValueError(f"hidden tile {th} must divide hidden size {hidden}")
    if th != hidden and th % 128 != 0:
        raise ValueError("hidden tile must be a multiple of 128 (or the full H)")
    nh = hidden // th
    resident = nh == 1

    # ---- weight pipeline depth on the H-tiled path ----------------------------
    wbuf = None
    if (not resident) and _HAS_PIPELINE_MODE and nh > 2:
        if _vmem_tiled_bytes(d_pad, th, tm, w_bytes, out_bytes, 3) <= prof["tile_budget"]:
            wbuf = 3

    # ---- advisory cost + explicit VMEM limit ----------------------------------
    w_stream = 1 if resident else nb   # weight slabs re-streamed per batch tile
    cost = pl.CostEstimate(
        flops=4 * b_pad * d_pad * hidden,                     # two matmuls
        transcendentals=0,
        bytes_accessed=int(b_pad * d_pad * (4 + out_bytes)
                           + w_stream * (we_t.size + wd_t.size) * w_bytes
                           + (be.size + bd.size) * 4),
    )
    if resident:
        est = _vmem_resident_bytes(d_pad, hidden, tm, w_bytes, out_bytes, n_wbuf_res)
    else:
        est = _vmem_tiled_bytes(d_pad, th, tm, w_bytes, out_bytes, wbuf or 2)
    vmem_limit = int(min(prof["vmem_cap"], max(32 * _MIB, int(1.4 * est))))

    # ---- grid / specs ----------------------------------------------------------
    if resident:
        grid = (nb,)
        in_specs = [
            pl.BlockSpec((tm, d_pad), lambda i: (i, 0)),            # x tile
            _spec((d_pad, hidden), lambda i: (0, 0), buffers=1),    # We^T (resident)
            _spec((1, hidden), lambda i: (0, 0), buffers=1),        # b_enc
            _spec((hidden, d_pad), lambda i: (0, 0), buffers=1),    # Wd^T (resident)
            _spec((1, d_pad), lambda i: (0, 0), buffers=1),         # b_dec
        ]
        out_specs = pl.BlockSpec((tm, d_pad), lambda i: (i, 0))
        scratch_shapes = []
        kernel = _sae_kernel_resident
        semantics = ("parallel",)
    else:
        grid = (nb, nh)                                             # reduction axis last
        in_specs = [
            pl.BlockSpec((tm, d_pad), lambda i, h: (i, 0)),         # x tile
            _spec((d_pad, th), lambda i, h: (0, h), buffers=wbuf),  # We^T slab
            pl.BlockSpec((1, th), lambda i, h: (0, h)),             # b_enc slab
            _spec((th, d_pad), lambda i, h: (h, 0), buffers=wbuf),  # Wd^T slab
            _spec((1, d_pad), lambda i, h: (0, 0), buffers=1),      # b_dec (constant)
        ]
        out_specs = pl.BlockSpec((tm, d_pad), lambda i, h: (i, 0))
        scratch_shapes = [pltpu.VMEM((tm, d_pad), jnp.float32),     # f32 accumulator
                          pltpu.VMEM((tm, d_pad), we_t.dtype)]      # cached cast of x
        kernel = _sae_kernel_tiled
        semantics = ("parallel", "arbitrary")

    out = pl.pallas_call(
        kernel,
        out_shape=jax.ShapeDtypeStruct((b_pad, d_pad), out_dtype),
        grid_spec=pltpu.PrefetchScalarGridSpec(
            num_scalar_prefetch=0,
            grid=grid,
            in_specs=in_specs,
            out_specs=out_specs,
            scratch_shapes=scratch_shapes,
        ),
        compiler_params=pltpu.CompilerParams(
            dimension_semantics=semantics,
            vmem_limit_bytes=vmem_limit,
        ),
        cost_estimate=cost,
    )(x, we_t, be, wd_t, bd)

    if b_pad != b or d_pad != d_in:
        out = out[:b, :d_in]
    return out


# ---------------------------------------------------------------------------
# PyTorch-style initializers (deterministic, for the self-test)
# ---------------------------------------------------------------------------
def xavier_uniform(key, shape):
    # matches torch.nn.init.xavier_uniform_ for a (fan_out, fan_in) Linear weight
    fan_out, fan_in = shape
    bound = math.sqrt(6.0 / (fan_in + fan_out))
    return jax.random.uniform(key, shape, jnp.float32, -bound, bound)


def linear_default_bias(key, fan_in, fan_out):
    # matches PyTorch nn.Linear default bias init: U(-1/sqrt(fan_in), 1/sqrt(fan_in))
    bound = 1.0 / math.sqrt(fan_in)
    return jax.random.uniform(key, (fan_out,), jnp.float32, -bound, bound)


if __name__ == "__main__":
    # Small shapes consistent with the module (Linear in -> hidden -> in).
    # B deliberately not a multiple of the batch tile (exercises padding).
    B, D_IN, HIDDEN = 300, 512, 1024

    key = jax.random.PRNGKey(0)
    k_x, k_we, k_be, k_wd, k_bd = jax.random.split(key, 5)

    x = jax.random.normal(k_x, (B, D_IN), jnp.float32)
    w_enc = xavier_uniform(k_we, (HIDDEN, D_IN))        # encoder[0].weight
    b_enc = linear_default_bias(k_be, D_IN, HIDDEN)     # encoder[0].bias
    w_dec = xavier_uniform(k_wd, (D_IN, HIDDEN))        # decoder.weight
    b_dec = linear_default_bias(k_bd, HIDDEN, D_IN)     # decoder.bias

    # Prepare (transpose + bf16 cast + 128-pad) once, outside the hot path.
    params = prepare_sae_params(w_enc, b_enc, w_dec, b_dec)
    we_t, be, wd_t, bd = params

    # Reference 1: same bf16 casts / f32 accumulation as the kernel (tight check).
    xc = x.astype(we_t.dtype)
    h_ref = jnp.maximum(jnp.dot(xc, we_t, preferred_element_type=jnp.float32) + be, 0.0)
    ref = jnp.dot(h_ref.astype(wd_t.dtype), wd_t, preferred_element_type=jnp.float32) + bd
    # Reference 2: pure-f32 PyTorch semantics (loose tolerance: bf16 MXU compute).
    ref32 = jnp.maximum(x @ w_enc.T + b_enc, 0.0) @ w_dec.T + b_dec

    # 1) Auto path: at these shapes the weights are resident (specialized kernel).
    out = jax.block_until_ready(sparse_autoencoder_forward(x, params))
    assert out.shape == (B, D_IN) and out.dtype == jnp.float32
    assert jnp.allclose(out, ref, atol=2e-3, rtol=2e-3), \
        float(jnp.max(jnp.abs(out - ref)))
    assert jnp.allclose(out, ref32, atol=1e-1, rtol=1e-2), \
        float(jnp.max(jnp.abs(out - ref32)))

    # 2) Forced hidden-tiled accumulator path (exercises pl.when init/finalize,
    #    the cached x cast, and the deeper weight pipeline).
    out_t = jax.block_until_ready(sparse_autoencoder_forward(x, params, tm=128, th=256))
    assert out_t.shape == (B, D_IN)
    assert jnp.allclose(out_t, ref, atol=2e-3, rtol=2e-3), \
        float(jnp.max(jnp.abs(out_t - ref)))

    print("KERNEL_OK")
</pallas_src>

<mosaic_0001>
module attributes {stable_mosaic.version = 11 : i64} {
  func.func @_sae_kernel_resident(%arg0: i32, %arg1: memref<152x512xf32, #tpu.memory_space<vmem>>, %arg2: memref<512x1024xbf16, #tpu.memory_space<vmem>>, %arg3: memref<1x1024xf32, #tpu.memory_space<vmem>>, %arg4: memref<1024x512xbf16, #tpu.memory_space<vmem>>, %arg5: memref<1x512xf32, #tpu.memory_space<vmem>>, %arg6: memref<152x512xf32, #tpu.memory_space<vmem>>) attributes {dimension_semantics = [#tpu.dimension_semantics<parallel>], iteration_bounds = array<i64: 2>, scalar_prefetch = 0 : i64, scratch_operands = 0 : i64, tpu.core_type = #tpu.core_type<tc>, window_params = [{transform_indices = @transform_0, window_bounds = array<i64: 152, 512>}, {pipeline_mode = #tpu.pipeline_mode<synchronous>, transform_indices = @transform_1, window_bounds = array<i64: 512, 1024>}, {pipeline_mode = #tpu.pipeline_mode<synchronous>, transform_indices = @transform_2, window_bounds = array<i64: 1, 1024>}, {pipeline_mode = #tpu.pipeline_mode<synchronous>, transform_indices = @transform_3, window_bounds = array<i64: 1024, 512>}, {pipeline_mode = #tpu.pipeline_mode<synchronous>, transform_indices = @transform_4, window_bounds = array<i64: 1, 512>}, {transform_indices = @transform_5, window_bounds = array<i64: 152, 512>}]} {
    %c0 = arith.constant 0 : index
    %c0_0 = arith.constant 0 : index
    %0 = vector.load %arg1[%c0, %c0_0] : memref<152x512xf32, #tpu.memory_space<vmem>>, vector<152x512xf32>
    %1 = arith.truncf %0 : vector<152x512xf32> to vector<152x512xbf16>
    %c0_1 = arith.constant 0 : index
    %c0_2 = arith.constant 0 : index
    %2 = vector.load %arg2[%c0_1, %c0_2] : memref<512x1024xbf16, #tpu.memory_space<vmem>>, vector<512x1024xbf16>
    %cst = arith.constant dense<0.000000e+00> : vector<152x1024xf32>
    %3 = tpu.matmul %1, %2, %cst {dimension_numbers = #tpu.dot_dimension_numbers<[1], [0], [0], [1], [0, 0, 1, 1], [], []>} : vector<152x512xbf16>, vector<512x1024xbf16>, vector<152x1024xf32> -> vector<152x1024xf32>
    %c0_3 = arith.constant 0 : index
    %c0_4 = arith.constant 0 : index
    %4 = vector.load %arg3[%c0_3, %c0_4] : memref<1x1024xf32, #tpu.memory_space<vmem>>, vector<1x1024xf32>
    %5 = vector.broadcast %4 : vector<1x1024xf32> to vector<152x1024xf32>
    %6 = arith.addf %3, %5 : vector<152x1024xf32>
    %cst_5 = arith.constant 0.000000e+00 : f32
    %7 = vector.broadcast %cst_5 : f32 to vector<152x1024xf32>
    %8 = arith.maximumf %6, %7 : vector<152x1024xf32>
    %9 = arith.truncf %8 : vector<152x1024xf32> to vector<152x1024xbf16>
    %c0_6 = arith.constant 0 : index
    %c0_7 = arith.constant 0 : index
    %10 = vector.load %arg4[%c0_6, %c0_7] : memref<1024x512xbf16, #tpu.memory_space<vmem>>, vector<1024x512xbf16>
    %cst_8 = arith.constant dense<0.000000e+00> : vector<152x512xf32>
    %11 = tpu.matmul %9, %10, %cst_8 {dimension_numbers = #tpu.dot_dimension_numbers<[1], [0], [0], [1], [0, 0, 1, 1], [], []>} : vector<152x1024xbf16>, vector<1024x512xbf16>, vector<152x512xf32> -> vector<152x512xf32>
    %c0_9 = arith.constant 0 : index
    %c0_10 = arith.constant 0 : index
    %12 = vector.load %arg5[%c0_9, %c0_10] : memref<1x512xf32, #tpu.memory_space<vmem>>, vector<1x512xf32>
    %13 = vector.broadcast %12 : vector<1x512xf32> to vector<152x512xf32>
    %14 = arith.addf %11, %13 : vector<152x512xf32>
    %c0_11 = arith.constant 0 : index
    %c0_12 = arith.constant 0 : index
    %15 = vector.load %arg6[%c0_11, %c0_12] : memref<152x512xf32, #tpu.memory_space<vmem>>, vector<152x512xf32>
    tpu.vector_store %arg6[%c0_11, %c0_12], %14 {strides = array<i32>} : memref<152x512xf32, #tpu.memory_space<vmem>>, vector<152x512xf32>,
    return
  }
  func.func @transform_0(%arg0: i32) -> (i32, i32) {
    %c0_i32 = arith.constant 0 : i32
    %c0_i32_0 = arith.constant 0 : i32
    return %arg0, %c0_i32 : i32, i32
  }
  func.func @transform_1(%arg0: i32) -> (i32, i32) {
    %c0_i32 = arith.constant 0 : i32
    %c0_i32_0 = arith.constant 0 : i32
    %c0_i32_1 = arith.constant 0 : i32
    return %c0_i32, %c0_i32_0 : i32, i32
  }
  func.func @transform_2(%arg0: i32) -> (i32, i32) {
    %c0_i32 = arith.constant 0 : i32
    %c0_i32_0 = arith.constant 0 : i32
    %c0_i32_1 = arith.constant 0 : i32
    return %c0_i32, %c0_i32_0 : i32, i32
  }
  func.func @transform_3(%arg0: i32) -> (i32, i32) {
    %c0_i32 = arith.constant 0 : i32
    %c0_i32_0 = arith.constant 0 : i32
    %c0_i32_1 = arith.constant 0 : i32
    return %c0_i32, %c0_i32_0 : i32, i32
  }
  func.func @transform_4(%arg0: i32) -> (i32, i32) {
    %c0_i32 = arith.constant 0 : i32
    %c0_i32_0 = arith.constant 0 : i32
    %c0_i32_1 = arith.constant 0 : i32
    return %c0_i32, %c0_i32_0 : i32, i32
  }
  func.func @transform_5(%arg0: i32) -> (i32, i32) {
    %c0_i32 = arith.constant 0 : i32
    %c0_i32_0 = arith.constant 0 : i32
    return %arg0, %c0_i32 : i32, i32
  }
}

</mosaic_0001>

<llo_original>
// kernel: tpu_custom_call.1
$region0: #{tpu_custom_call.1}
  #allocation0 [shape = 'u32[]', space=smem, size = 0x4, offset = 0x4, fixed_abs, tag = 'smem constant byte address 0x4 - core index']
  #allocation1 [shape = 'u32[144,128]{1,0:T(1,128)}', space=vmem, size = 0x12000, scoped, tag = 'internal scratch']
  %s0 = inlined_call_operand.hbm [shape: f32[304,512], index: 0, kind: input, shape index: {}]
  %s1 = inlined_call_operand.hbm [shape: bf16[512,1024], index: 1, kind: input, shape index: {}]
  %s2 = inlined_call_operand.hbm [shape: f32[1,1024], index: 2, kind: input, shape index: {}]
  %s3 = inlined_call_operand.hbm [shape: bf16[1024,512], index: 3, kind: input, shape index: {}]
  %s4 = inlined_call_operand.vmem [shape: f32[1,512], index: 4, kind: input, shape index: {}]
  %s5 = inlined_call_operand.hbm [shape: f32[304,512], index: 5, kind: output, shape index: {}]
  %s6 = sld [smem:[#allocation0]]
  $region69: #{tpu_custom_call.1} parent=0
    _
  %s8 = ssub.s32 1, %s6
  %s9 = scalar_select 0, %s8, %s6
  $region1: #{tpu_custom_call.1} parent=0
    #allocation2 [shape = 'u8[622592]{0}', space=vmem, size = 0x98000, scoped, tag = 'input window, operand 0']
    #allocation3 [shape = 's32[2]{0}', space=sflag, size = 0x8, scoped, tag = 'scoped memory for tpu_custom_call.1']
    #allocation4 [shape = 's32[2]{0}', space=sflag, size = 0x8, scoped, tag = 'scoped memory for tpu_custom_call.1']
    #allocation5 [shape = 'u8[1048576]{0}', space=vmem, size = 0x100000, scoped, tag = 'input window, operand 1, single buffered']
    #allocation6 [shape = 's32[1]{0}', space=sflag, size = 0x4, scoped, tag = 'scoped memory for tpu_custom_call.1']
    #allocation7 [shape = 'u8[4096]{0}', space=vmem, size = 0x1000, scoped, tag = 'input window, operand 2, single buffered']
    #allocation8 [shape = 'u8[1048576]{0}', space=vmem, size = 0x100000, scoped, tag = 'input window, operand 3, single buffered']
    #allocation9 [shape = 's32[1]{0}', space=sflag, size = 0x4, scoped, tag = 'scoped memory for tpu_custom_call.1']
    #allocation10 [shape = 'u8[622592]{0}', space=vmem, size = 0x98000, scoped, tag = 'output window, operand 0']
    %10 = vsyncpa [#allocation3], 0
    %s11 = scalar_lea.sflag [#allocation3], 1
    %12 = vsyncpa %s11, 0
    %13 = vsyncpa [#allocation6], 0
    %14 = vsyncpa [#allocation9], 0
    %15 = vsyncpa [#allocation4], 0
    %s16 = scalar_lea.sflag [#allocation4], 1
    %17 = vsyncpa %s16, 0
    loop: start=0, step=1, limit=4
    $region2: #{tpu_custom_call.1} parent=1 // loop_pre_header
      _
    $region3: #{tpu_custom_call.1} parent=1 // loop_header
      %s19 = sphi 0, %s23
      %p20 = scmp.ge.s32.totalorder %s19, 4
      %s29 = sphi 0, %s31
      %s32 = sphi 0, %s29
      %s33 = sphi 0, %s32
      %s49 = sphi 0, %s33
      %s53 = sphi 0, %s53
      %s55 = sphi 0, %s53
      %s56 = sphi 0, %s55
      %s70 = sphi 0, %s56
      %s74 = sphi 0, %s74
      %s76 = sphi 0, %s74
      %s77 = sphi 0, %s76
      %s91 = sphi 0, %s77
      %s95 = sphi 0, %s95
      %s97 = sphi 0, %s95
      %s98 = sphi 0, %s97
      %s112 = sphi 0, %s98
      %s116 = sphi 0, %s116
      %s118 = sphi 0, %s116
      %s119 = sphi 0, %s118
      %s133 = sphi 0, %s119
      %s139 = sphi 0, %s141
      %s142 = sphi 0, %s139
      %s143 = sphi 0, %s142
      %s159 = sphi 0, %s143
    $region4: #{tpu_custom_call.1} parent=1 // loop_header_branch
      %22 = sbr.rel (%p20) target = $region8
    $region5: #{tpu_custom_call.1} parent=1 // loop_body
      %s24 = ssub.s32 %s19, 1
      %s25 = ssub.s32 %s19, 2
      %s26 = sadd.s32 %s19, 1
      %s27 = ssub.s32 %s19, %s26
      %p28 = scmp.eq.s32.totalorder %s27, 0
      %s30 = sadd.s32 %s29, 1
      %s31 = scalar_select %p28, %s29, %s30
      %p34 = pneg %p28
      %p35 = scmp.eq.s32.totalorder %s19, 1
      %p36 = por %p34, %p35
      %p37 = scmp.ne.s32.totalorder %s29, %s32
      %p38 = scmp.eq.s32.totalorder %s19, 0
      %p39 = por %p37, %p38
      %p40 = scmp.ne.s32.totalorder %s29, %s32
      %p41 = scmp.eq.s32.totalorder %s24, 1
      %p42 = por %p40, %p41
      %p43 = scmp.ne.s32.totalorder %s32, %s33
      %p44 = scmp.eq.s32.totalorder %s24, 0
      %p45 = por %p43, %p44
      %p46 = scmp.ne.s32.totalorder %s32, %s33
      %p47 = scmp.eq.s32.totalorder %s25, 1
      %p48 = por %p46, %p47
      %p50 = scmp.ne.s32.totalorder %s33, %s49
      %p51 = scmp.eq.s32.totalorder %s25, 0
      %p52 = por %p50, %p51
      %s54 = sadd.s32 %s53, 1
      %p57 = scmp.eq.s32.totalorder %s19, 1
      %p58 = scmp.ne.s32.totalorder %s53, %s55
      %p59 = scmp.eq.s32.totalorder %s19, 0
      %p60 = por %p58, %p59
      %p61 = scmp.ne.s32.totalorder %s53, %s55
      %p62 = scmp.eq.s32.totalorder %s24, 1
      %p63 = por %p61, %p62
      %p64 = scmp.ne.s32.totalorder %s55, %s56
      %p65 = scmp.eq.s32.totalorder %s24, 0
      %p66 = por %p64, %p65
      %p67 = scmp.ne.s32.totalorder %s55, %s56
      %p68 = scmp.eq.s32.totalorder %s25, 1
      %p69 = por %p67, %p68
      %p71 = scmp.ne.s32.totalorder %s56, %s70
      %p72 = scmp.eq.s32.totalorder %s25, 0
      %p73 = por %p71, %p72
      %s75 = sadd.s32 %s74, 1
      %p78 = scmp.eq.s32.totalorder %s19, 1
      %p79 = scmp.ne.s32.totalorder %s74, %s76
      %p80 = scmp.eq.s32.totalorder %s19, 0
      %p81 = por %p79, %p80
      %p82 = scmp.ne.s32.totalorder %s74, %s76
      %p83 = scmp.eq.s32.totalorder %s24, 1
      %p84 = por %p82, %p83
      %p85 = scmp.ne.s32.totalorder %s76, %s77
      %p86 = scmp.eq.s32.totalorder %s24, 0
      %p87 = por %p85, %p86
      %p88 = scmp.ne.s32.totalorder %s76, %s77
      %p89 = scmp.eq.s32.totalorder %s25, 1
      %p90 = por %p88, %p89
      %p92 = scmp.ne.s32.totalorder %s77, %s91
      %p93 = scmp.eq.s32.totalorder %s25, 0
      %p94 = por %p92, %p93
      %s96 = sadd.s32 %s95, 1
      %p99 = scmp.eq.s32.totalorder %s19, 1
      %p100 = scmp.ne.s32.totalorder %s95, %s97
      %p101 = scmp.eq.s32.totalorder %s19, 0
      %p102 = por %p100, %p101
      %p103 = scmp.ne.s32.totalorder %s95, %s97
      %p104 = scmp.eq.s32.totalorder %s24, 1
      %p105 = por %p103, %p104
      %p106 = scmp.ne.s32.totalorder %s97, %s98
      %p107 = scmp.eq.s32.totalorder %s24, 0
      %p108 = por %p106, %p107
      %p109 = scmp.ne.s32.totalorder %s97, %s98
      %p110 = scmp.eq.s32.totalorder %s25, 1
      %p111 = por %p109, %p110
      %p113 = scmp.ne.s32.totalorder %s98, %s112
      %p114 = scmp.eq.s32.totalorder %s25, 0
      %p115 = por %p113, %p114
      %s117 = sadd.s32 %s116, 1
      %p120 = scmp.eq.s32.totalorder %s19, 1
      %p121 = scmp.ne.s32.totalorder %s116, %s118
      %p122 = scmp.eq.s32.totalorder %s19, 0
      %p123 = por %p121, %p122
      %p124 = scmp.ne.s32.totalorder %s116, %s118
      %p125 = scmp.eq.s32.totalorder %s24, 1
      %p126 = por %p124, %p125
      %p127 = scmp.ne.s32.totalorder %s118, %s119
      %p128 = scmp.eq.s32.totalorder %s24, 0
      %p129 = por %p127, %p128
      %p130 = scmp.ne.s32.totalorder %s118, %s119
      %p131 = scmp.eq.s32.totalorder %s25, 1
      %p132 = por %p130, %p131
      %p134 = scmp.ne.s32.totalorder %s119, %s133
      %p135 = scmp.eq.s32.totalorder %s25, 0
      %p136 = por %p134, %p135
      %s137 = ssub.s32 %s19, %s26
      %p138 = scmp.eq.s32.totalorder %s137, 0
      %s140 = sadd.s32 %s139, 1
      %s141 = scalar_select %p138, %s139, %s140
      %p144 = pneg %p138
      %p145 = scmp.eq.s32.totalorder %s19, 1
      %p146 = por %p144, %p145
      %p147 = scmp.ne.s32.totalorder %s139, %s142
      %p148 = scmp.eq.s32.totalorder %s19, 0
      %p149 = por %p147, %p148
      %p150 = scmp.ne.s32.totalorder %s139, %s142
      %p151 = scmp.eq.s32.totalorder %s24, 1
      %p152 = por %p150, %p151
      %p153 = scmp.ne.s32.totalorder %s142, %s143
      %p154 = scmp.eq.s32.totalorder %s24, 0
      %p155 = por %p153, %p154
      %p156 = scmp.ne.s32.totalorder %s142, %s143
      %p157 = scmp.eq.s32.totalorder %s25, 1
      %p158 = por %p156, %p157
      %p160 = scmp.ne.s32.totalorder %s143, %s159
      %p161 = scmp.eq.s32.totalorder %s25, 0
      %p162 = por %p160, %p161
      %p163 = scmp.le.s32.totalorder 1, %s19
      %p164 = scmp.lt.s32.totalorder %s19, 3
      %p165 = pnand %p163, %p164
      %p166 = pneg %p165
      // Predicated region
      $region9: #{tpu_custom_call.1} parent=5 // pred_check
        _
      $region10: #{tpu_custom_call.1} parent=5 // pred_check_branch
        %168 = sbr.rel (%p165) target = $region12
      $region11: #{tpu_custom_call.1} parent=5 // pred_region
        %s169 = ssub.s32 %s19, 1
        // Predicated region
        $region13: #{tpu_custom_call.1} parent=11 // pred_check
          %p170 = pneg %p66
        $region14: #{tpu_custom_call.1} parent=11 // pred_check_branch
          %172 = sbr.rel (%p170) target = $region16
        $region15: #{tpu_custom_call.1} parent=11 // pred_region
          %s174 = ssub.s32 32768, 32768
          %175 = vsyncadd [#allocation6], %s174
          %s176 = sshll.u32 [#allocation5], 4
          %s177 = int_to_ptr.vmem [resolvable:$true] %s176
          %182 = dma.hbm_to_vmem [thread:$0]  %s1, 32768, %s177, [#allocation6], 512, 512, 32
        $region16: #{tpu_custom_call.1} parent=11 // pred_fallthru
          _
        // Predicated region
        $region17: #{tpu_custom_call.1} parent=11 // pred_check
          %p183 = pneg %p87
        $region18: #{tpu_custom_call.1} parent=11 // pred_check_branch
          %185 = sbr.rel (%p183) target = $region20
        $region19: #{tpu_custom_call.1} parent=11 // pred_region
          %s187 = ssub.s32 128, 128
          %188 = vsyncadd [#allocation6], %s187
          %s190 = sshll.u32 [#allocation7], 4
          %s191 = int_to_ptr.vmem [resolvable:$true] %s190
          %193 = dma.hbm_to_vmem [thread:$0]  %s2, 128, %s191, [#allocation6]
        $region20: #{tpu_custom_call.1} parent=11 // pred_fallthru
          _
        // Predicated region
        $region21: #{tpu_custom_call.1} parent=11 // pred_check
          %p194 = pneg %p108
        $region22: #{tpu_custom_call.1} parent=11 // pred_check_branch
          %196 = sbr.rel (%p194) target = $region24
        $region23: #{tpu_custom_call.1} parent=11 // pred_region
          %s198 = ssub.s32 32768, 32768
          %199 = vsyncadd [#allocation9], %s198
          %s200 = sshll.u32 [#allocation8], 4
          %s201 = int_to_ptr.vmem [resolvable:$true] %s200
          %206 = dma.hbm_to_vmem [thread:$0]  %s3, 32768, %s201, [#allocation9], 256, 256, 16
        $region24: #{tpu_custom_call.1} parent=11 // pred_fallthru
          _
        // Predicated region
        $region25: #{tpu_custom_call.1} parent=11 // pred_check
          %p207 = pneg %p129
        $region26: #{tpu_custom_call.1} parent=11 // pred_check_branch
          %209 = sbr.rel (%p207) target = $region28
        $region27: #{tpu_custom_call.1} parent=11 // pred_region
          _
        $region28: #{tpu_custom_call.1} parent=11 // pred_fallthru
          _
      $region12: #{tpu_custom_call.1} parent=5 // pred_fallthru
        _
      %p210 = scmp.lt.s32.totalorder %s19, 2
      // Predicated region
      $region29: #{tpu_custom_call.1} parent=5 // pred_check
        %p211 = pneg %p210
      $region30: #{tpu_custom_call.1} parent=5 // pred_check_branch
        %213 = sbr.rel (%p211) target = $region32
      $region31: #{tpu_custom_call.1} parent=5 // pred_region
        // Predicated region
        $region33: #{tpu_custom_call.1} parent=31 // pred_check
          %p214 = pneg %p39
        $region34: #{tpu_custom_call.1} parent=31 // pred_check_branch
          %216 = sbr.rel (%p214) target = $region36
        $region35: #{tpu_custom_call.1} parent=31 // pred_region
          %s217 = sand.u32 %s29, 1
          %s218 = scalar_lea.sflag [#allocation3], %s217
          %s219 = sand.u32 %s29, 1
          %s220 = smul.addr %s219, 608
          %s221 = scalar_lea.vmem [#allocation2], %s220
          %s222 = smul.u32 19, %s19
          %s224 = ssub.s32 9728, 9728
          %225 = vsyncadd %s218, %s224
          %s226 = smul.addr %s222, 4
          %s227 = smul.addr %s226, 128
          %s228 = scalar_lea.hbm %s0, %s227
          %s229 = sshll.u32 %s221, 4
          %s230 = int_to_ptr.vmem [resolvable:$true] %s229
          %235 = dma.hbm_to_vmem [thread:$0]  %s228, 9728, %s230, %s218, 512, 512, 32
        $region36: #{tpu_custom_call.1} parent=31 // pred_fallthru
          _
      $region32: #{tpu_custom_call.1} parent=5 // pred_fallthru
        _
      %p236 = scmp.le.s32.totalorder 1, %s19
      %p237 = scmp.lt.s32.totalorder %s19, 3
      %p238 = pnand %p236, %p237
      %p239 = pneg %p238
      // Predicated region
      $region37: #{tpu_custom_call.1} parent=5 // pred_check
        _
      $region38: #{tpu_custom_call.1} parent=5 // pred_check_branch
        %241 = sbr.rel (%p238) target = $region40
      $region39: #{tpu_custom_call.1} parent=5 // pred_region
        %s242 = ssub.s32 %s19, 1
        %s243 = sand.u32 %s32, 1
        %s244 = scalar_lea.sflag [#allocation3], %s243
        %s245 = sand.u32 %s32, 1
        %s246 = smul.addr %s245, 608
        %s247 = scalar_lea.vmem [#allocation2], %s246
        // Predicated region
        $region41: #{tpu_custom_call.1} parent=39 // pred_check
          %p248 = pneg %p45
        $region42: #{tpu_custom_call.1} parent=39 // pred_check_branch
          %250 = sbr.rel (%p248) target = $region44
        $region43: #{tpu_custom_call.1} parent=39 // pred_region
          %251 = dma.done %s244, 9728
        $region44: #{tpu_custom_call.1} parent=39 // pred_fallthru
          _
        // Predicated region
        $region45: #{tpu_custom_call.1} parent=39 // pred_check
          %p252 = pneg %p66
        $region46: #{tpu_custom_call.1} parent=39 // pred_check_branch
          %254 = sbr.rel (%p252) target = $region48
        $region47: #{tpu_custom_call.1} parent=39 // pred_region
          %255 = dma.done [#allocation6], 32768
        $region48: #{tpu_custom_call.1} parent=39 // pred_fallthru
          _
        // Predicated region
        $region49: #{tpu_custom_call.1} parent=39 // pred_check
          %p256 = pneg %p87
        $region50: #{tpu_custom_call.1} parent=39 // pred_check_branch
          %258 = sbr.rel (%p256) target = $region52
        $region51: #{tpu_custom_call.1} parent=39 // pred_region
          %259 = dma.done [#allocation6], 128
        $region52: #{tpu_custom_call.1} parent=39 // pred_fallthru
          _
        // Predicated region
        $region53: #{tpu_custom_call.1} parent=39 // pred_check
          %p260 = pneg %p108
        $region54: #{tpu_custom_call.1} parent=39 // pred_check_branch
          %262 = sbr.rel (%p260) target = $region56
        $region55: #{tpu_custom_call.1} parent=39 // pred_region
          %263 = dma.done [#allocation9], 32768
        $region56: #{tpu_custom_call.1} parent=39 // pred_fallthru
          _
        %s264 = sand.u32 %s32, 1
        %s265 = scalar_lea.sflag [#allocation3], %s264
        %s266 = sand.u32 %s32, 1
        %s267 = smul.addr %s266, 608
        %s268 = scalar_lea.vmem [#allocation2], %s267
        %p269 = pneg %p45
        %p270 = pneg %p42
        %p271 = pneg %p66
        %p272 = pneg %p63
        %p273 = pneg %p87
        %p274 = pneg %p84
        %p275 = pneg %p108
        %p276 = pneg %p105
        %p277 = pneg %p129
        %p278 = pneg %p126
        %p279 = pneg %p155
        %p280 = pneg %p152
        %s281 = sand.u32 %s142, 1
        %s282 = scalar_lea.sflag [#allocation4], %s281
        %s283 = sand.u32 %s142, 1
        %s284 = smul.addr %s283, 608
        %s285 = scalar_lea.vmem [#allocation10], %s284
        %s286 = smul.u32 19, %s24
        %s287 = smul.u32 19, %s24
        %v288 = vld [vmem:[%s247] sm:$0xff]
        %v289 = vld [vmem:[%s247 + $0x8] sm:$0xff]
        %v290 = vld [vmem:[%s247 + $0x10] sm:$0xff]
        %v291 = vld [vmem:[%s247 + $0x18] sm:$0xff]
        %v292 = vld [vmem:[%s247 + $0x20] sm:$0xff]
        %v293 = vld [vmem:[%s247 + $0x28] sm:$0xff]
        %v294 = vld [vmem:[%s247 + $0x30] sm:$0xff]
        %v295 = vld [vmem:[%s247 + $0x38] sm:$0xff]
        %v296 = vld [vmem:[%s247 + $0x40] sm:$0xff]
        %v297 = vld [vmem:[%s247 + $0x48] sm:$0xff]
        %v298 = vld [vmem:[%s247 + $0x50] sm:$0xff]
        %v299 = vld [vmem:[%s247 + $0x58] sm:$0xff]
        %v300 = vld [vmem:[%s247 + $0x60] sm:$0xff]
        %v301 = vld [vmem:[%s247 + $0x68] sm:$0xff]
        %v302 = vld [vmem:[%s247 + $0x70] sm:$0xff]
        %v303 = vld [vmem:[%s247 + $0x78] sm:$0xff]
        %v304 = vld [vmem:[%s247 + $0x80] sm:$0xff]
        %v305 = vld [vmem:[%s247 + $0x88] sm:$0xff]
        %v306 = vld [vmem:[%s247 + $0x90] sm:$0xff]
        %v307 = vld [vmem:[%s247 + $0x98] sm:$0xff]
        %v308 = vld [vmem:[%s247 + $0xa0] sm:$0xff]
        %v309 = vld [vmem:[%s247 + $0xa8] sm:$0xff]
        %v310 = vld [vmem:[%s247 + $0xb0] sm:$0xff]
        %v311 = vld [vmem:[%s247 + $0xb8] sm:$0xff]
        %v312 = vld [vmem:[%s247 + $0xc0] sm:$0xff]
        %v313 = vld [vmem:[%s247 + $0xc8] sm:$0xff]
        %v314 = vld [vmem:[%s247 + $0xd0] sm:$0xff]
        %v315 = vld [vmem:[%s247 + $0xd8] sm:$0xff]
        %v316 = vld [vmem:[%s247 + $0xe0] sm:$0xff]
        %v317 = vld [vmem:[%s247 + $0xe8] sm:$0xff]
        %v318 = vld [vmem:[%s247 + $0xf0] sm:$0xff]
        %v319 = vld [vmem:[%s247 + $0xf8] sm:$0xff]
        %v320 = vld [vmem:[%s247 + $0x100] sm:$0xff]
        %v321 = vld [vmem:[%s247 + $0x108] sm:$0xff]
        %v322 = vld [vmem:[%s247 + $0x110] sm:$0xff]
        %v323 = vld [vmem:[%s247 + $0x118] sm:$0xff]
        %v324 = vld [vmem:[%s247 + $0x120] sm:$0xff]
        %v325 = vld [vmem:[%s247 + $0x128] sm:$0xff]
        %v326 = vld [vmem:[%s247 + $0x130] sm:$0xff]
        %v327 = vld [vmem:[%s247 + $0x138] sm:$0xff]
        %v328 = vld [vmem:[%s247 + $0x140] sm:$0xff]
        %v329 = vld [vmem:[%s247 + $0x148] sm:$0xff]
        %v330 = vld [vmem:[%s247 + $0x150] sm:$0xff]
        %v331 = vld [vmem:[%s247 + $0x158] sm:$0xff]
        %v332 = vld [vmem:[%s247 + $0x160] sm:$0xff]
        %v333 = vld [vmem:[%s247 + $0x168] sm:$0xff]
        %v334 = vld [vmem:[%s247 + $0x170] sm:$0xff]
        %v335 = vld [vmem:[%s247 + $0x178] sm:$0xff]
        %v336 = vld [vmem:[%s247 + $0x180] sm:$0xff]
        %v337 = vld [vmem:[%s247 + $0x188] sm:$0xff]
        %v338 = vld [vmem:[%s247 + $0x190] sm:$0xff]
        %v339 = vld [vmem:[%s247 + $0x198] sm:$0xff]
        %v340 = vld [vmem:[%s247 + $0x1a0] sm:$0xff]
        %v341 = vld [vmem:[%s247 + $0x1a8] sm:$0xff]
        %v342 = vld [vmem:[%s247 + $0x1b0] sm:$0xff]
        %v343 = vld [vmem:[%s247 + $0x1b8] sm:$0xff]
        %v344 = vld [vmem:[%s247 + $0x1c0] sm:$0xff]
        %v345 = vld [vmem:[%s247 + $0x1c8] sm:$0xff]
        %v346 = vld [vmem:[%s247 + $0x1d0] sm:$0xff]
        %v347 = vld [vmem:[%s247 + $0x1d8] sm:$0xff]
        %v348 = vld [vmem:[%s247 + $0x1e0] sm:$0xff]
        %v349 = vld [vmem:[%s247 + $0x1e8] sm:$0xff]
        %v350 = vld [vmem:[%s247 + $0x1f0] sm:$0xff]
        %v351 = vld [vmem:[%s247 + $0x1f8] sm:$0xff]
        %v352 = vld [vmem:[%s247 + $0x200] sm:$0xff]
        %v353 = vld [vmem:[%s247 + $0x208] sm:$0xff]
        %v354 = vld [vmem:[%s247 + $0x210] sm:$0xff]
        %v355 = vld [vmem:[%s247 + $0x218] sm:$0xff]
        %v356 = vld [vmem:[%s247 + $0x220] sm:$0xff]
        %v357 = vld [vmem:[%s247 + $0x228] sm:$0xff]
        %v358 = vld [vmem:[%s247 + $0x230] sm:$0xff]
        %v359 = vld [vmem:[%s247 + $0x238] sm:$0xff]
        %v360 = vld [vmem:[%s247 + $0x240] sm:$0xff]
        %v361 = vld [vmem:[%s247 + $0x248] sm:$0xff]
        %v362 = vld [vmem:[%s247 + $0x250] sm:$0xff]
        %v363 = vld [vmem:[%s247 + $0x258] sm:$0xff]
        %v364 = vpack.c.bf16 %v292, %v288
        %v365 = vpack.c.bf16 %v293, %v289
        %v366 = vpack.c.bf16 %v294, %v290
        %v367 = vpack.c.bf16 %v295, %v291
        %v368 = vpack.c.bf16 %v300, %v296
        %v369 = vpack.c.bf16 %v301, %v297
        %v370 = vpack.c.bf16 %v302, %v298
        %v371 = vpack.c.bf16 %v303, %v299
        %v372 = vpack.c.bf16 %v308, %v304
        %v373 = vpack.c.bf16 %v309, %v305
        %v374 = vpack.c.bf16 %v310, %v306
        %v375 = vpack.c.bf16 %v311, %v307
        %v376 = vpack.c.bf16 %v316, %v312
        %v377 = vpack.c.bf16 %v317, %v313
        %v378 = vpack.c.bf16 %v318, %v314
        %v379 = vpack.c.bf16 %v319, %v315
        %v380 = vpack.c.bf16 %v324, %v320
        %v381 = vpack.c.bf16 %v325, %v321
        %v382 = vpack.c.bf16 %v326, %v322
        %v383 = vpack.c.bf16 %v327, %v323
        %v384 = vpack.c.bf16 %v332, %v328
        %v385 = vpack.c.bf16 %v333, %v329
        %v386 = vpack.c.bf16 %v334, %v330
        %v387 = vpack.c.bf16 %v335, %v331
        %v388 = vpack.c.bf16 %v340, %v336
        %v389 = vpack.c.bf16 %v341, %v337
        %v390 = vpack.c.bf16 %v342, %v338
        %v391 = vpack.c.bf16 %v343, %v339
        %v392 = vpack.c.bf16 %v348, %v344
        %v393 = vpack.c.bf16 %v349, %v345
        %v394 = vpack.c.bf16 %v350, %v346
        %v395 = vpack.c.bf16 %v351, %v347
        %v396 = vpack.c.bf16 %v356, %v352
        %v397 = vpack.c.bf16 %v357, %v353
        %v398 = vpack.c.bf16 %v358, %v354
        %v399 = vpack.c.bf16 %v359, %v355
        %v400 = vpack.c.bf16 %v360, %v360
        %v401 = vpack.c.bf16 %v361, %v361
        %v402 = vpack.c.bf16 %v362, %v362
        %v403 = vpack.c.bf16 %v363, %v363
        %v404 = vld [vmem:[#allocation5] sm:$0xff]
        %v405 = vld [vmem:[#allocation5 + $0x8] sm:$0xff]
        %v406 = vld [vmem:[#allocation5 + $0x10] sm:$0xff]
        %v407 = vld [vmem:[#allocation5 + $0x18] sm:$0xff]
        %v408 = vld [vmem:[#allocation5 + $0x20] sm:$0xff]
        %v409 = vld [vmem:[#allocation5 + $0x28] sm:$0xff]
        %v410 = vld [vmem:[#allocation5 + $0x30] sm:$0xff]
        %v411 = vld [vmem:[#allocation5 + $0x38] sm:$0xff]
        %v412 = vld [vmem:[#allocation5 + $0x40] sm:$0xff]
        %v413 = vld [vmem:[#allocation5 + $0x48] sm:$0xff]
        %v414 = vld [vmem:[#allocation5 + $0x50] sm:$0xff]
        %v415 = vld [vmem:[#allocation5 + $0x58] sm:$0xff]
        %v416 = vld [vmem:[#allocation5 + $0x60] sm:$0xff]
        %v417 = vld [vmem:[#allocation5 + $0x68] sm:$0xff]
        %v418 = vld [vmem:[#allocation5 + $0x70] sm:$0xff]
        %v419 = vld [vmem:[#allocation5 + $0x78] sm:$0xff]
        %v420 = vld [vmem:[#allocation5 + $0x80] sm:$0xff]
        %v421 = vld [vmem:[#allocation5 + $0x88] sm:$0xff]
        %v422 = vld [vmem:[#allocation5 + $0x90] sm:$0xff]
        %v423 = vld [vmem:[#allocation5 + $0x98] sm:$0xff]
        %v424 = vld [vmem:[#allocation5 + $0xa0] sm:$0xff]
        %v425 = vld [vmem:[#allocation5 + $0xa8] sm:$0xff]
        %v426 = vld [vmem:[#allocation5 + $0xb0] sm:$0xff]
        %v427 = vld [vmem:[#allocation5 + $0xb8] sm:$0xff]
        %v428 = vld [vmem:[#allocation5 + $0xc0] sm:$0xff]
        %v429 = vld [vmem:[#allocation5 + $0xc8] sm:$0xff]
        %v430 = vld [vmem:[#allocation5 + $0xd0] sm:$0xff]
        %v431 = vld [vmem:[#allocation5 + $0xd8] sm:$0xff]
        %v432 = vld [vmem:[#allocation5 + $0xe0] sm:$0xff]
        %v433 = vld [vmem:[#allocation5 + $0xe8] sm:$0xff]
        %v434 = vld [vmem:[#allocation5 + $0xf0] sm:$0xff]
        %v435 = vld [vmem:[#allocation5 + $0xf8] sm:$0xff]
        %v436 = vld [vmem:[#allocation5 + $0x100] sm:$0xff]
        %v437 = vld [vmem:[#allocation5 + $0x108] sm:$0xff]
        %v438 = vld [vmem:[#allocation5 + $0x110] sm:$0xff]
        %v439 = vld [vmem:[#allocation5 + $0x118] sm:$0xff]
        %v440 = vld [vmem:[#allocation5 + $0x120] sm:$0xff]
        %v441 = vld [vmem:[#allocation5 + $0x128] sm:$0xff]
        %v442 = vld [vmem:[#allocation5 + $0x130] sm:$0xff]
        %v443 = vld [vmem:[#allocation5 + $0x138] sm:$0xff]
        %v444 = vld [vmem:[#allocation5 + $0x140] sm:$0xff]
        %v445 = vld [vmem:[#allocation5 + $0x148] sm:$0xff]
        %v446 = vld [vmem:[#allocation5 + $0x150] sm:$0xff]
        %v447 = vld [vmem:[#allocation5 + $0x158] sm:$0xff]
        %v448 = vld [vmem:[#allocation5 + $0x160] sm:$0xff]
        %v449 = vld [vmem:[#allocation5 + $0x168] sm:$0xff]
        %v450 = vld [vmem:[#allocation5 + $0x170] sm:$0xff]
        %v451 = vld [vmem:[#allocation5 + $0x178] sm:$0xff]
        %v452 = vld [vmem:[#allocation5 + $0x180] sm:$0xff]
        %v453 = vld [vmem:[#allocation5 + $0x188] sm:$0xff]
        %v454 = vld [vmem:[#allocation5 + $0x190] sm:$0xff]
        %v455 = vld [vmem:[#allocation5 + $0x198] sm:$0xff]
        %v456 = vld [vmem:[#allocation5 + $0x1a0] sm:$0xff]
        %v457 = vld [vmem:[#allocation5 + $0x1a8] sm:$0xff]
        %v458 = vld [vmem:[#allocation5 + $0x1b0] sm:$0xff]
        %v459 = vld [vmem:[#allocation5 + $0x1b8] sm:$0xff]
        %v460 = vld [vmem:[#allocation5 + $0x1c0] sm:$0xff]
        %v461 = vld [vmem:[#allocation5 + $0x1c8] sm:$0xff]
        %v462 = vld [vmem:[#allocation5 + $0x1d0] sm:$0xff]
        %v463 = vld [vmem:[#allocation5 + $0x1d8] sm:$0xff]
        %v464 = vld [vmem:[#allocation5 + $0x1e0] sm:$0xff]
        %v465 = vld [vmem:[#allocation5 + $0x1e8] sm:$0xff]
        %v466 = vld [vmem:[#allocation5 + $0x1f0] sm:$0xff]
        %v467 = vld [vmem:[#allocation5 + $0x1f8] sm:$0xff]
        %v468 = vld [vmem:[#allocation5 + $0x200] sm:$0xff]
        %v469 = vld [vmem:[#allocation5 + $0x208] sm:$0xff]
        %v470 = vld [vmem:[#allocation5 + $0x210] sm:$0xff]
        %v471 = vld [vmem:[#allocation5 + $0x218] sm:$0xff]
        %v472 = vld [vmem:[#allocation5 + $0x220] sm:$0xff]
        %v473 = vld [vmem:[#allocation5 + $0x228] sm:$0xff]
        %v474 = vld [vmem:[#allocation5 + $0x230] sm:$0xff]
        %v475 = vld [vmem:[#allocation5 + $0x238] sm:$0xff]
        %v476 = vld [vmem:[#allocation5 + $0x240] sm:$0xff]
        %v477 = vld [vmem:[#allocation5 + $0x248] sm:$0xff]
        %v478 = vld [vmem:[#allocation5 + $0x250] sm:$0xff]
        %v479 = vld [vmem:[#allocation5 + $0x258] sm:$0xff]
        %v480 = vld [vmem:[#allocation5 + $0x260] sm:$0xff]
        %v481 = vld [vmem:[#allocation5 + $0x268] sm:$0xff]
        %v482 = vld [vmem:[#allocation5 + $0x270] sm:$0xff]
        %v483 = vld [vmem:[#allocation5 + $0x278] sm:$0xff]
        %v484 = vld [vmem:[#allocation5 + $0x280] sm:$0xff]
        %v485 = vld [vmem:[#allocation5 + $0x288] sm:$0xff]
        %v486 = vld [vmem:[#allocation5 + $0x290] sm:$0xff]
        %v487 = vld [vmem:[#allocation5 + $0x298] sm:$0xff]
        %v488 = vld [vmem:[#allocation5 + $0x2a0] sm:$0xff]
        %v489 = vld [vmem:[#allocation5 + $0x2a8] sm:$0xff]
        %v490 = vld [vmem:[#allocation5 + $0x2b0] sm:$0xff]
        %v491 = vld [vmem:[#allocation5 + $0x2b8] sm:$0xff]
        %v492 = vld [vmem:[#allocation5 + $0x2c0] sm:$0xff]
        %v493 = vld [vmem:[#allocation5 + $0x2c8] sm:$0xff]
        %v494 = vld [vmem:[#allocation5 + $0x2d0] sm:$0xff]
        %v495 = vld [vmem:[#allocation5 + $0x2d8] sm:$0xff]
        %v496 = vld [vmem:[#allocation5 + $0x2e0] sm:$0xff]
        %v497 = vld [vmem:[#allocation5 + $0x2e8] sm:$0xff]
        %v498 = vld [vmem:[#allocation5 + $0x2f0] sm:$0xff]
        %v499 = vld [vmem:[#allocation5 + $0x2f8] sm:$0xff]
        %v500 = vld [vmem:[#allocation5 + $0x300] sm:$0xff]
        %v501 = vld [vmem:[#allocation5 + $0x308] sm:$0xff]
        %v502 = vld [vmem:[#allocation5 + $0x310] sm:$0xff]
        %v503 = vld [vmem:[#allocation5 + $0x318] sm:$0xff]
        %v504 = vld [vmem:[#allocation5 + $0x320] sm:$0xff]
        %v505 = vld [vmem:[#allocation5 + $0x328] sm:$0xff]
        %v506 = vld [vmem:[#allocation5 + $0x330] sm:$0xff]
        %v507 = vld [vmem:[#allocation5 + $0x338] sm:$0xff]
        %v508 = vld [vmem:[#allocation5 + $0x340] sm:$0xff]
        %v509 = vld [vmem:[#allocation5 + $0x348] sm:$0xff]
        %v510 = vld [vmem:[#allocation5 + $0x350] sm:$0xff]
        %v511 = vld [vmem:[#allocation5 + $0x358] sm:$0xff]
        %v512 = vld [vmem:[#allocation5 + $0x360] sm:$0xff]
        %v513 = vld [vmem:[#allocation5 + $0x368] sm:$0xff]
        %v514 = vld [vmem:[#allocation5 + $0x370] sm:$0xff]
        %v515 = vld [vmem:[#allocation5 + $0x378] sm:$0xff]
        %v516 = vld [vmem:[#allocation5 + $0x380] sm:$0xff]
        %v517 = vld [vmem:[#allocation5 + $0x388] sm:$0xff]
        %v518 = vld [vmem:[#allocation5 + $0x390] sm:$0xff]
        %v519 = vld [vmem:[#allocation5 + $0x398] sm:$0xff]
        %v520 = vld [vmem:[#allocation5 + $0x3a0] sm:$0xff]
        %v521 = vld [vmem:[#allocation5 + $0x3a8] sm:$0xff]
        %v522 = vld [vmem:[#allocation5 + $0x3b0] sm:$0xff]
        %v523 = vld [vmem:[#allocation5 + $0x3b8] sm:$0xff]
        %v524 = vld [vmem:[#allocation5 + $0x3c0] sm:$0xff]
        %v525 = vld [vmem:[#allocation5 + $0x3c8] sm:$0xff]
        %v526 = vld [vmem:[#allocation5 + $0x3d0] sm:$0xff]
        %v527 = vld [vmem:[#allocation5 + $0x3d8] sm:$0xff]
        %v528 = vld [vmem:[#allocation5 + $0x3e0] sm:$0xff]
        %v529 = vld [vmem:[#allocation5 + $0x3e8] sm:$0xff]
        %v530 = vld [vmem:[#allocation5 + $0x3f0] sm:$0xff]
        %v531 = vld [vmem:[#allocation5 + $0x3f8] sm:$0xff]
        %v532 = vld [vmem:[#allocation5 + $0x400] sm:$0xff]
        %v533 = vld [vmem:[#allocation5 + $0x408] sm:$0xff]
        %v534 = vld [vmem:[#allocation5 + $0x410] sm:$0xff]
        %v535 = vld [vmem:[#allocation5 + $0x418] sm:$0xff]
        %v536 = vld [vmem:[#allocation5 + $0x420] sm:$0xff]
        %v537 = vld [vmem:[#allocation5 + $0x428] sm:$0xff]
        %v538 = vld [vmem:[#allocation5 + $0x430] sm:$0xff]
        %v539 = vld [vmem:[#allocation5 + $0x438] sm:$0xff]
        %v540 = vld [vmem:[#allocation5 + $0x440] sm:$0xff]
        %v541 = vld [vmem:[#allocation5 + $0x448] sm:$0xff]
        %v542 = vld [vmem:[#allocation5 + $0x450] sm:$0xff]
        %v543 = vld [vmem:[#allocation5 + $0x458] sm:$0xff]
        %v544 = vld [vmem:[#allocation5 + $0x460] sm:$0xff]
        %v545 = vld [vmem:[#allocation5 + $0x468] sm:$0xff]
        %v546 = vld [vmem:[#allocation5 + $0x470] sm:$0xff]
        %v547 = vld [vmem:[#allocation5 + $0x478] sm:$0xff]
        %v548 = vld [vmem:[#allocation5 + $0x480] sm:$0xff]
        %v549 = vld [vmem:[#allocation5 + $0x488] sm:$0xff]
        %v550 = vld [vmem:[#allocation5 + $0x490] sm:$0xff]
        %v551 = vld [vmem:[#allocation5 + $0x498] sm:$0xff]
        %v552 = vld [vmem:[#allocation5 + $0x4a0] sm:$0xff]
        %v553 = vld [vmem:[#allocation5 + $0x4a8] sm:$0xff]
        %v554 = vld [vmem:[#allocation5 + $0x4b0] sm:$0xff]
        %v555 = vld [vmem:[#allocation5 + $0x4b8] sm:$0xff]
        %v556 = vld [vmem:[#allocation5 + $0x4c0] sm:$0xff]
        %v557 = vld [vmem:[#allocation5 + $0x4c8] sm:$0xff]
        %v558 = vld [vmem:[#allocation5 + $0x4d0] sm:$0xff]
        %v559 = vld [vmem:[#allocation5 + $0x4d8] sm:$0xff]
        %v560 = vld [vmem:[#allocation5 + $0x4e0] sm:$0xff]
        %v561 = vld [vmem:[#allocation5 + $0x4e8] sm:$0xff]
        %v562 = vld [vmem:[#allocation5 + $0x4f0] sm:$0xff]
        %v563 = vld [vmem:[#allocation5 + $0x4f8] sm:$0xff]
        %v564 = vld [vmem:[#allocation5 + $0x500] sm:$0xff]
        %v565 = vld [vmem:[#allocation5 + $0x508] sm:$0xff]
        %v566 = vld [vmem:[#allocation5 + $0x510] sm:$0xff]
        %v567 = vld [vmem:[#allocation5 + $0x518] sm:$0xff]
        %v568 = vld [vmem:[#allocation5 + $0x520] sm:$0xff]
        %v569 = vld [vmem:[#allocation5 + $0x528] sm:$0xff]
        %v570 = vld [vmem:[#allocation5 + $0x530] sm:$0xff]
        %v571 = vld [vmem:[#allocation5 + $0x538] sm:$0xff]
        %v572 = vld [vmem:[#allocation5 + $0x540] sm:$0xff]
        %v573 = vld [vmem:[#allocation5 + $0x548] sm:$0xff]
        %v574 = vld [vmem:[#allocation5 + $0x550] sm:$0xff]
        %v575 = vld [vmem:[#allocation5 + $0x558] sm:$0xff]
        %v576 = vld [vmem:[#allocation5 + $0x560] sm:$0xff]
        %v577 = vld [vmem:[#allocation5 + $0x568] sm:$0xff]
        %v578 = vld [vmem:[#allocation5 + $0x570] sm:$0xff]
        %v579 = vld [vmem:[#allocation5 + $0x578] sm:$0xff]
        %v580 = vld [vmem:[#allocation5 + $0x580] sm:$0xff]
        %v581 = vld [vmem:[#allocation5 + $0x588] sm:$0xff]
        %v582 = vld [vmem:[#allocation5 + $0x590] sm:$0xff]
        %v583 = vld [vmem:[#allocation5 + $0x598] sm:$0xff]
        %v584 = vld [vmem:[#allocation5 + $0x5a0] sm:$0xff]
        %v585 = vld [vmem:[#allocation5 + $0x5a8] sm:$0xff]
        %v586 = vld [vmem:[#allocation5 + $0x5b0] sm:$0xff]
        %v587 = vld [vmem:[#allocation5 + $0x5b8] sm:$0xff]
        %v588 = vld [vmem:[#allocation5 + $0x5c0] sm:$0xff]
        %v589 = vld [vmem:[#allocation5 + $0x5c8] sm:$0xff]
        %v590 = vld [vmem:[#allocation5 + $0x5d0] sm:$0xff]
        %v591 = vld [vmem:[#allocation5 + $0x5d8] sm:$0xff]
        %v592 = vld [vmem:[#allocation5 + $0x5e0] sm:$0xff]
        %v593 = vld [vmem:[#allocation5 + $0x5e8] sm:$0xff]
        %v594 = vld [vmem:[#allocation5 + $0x5f0] sm:$0xff]
        %v595 = vld [vmem:[#allocation5 + $0x5f8] sm:$0xff]
        %v596 = vld [vmem:[#allocation5 + $0x600] sm:$0xff]
        %v597 = vld [vmem:[#allocation5 + $0x608] sm:$0xff]
        %v598 = vld [vmem:[#allocation5 + $0x610] sm:$0xff]
        %v599 = vld [vmem:[#allocation5 + $0x618] sm:$0xff]
        %v600 = vld [vmem:[#allocation5 + $0x620] sm:$0xff]
        %v601 = vld [vmem:[#allocation5 + $0x628] sm:$0xff]
        %v602 = vld [vmem:[#allocation5 + $0x630] sm:$0xff]
        %v603 = vld [vmem:[#allocation5 + $0x638] sm:$0xff]
        %v604 = vld [vmem:[#allocation5 + $0x640] sm:$0xff]
        %v605 = vld [vmem:[#allocation5 + $0x648] sm:$0xff]
        %v606 = vld [vmem:[#allocation5 + $0x650] sm:$0xff]
        %v607 = vld [vmem:[#allocation5 + $0x658] sm:$0xff]
        %v608 = vld [vmem:[#allocation5 + $0x660] sm:$0xff]
        %v609 = vld [vmem:[#allocation5 + $0x668] sm:$0xff]
        %v610 = vld [vmem:[#allocation5 + $0x670] sm:$0xff]
        %v611 = vld [vmem:[#allocation5 + $0x678] sm:$0xff]
        %v612 = vld [vmem:[#allocation5 + $0x680] sm:$0xff]
        %v613 = vld [vmem:[#allocation5 + $0x688] sm:$0xff]
        %v614 = vld [vmem:[#allocation5 + $0x690] sm:$0xff]
        %v615 = vld [vmem:[#allocation5 + $0x698] sm:$0xff]
        %v616 = vld [vmem:[#allocation5 + $0x6a0] sm:$0xff]
        %v617 = vld [vmem:[#allocation5 + $0x6a8] sm:$0xff]
        %v618 = vld [vmem:[#allocation5 + $0x6b0] sm:$0xff]
        %v619 = vld [vmem:[#allocation5 + $0x6b8] sm:$0xff]
        %v620 = vld [vmem:[#allocation5 + $0x6c0] sm:$0xff]
        %v621 = vld [vmem:[#allocation5 + $0x6c8] sm:$0xff]
        %v622 = vld [vmem:[#allocation5 + $0x6d0] sm:$0xff]
        %v623 = vld [vmem:[#allocation5 + $0x6d8] sm:$0xff]
        %v624 = vld [vmem:[#allocation5 + $0x6e0] sm:$0xff]
        %v625 = vld [vmem:[#allocation5 + $0x6e8] sm:$0xff]
        %v626 = vld [vmem:[#allocation5 + $0x6f0] sm:$0xff]
        %v627 = vld [vmem:[#allocation5 + $0x6f8] sm:$0xff]
        %v628 = vld [vmem:[#allocation5 + $0x700] sm:$0xff]
        %v629 = vld [vmem:[#allocation5 + $0x708] sm:$0xff]
        %v630 = vld [vmem:[#allocation5 + $0x710] sm:$0xff]
        %v631 = vld [vmem:[#allocation5 + $0x718] sm:$0xff]
        %v632 = vld [vmem:[#allocation5 + $0x720] sm:$0xff]
        %v633 = vld [vmem:[#allocation5 + $0x728] sm:$0xff]
        %v634 = vld [vmem:[#allocation5 + $0x730] sm:$0xff]
        %v635 = vld [vmem:[#allocation5 + $0x738] sm:$0xff]
        %v636 = vld [vmem:[#allocation5 + $0x740] sm:$0xff]
        %v637 = vld [vmem:[#allocation5 + $0x748] sm:$0xff]
        %v638 = vld [vmem:[#allocation5 + $0x750] sm:$0xff]
        %v639 = vld [vmem:[#allocation5 + $0x758] sm:$0xff]
        %v640 = vld [vmem:[#allocation5 + $0x760] sm:$0xff]
        %v641 = vld [vmem:[#allocation5 + $0x768] sm:$0xff]
        %v642 = vld [vmem:[#allocation5 + $0x770] sm:$0xff]
        %v643 = vld [vmem:[#allocation5 + $0x778] sm:$0xff]
        %v644 = vld [vmem:[#allocation5 + $0x780] sm:$0xff]
        %v645 = vld [vmem:[#allocation5 + $0x788] sm:$0xff]
        %v646 = vld [vmem:[#allocation5 + $0x790] sm:$0xff]
        %v647 = vld [vmem:[#allocation5 + $0x798] sm:$0xff]
        %v648 = vld [vmem:[#allocation5 + $0x7a0] sm:$0xff]
        %v649 = vld [vmem:[#allocation5 + $0x7a8] sm:$0xff]
        %v650 = vld [vmem:[#allocation5 + $0x7b0] sm:$0xff]
        %v651 = vld [vmem:[#allocation5 + $0x7b8] sm:$0xff]
        %v652 = vld [vmem:[#allocation5 + $0x7c0] sm:$0xff]
        %v653 = vld [vmem:[#allocation5 + $0x7c8] sm:$0xff]
        %v654 = vld [vmem:[#allocation5 + $0x7d0] sm:$0xff]
        %v655 = vld [vmem:[#allocation5 + $0x7d8] sm:$0xff]
        %v656 = vld [vmem:[#allocation5 + $0x7e0] sm:$0xff]
        %v657 = vld [vmem:[#allocation5 + $0x7e8] sm:$0xff]
        %v658 = vld [vmem:[#allocation5 + $0x7f0] sm:$0xff]
        %v659 = vld [vmem:[#allocation5 + $0x7f8] sm:$0xff]
        %v660 = vld [vmem:[#allocation7] sm:$0xff]
        %v662 = vlaneseq
        %v663 = vshrl.u32 %v662, 7
        %v664 = vsub.s32 0, %v663
        %v665 = vrot.slane %v660, %v664
        %v666 = vlaneseq
        %v667 = vshrl.u32 %v666, 7
        %v668 = vsub.s32 1, %v667
        %v669 = vrot.slane %v660, %v668
        %v670 = vlaneseq
        %v671 = vshrl.u32 %v670, 7
        %v672 = vsub.s32 2, %v671
        %v673 = vrot.slane %v660, %v672
        %v674 = vlaneseq
        %v675 = vshrl.u32 %v674, 7
        %v676 = vsub.s32 3, %v675
        %v677 = vrot.slane %v660, %v676
        %v678 = vlaneseq
        %v679 = vshrl.u32 %v678, 7
        %v680 = vsub.s32 4, %v679
        %v681 = vrot.slane %v660, %v680
        %v682 = vlaneseq
        %v683 = vshrl.u32 %v682, 7
        %v684 = vsub.s32 5, %v683
        %v685 = vrot.slane %v660, %v684
        %v686 = vlaneseq
        %v687 = vshrl.u32 %v686, 7
        %v688 = vsub.s32 6, %v687
        %v689 = vrot.slane %v660, %v688
        %v690 = vlaneseq
        %v691 = vshrl.u32 %v690, 7
        %v692 = vsub.s32 7, %v691
        %v693 = vrot.slane %v660, %v692
        %v958 = vunpack.c.l.b16 %v404
        %v959 = vunpack.c.h.b16 %v404
        %v960 = vunpack.c.l.b16 %v405
        %v961 = vunpack.c.h.b16 %v405
        %v962 = vunpack.c.l.b16 %v406
        %v963 = vunpack.c.h.b16 %v406
        %v964 = vunpack.c.l.b16 %v407
        %v965 = vunpack.c.h.b16 %v407
        %v966 = vunpack.c.l.b16 %v408
        %v967 = vunpack.c.h.b16 %v408
        %v968 = vunpack.c.l.b16 %v409
        %v969 = vunpack.c.h.b16 %v409
        %v970 = vunpack.c.l.b16 %v410
        %v971 = vunpack.c.h.b16 %v410
        %v972 = vunpack.c.l.b16 %v411
        %v973 = vunpack.c.h.b16 %v411
        %v974 = vunpack.c.l.b16 %v412
        %v975 = vunpack.c.h.b16 %v412
        %v976 = vunpack.c.l.b16 %v413
        %v977 = vunpack.c.h.b16 %v413
        %v978 = vunpack.c.l.b16 %v414
        %v979 = vunpack.c.h.b16 %v414
        %v980 = vunpack.c.l.b16 %v415
        %v981 = vunpack.c.h.b16 %v415
        %v982 = vunpack.c.l.b16 %v416
        %v983 = vunpack.c.h.b16 %v416
        %v984 = vunpack.c.l.b16 %v417
        %v985 = vunpack.c.h.b16 %v417
        %v986 = vunpack.c.l.b16 %v418
        %v987 = vunpack.c.h.b16 %v418
        %v988 = vunpack.c.l.b16 %v419
        %v989 = vunpack.c.h.b16 %v419
        %v990 = vunpack.c.l.b16 %v420
        %v991 = vunpack.c.h.b16 %v420
        %v992 = vunpack.c.l.b16 %v421
        %v993 = vunpack.c.h.b16 %v421
        %v994 = vunpack.c.l.b16 %v422
        %v995 = vunpack.c.h.b16 %v422
        %v996 = vunpack.c.l.b16 %v423
        %v997 = vunpack.c.h.b16 %v423
        %v998 = vunpack.c.l.b16 %v424
        %v999 = vunpack.c.h.b16 %v424
        %v1000 = vunpack.c.l.b16 %v425
        %v1001 = vunpack.c.h.b16 %v425
        %v1002 = vunpack.c.l.b16 %v426
        %v1003 = vunpack.c.h.b16 %v426
        %v1004 = vunpack.c.l.b16 %v427
        %v1005 = vunpack.c.h.b16 %v427
        %v1006 = vunpack.c.l.b16 %v428
        %v1007 = vunpack.c.h.b16 %v428
        %v1008 = vunpack.c.l.b16 %v429
        %v1009 = vunpack.c.h.b16 %v429
        %v1010 = vunpack.c.l.b16 %v430
        %v1011 = vunpack.c.h.b16 %v430
        %v1012 = vunpack.c.l.b16 %v431
        %v1013 = vunpack.c.h.b16 %v431
        %v1014 = vunpack.c.l.b16 %v432
        %v1015 = vunpack.c.h.b16 %v432
        %v1016 = vunpack.c.l.b16 %v433
        %v1017 = vunpack.c.h.b16 %v433
        %v1018 = vunpack.c.l.b16 %v434
        %v1019 = vunpack.c.h.b16 %v434
        %v1020 = vunpack.c.l.b16 %v435
        %v1021 = vunpack.c.h.b16 %v435
        %v1022 = vunpack.c.l.b16 %v436
        %v1023 = vunpack.c.h.b16 %v436
        %v1024 = vunpack.c.l.b16 %v437
        %v1025 = vunpack.c.h.b16 %v437
        %v1026 = vunpack.c.l.b16 %v438
        %v1027 = vunpack.c.h.b16 %v438
        %v1028 = vunpack.c.l.b16 %v439
        %v1029 = vunpack.c.h.b16 %v439
        %v1030 = vunpack.c.l.b16 %v440
        %v1031 = vunpack.c.h.b16 %v440
        %v1032 = vunpack.c.l.b16 %v441
        %v1033 = vunpack.c.h.b16 %v441
        %v1034 = vunpack.c.l.b16 %v442
        %v1035 = vunpack.c.h.b16 %v442
        %v1036 = vunpack.c.l.b16 %v443
        %v1037 = vunpack.c.h.b16 %v443
        %v1038 = vunpack.c.l.b16 %v444
        %v1039 = vunpack.c.h.b16 %v444
        %v1040 = vunpack.c.l.b16 %v445
        %v1041 = vunpack.c.h.b16 %v445
        %v1042 = vunpack.c.l.b16 %v446
        %v1043 = vunpack.c.h.b16 %v446
        %v1044 = vunpack.c.l.b16 %v447
        %v1045 = vunpack.c.h.b16 %v447
        %v1046 = vunpack.c.l.b16 %v448
        %v1047 = vunpack.c.h.b16 %v448
        %v1048 = vunpack.c.l.b16 %v449
        %v1049 = vunpack.c.h.b16 %v449
        %v1050 = vunpack.c.l.b16 %v450
        %v1051 = vunpack.c.h.b16 %v450
        %v1052 = vunpack.c.l.b16 %v451
        %v1053 = vunpack.c.h.b16 %v451
        %v1054 = vunpack.c.l.b16 %v452
        %v1055 = vunpack.c.h.b16 %v452
        %v1056 = vunpack.c.l.b16 %v453
        %v1057 = vunpack.c.h.b16 %v453
        %v1058 = vunpack.c.l.b16 %v454
        %v1059 = vunpack.c.h.b16 %v454
        %v1060 = vunpack.c.l.b16 %v455
        %v1061 = vunpack.c.h.b16 %v455
        %v1062 = vunpack.c.l.b16 %v456
        %v1063 = vunpack.c.h.b16 %v456
        %v1064 = vunpack.c.l.b16 %v457
        %v1065 = vunpack.c.h.b16 %v457
        %v1066 = vunpack.c.l.b16 %v458
        %v1067 = vunpack.c.h.b16 %v458
        %v1068 = vunpack.c.l.b16 %v459
        %v1069 = vunpack.c.h.b16 %v459
        %v1070 = vunpack.c.l.b16 %v460
        %v1071 = vunpack.c.h.b16 %v460
        %v1072 = vunpack.c.l.b16 %v461
        %v1073 = vunpack.c.h.b16 %v461
        %v1074 = vunpack.c.l.b16 %v462
        %v1075 = vunpack.c.h.b16 %v462
        %v1076 = vunpack.c.l.b16 %v463
        %v1077 = vunpack.c.h.b16 %v463
        %v1078 = vunpack.c.l.b16 %v464
        %v1079 = vunpack.c.h.b16 %v464
        %v1080 = vunpack.c.l.b16 %v465
        %v1081 = vunpack.c.h.b16 %v465
        %v1082 = vunpack.c.l.b16 %v466
        %v1083 = vunpack.c.h.b16 %v466
        %v1084 = vunpack.c.l.b16 %v467
        %v1085 = vunpack.c.h.b16 %v467
        %v1086 = vunpack.c.l.b16 %v468
        %v1087 = vunpack.c.h.b16 %v468
        %v1088 = vunpack.c.l.b16 %v469
        %v1089 = vunpack.c.h.b16 %v469
        %v1090 = vunpack.c.l.b16 %v470
        %v1091 = vunpack.c.h.b16 %v470
        %v1092 = vunpack.c.l.b16 %v471
        %v1093 = vunpack.c.h.b16 %v471
        %v1094 = vunpack.c.l.b16 %v472
        %v1095 = vunpack.c.h.b16 %v472
        %v1096 = vunpack.c.l.b16 %v473
        %v1097 = vunpack.c.h.b16 %v473
        %v1098 = vunpack.c.l.b16 %v474
        %v1099 = vunpack.c.h.b16 %v474
        %v1100 = vunpack.c.l.b16 %v475
        %v1101 = vunpack.c.h.b16 %v475
        %v1102 = vunpack.c.l.b16 %v476
        %v1103 = vunpack.c.h.b16 %v476
        %v1104 = vunpack.c.l.b16 %v477
        %v1105 = vunpack.c.h.b16 %v477
        %v1106 = vunpack.c.l.b16 %v478
        %v1107 = vunpack.c.h.b16 %v478
        %v1108 = vunpack.c.l.b16 %v479
        %v1109 = vunpack.c.h.b16 %v479
        %v1110 = vunpack.c.l.b16 %v480
        %v1111 = vunpack.c.h.b16 %v480
        %v1112 = vunpack.c.l.b16 %v481
        %v1113 = vunpack.c.h.b16 %v481
        %v1114 = vunpack.c.l.b16 %v482
        %v1115 = vunpack.c.h.b16 %v482
        %v1116 = vunpack.c.l.b16 %v483
        %v1117 = vunpack.c.h.b16 %v483
        %v1118 = vunpack.c.l.b16 %v484
        %v1119 = vunpack.c.h.b16 %v484
        %v1120 = vunpack.c.l.b16 %v485
        %v1121 = vunpack.c.h.b16 %v485
        %v1122 = vunpack.c.l.b16 %v486
        %v1123 = vunpack.c.h.b16 %v486
        %v1124 = vunpack.c.l.b16 %v487
        %v1125 = vunpack.c.h.b16 %v487
        %v1126 = vunpack.c.l.b16 %v488
        %v1127 = vunpack.c.h.b16 %v488
        %v1128 = vunpack.c.l.b16 %v489
        %v1129 = vunpack.c.h.b16 %v489
        %v1130 = vunpack.c.l.b16 %v490
        %v1131 = vunpack.c.h.b16 %v490
        %v1132 = vunpack.c.l.b16 %v491
        %v1133 = vunpack.c.h.b16 %v491
        %v1134 = vunpack.c.l.b16 %v492
        %v1135 = vunpack.c.h.b16 %v492
        %v1136 = vunpack.c.l.b16 %v493
        %v1137 = vunpack.c.h.b16 %v493
        %v1138 = vunpack.c.l.b16 %v494
        %v1139 = vunpack.c.h.b16 %v494
        %v1140 = vunpack.c.l.b16 %v495
        %v1141 = vunpack.c.h.b16 %v495
        %v1142 = vunpack.c.l.b16 %v496
        %v1143 = vunpack.c.h.b16 %v496
        %v1144 = vunpack.c.l.b16 %v497
        %v1145 = vunpack.c.h.b16 %v497
        %v1146 = vunpack.c.l.b16 %v498
        %v1147 = vunpack.c.h.b16 %v498
        %v1148 = vunpack.c.l.b16 %v499
        %v1149 = vunpack.c.h.b16 %v499
        %v1150 = vunpack.c.l.b16 %v500
        %v1151 = vunpack.c.h.b16 %v500
        %v1152 = vunpack.c.l.b16 %v501
        %v1153 = vunpack.c.h.b16 %v501
        %v1154 = vunpack.c.l.b16 %v502
        %v1155 = vunpack.c.h.b16 %v502
        %v1156 = vunpack.c.l.b16 %v503
        %v1157 = vunpack.c.h.b16 %v503
        %v1158 = vunpack.c.l.b16 %v504
        %v1159 = vunpack.c.h.b16 %v504
        %v1160 = vunpack.c.l.b16 %v505
        %v1161 = vunpack.c.h.b16 %v505
        %v1162 = vunpack.c.l.b16 %v506
        %v1163 = vunpack.c.h.b16 %v506
        %v1164 = vunpack.c.l.b16 %v507
        %v1165 = vunpack.c.h.b16 %v507
        %v1166 = vunpack.c.l.b16 %v508
        %v1167 = vunpack.c.h.b16 %v508
        %v1168 = vunpack.c.l.b16 %v509
        %v1169 = vunpack.c.h.b16 %v509
        %v1170 = vunpack.c.l.b16 %v510
        %v1171 = vunpack.c.h.b16 %v510
        %v1172 = vunpack.c.l.b16 %v511
        %v1173 = vunpack.c.h.b16 %v511
        %v1174 = vunpack.c.l.b16 %v512
        %v1175 = vunpack.c.h.b16 %v512
        %v1176 = vunpack.c.l.b16 %v513
        %v1177 = vunpack.c.h.b16 %v513
        %v1178 = vunpack.c.l.b16 %v514
        %v1179 = vunpack.c.h.b16 %v514
        %v1180 = vunpack.c.l.b16 %v515
        %v1181 = vunpack.c.h.b16 %v515
        %v1182 = vunpack.c.l.b16 %v516
        %v1183 = vunpack.c.h.b16 %v516
        %v1184 = vunpack.c.l.b16 %v517
        %v1185 = vunpack.c.h.b16 %v517
        %v1186 = vunpack.c.l.b16 %v518
        %v1187 = vunpack.c.h.b16 %v518
        %v1188 = vunpack.c.l.b16 %v519
        %v1189 = vunpack.c.h.b16 %v519
        %v1190 = vunpack.c.l.b16 %v520
        %v1191 = vunpack.c.h.b16 %v520
        %v1192 = vunpack.c.l.b16 %v521
        %v1193 = vunpack.c.h.b16 %v521
        %v1194 = vunpack.c.l.b16 %v522
        %v1195 = vunpack.c.h.b16 %v522
        %v1196 = vunpack.c.l.b16 %v523
        %v1197 = vunpack.c.h.b16 %v523
        %v1198 = vunpack.c.l.b16 %v524
        %v1199 = vunpack.c.h.b16 %v524
        %v1200 = vunpack.c.l.b16 %v525
        %v1201 = vunpack.c.h.b16 %v525
        %v1202 = vunpack.c.l.b16 %v526
        %v1203 = vunpack.c.h.b16 %v526
        %v1204 = vunpack.c.l.b16 %v527
        %v1205 = vunpack.c.h.b16 %v527
        %v1206 = vunpack.c.l.b16 %v528
        %v1207 = vunpack.c.h.b16 %v528
        %v1208 = vunpack.c.l.b16 %v529
        %v1209 = vunpack.c.h.b16 %v529
        %v1210 = vunpack.c.l.b16 %v530
        %v1211 = vunpack.c.h.b16 %v530
        %v1212 = vunpack.c.l.b16 %v531
        %v1213 = vunpack.c.h.b16 %v531
        %v1214 = vunpack.c.l.b16 %v532
        %v1215 = vunpack.c.h.b16 %v532
        %v1216 = vunpack.c.l.b16 %v533
        %v1217 = vunpack.c.h.b16 %v533
        %v1218 = vunpack.c.l.b16 %v534
        %v1219 = vunpack.c.h.b16 %v534
        %v1220 = vunpack.c.l.b16 %v535
        %v1221 = vunpack.c.h.b16 %v535
        %v1222 = vunpack.c.l.b16 %v536
        %v1223 = vunpack.c.h.b16 %v536
        %v1224 = vunpack.c.l.b16 %v537
        %v1225 = vunpack.c.h.b16 %v537
        %v1226 = vunpack.c.l.b16 %v538
        %v1227 = vunpack.c.h.b16 %v538
        %v1228 = vunpack.c.l.b16 %v539
        %v1229 = vunpack.c.h.b16 %v539
        %v1230 = vunpack.c.l.b16 %v540
        %v1231 = vunpack.c.h.b16 %v540
        %v1232 = vunpack.c.l.b16 %v541
        %v1233 = vunpack.c.h.b16 %v541
        %v1234 = vunpack.c.l.b16 %v542
        %v1235 = vunpack.c.h.b16 %v542
        %v1236 = vunpack.c.l.b16 %v543
        %v1237 = vunpack.c.h.b16 %v543
        %v1238 = vunpack.c.l.b16 %v544
        %v1239 = vunpack.c.h.b16 %v544
        %v1240 = vunpack.c.l.b16 %v545
        %v1241 = vunpack.c.h.b16 %v545
        %v1242 = vunpack.c.l.b16 %v546
        %v1243 = vunpack.c.h.b16 %v546
        %v1244 = vunpack.c.l.b16 %v547
        %v1245 = vunpack.c.h.b16 %v547
        %v1246 = vunpack.c.l.b16 %v548
        %v1247 = vunpack.c.h.b16 %v548
        %v1248 = vunpack.c.l.b16 %v549
        %v1249 = vunpack.c.h.b16 %v549
        %v1250 = vunpack.c.l.b16 %v550
        %v1251 = vunpack.c.h.b16 %v550
        %v1252 = vunpack.c.l.b16 %v551
        %v1253 = vunpack.c.h.b16 %v551
        %v1254 = vunpack.c.l.b16 %v552
        %v1255 = vunpack.c.h.b16 %v552
        %v1256 = vunpack.c.l.b16 %v553
        %v1257 = vunpack.c.h.b16 %v553
        %v1258 = vunpack.c.l.b16 %v554
        %v1259 = vunpack.c.h.b16 %v554
        %v1260 = vunpack.c.l.b16 %v555
        %v1261 = vunpack.c.h.b16 %v555
        %v1262 = vunpack.c.l.b16 %v556
        %v1263 = vunpack.c.h.b16 %v556
        %v1264 = vunpack.c.l.b16 %v557
        %v1265 = vunpack.c.h.b16 %v557
        %v1266 = vunpack.c.l.b16 %v558
        %v1267 = vunpack.c.h.b16 %v558
        %v1268 = vunpack.c.l.b16 %v559
        %v1269 = vunpack.c.h.b16 %v559
        %v1270 = vunpack.c.l.b16 %v560
        %v1271 = vunpack.c.h.b16 %v560
        %v1272 = vunpack.c.l.b16 %v561
        %v1273 = vunpack.c.h.b16 %v561
        %v1274 = vunpack.c.l.b16 %v562
        %v1275 = vunpack.c.h.b16 %v562
        %v1276 = vunpack.c.l.b16 %v563
        %v1277 = vunpack.c.h.b16 %v563
        %v1278 = vunpack.c.l.b16 %v564
        %v1279 = vunpack.c.h.b16 %v564
        %v1280 = vunpack.c.l.b16 %v565
        %v1281 = vunpack.c.h.b16 %v565
        %v1282 = vunpack.c.l.b16 %v566
        %v1283 = vunpack.c.h.b16 %v566
        %v1284 = vunpack.c.l.b16 %v567
        %v1285 = vunpack.c.h.b16 %v567
        %v1286 = vunpack.c.l.b16 %v568
        %v1287 = vunpack.c.h.b16 %v568
        %v1288 = vunpack.c.l.b16 %v569
        %v1289 = vunpack.c.h.b16 %v569
        %v1290 = vunpack.c.l.b16 %v570
        %v1291 = vunpack.c.h.b16 %v570
        %v1292 = vunpack.c.l.b16 %v571
        %v1293 = vunpack.c.h.b16 %v571
        %v1294 = vunpack.c.l.b16 %v572
        %v1295 = vunpack.c.h.b16 %v572
        %v1296 = vunpack.c.l.b16 %v573
        %v1297 = vunpack.c.h.b16 %v573
        %v1298 = vunpack.c.l.b16 %v574
        %v1299 = vunpack.c.h.b16 %v574
        %v1300 = vunpack.c.l.b16 %v575
        %v1301 = vunpack.c.h.b16 %v575
        %v1302 = vunpack.c.l.b16 %v576
        %v1303 = vunpack.c.h.b16 %v576
        %v1304 = vunpack.c.l.b16 %v577
        %v1305 = vunpack.c.h.b16 %v577
        %v1306 = vunpack.c.l.b16 %v578
        %v1307 = vunpack.c.h.b16 %v578
        %v1308 = vunpack.c.l.b16 %v579
        %v1309 = vunpack.c.h.b16 %v579
        %v1310 = vunpack.c.l.b16 %v580
        %v1311 = vunpack.c.h.b16 %v580
        %v1312 = vunpack.c.l.b16 %v581
        %v1313 = vunpack.c.h.b16 %v581
        %v1314 = vunpack.c.l.b16 %v582
        %v1315 = vunpack.c.h.b16 %v582
        %v1316 = vunpack.c.l.b16 %v583
        %v1317 = vunpack.c.h.b16 %v583
        %v1318 = vunpack.c.l.b16 %v584
        %v1319 = vunpack.c.h.b16 %v584
        %v1320 = vunpack.c.l.b16 %v585
        %v1321 = vunpack.c.h.b16 %v585
        %v1322 = vunpack.c.l.b16 %v586
        %v1323 = vunpack.c.h.b16 %v586
        %v1324 = vunpack.c.l.b16 %v587
        %v1325 = vunpack.c.h.b16 %v587
        %v1326 = vunpack.c.l.b16 %v588
        %v1327 = vunpack.c.h.b16 %v588
        %v1328 = vunpack.c.l.b16 %v589
        %v1329 = vunpack.c.h.b16 %v589
        %v1330 = vunpack.c.l.b16 %v590
        %v1331 = vunpack.c.h.b16 %v590
        %v1332 = vunpack.c.l.b16 %v591
        %v1333 = vunpack.c.h.b16 %v591
        %v1334 = vunpack.c.l.b16 %v592
        %v1335 = vunpack.c.h.b16 %v592
        %v1336 = vunpack.c.l.b16 %v593
        %v1337 = vunpack.c.h.b16 %v593
        %v1338 = vunpack.c.l.b16 %v594
        %v1339 = vunpack.c.h.b16 %v594
        %v1340 = vunpack.c.l.b16 %v595
        %v1341 = vunpack.c.h.b16 %v595
        %v1342 = vunpack.c.l.b16 %v596
        %v1343 = vunpack.c.h.b16 %v596
        %v1344 = vunpack.c.l.b16 %v597
        %v1345 = vunpack.c.h.b16 %v597
        %v1346 = vunpack.c.l.b16 %v598
        %v1347 = vunpack.c.h.b16 %v598
        %v1348 = vunpack.c.l.b16 %v599
        %v1349 = vunpack.c.h.b16 %v599
        %v1350 = vunpack.c.l.b16 %v600
        %v1351 = vunpack.c.h.b16 %v600
        %v1352 = vunpack.c.l.b16 %v601
        %v1353 = vunpack.c.h.b16 %v601
        %v1354 = vunpack.c.l.b16 %v602
        %v1355 = vunpack.c.h.b16 %v602
        %v1356 = vunpack.c.l.b16 %v603
        %v1357 = vunpack.c.h.b16 %v603
        %v1358 = vunpack.c.l.b16 %v604
        %v1359 = vunpack.c.h.b16 %v604
        %v1360 = vunpack.c.l.b16 %v605
        %v1361 = vunpack.c.h.b16 %v605
        %v1362 = vunpack.c.l.b16 %v606
        %v1363 = vunpack.c.h.b16 %v606
        %v1364 = vunpack.c.l.b16 %v607
        %v1365 = vunpack.c.h.b16 %v607
        %v1366 = vunpack.c.l.b16 %v608
        %v1367 = vunpack.c.h.b16 %v608
        %v1368 = vunpack.c.l.b16 %v609
        %v1369 = vunpack.c.h.b16 %v609
        %v1370 = vunpack.c.l.b16 %v610
        %v1371 = vunpack.c.h.b16 %v610
        %v1372 = vunpack.c.l.b16 %v611
        %v1373 = vunpack.c.h.b16 %v611
        %v1374 = vunpack.c.l.b16 %v612
        %v1375 = vunpack.c.h.b16 %v612
        %v1376 = vunpack.c.l.b16 %v613
        %v1377 = vunpack.c.h.b16 %v613
        %v1378 = vunpack.c.l.b16 %v614
        %v1379 = vunpack.c.h.b16 %v614
        %v1380 = vunpack.c.l.b16 %v615
        %v1381 = vunpack.c.h.b16 %v615
        %v1382 = vunpack.c.l.b16 %v616
        %v1383 = vunpack.c.h.b16 %v616
        %v1384 = vunpack.c.l.b16 %v617
        %v1385 = vunpack.c.h.b16 %v617
        %v1386 = vunpack.c.l.b16 %v618
        %v1387 = vunpack.c.h.b16 %v618
        %v1388 = vunpack.c.l.b16 %v619
        %v1389 = vunpack.c.h.b16 %v619
        %v1390 = vunpack.c.l.b16 %v620
        %v1391 = vunpack.c.h.b16 %v620
        %v1392 = vunpack.c.l.b16 %v621
        %v1393 = vunpack.c.h.b16 %v621
        %v1394 = vunpack.c.l.b16 %v622
        %v1395 = vunpack.c.h.b16 %v622
        %v1396 = vunpack.c.l.b16 %v623
        %v1397 = vunpack.c.h.b16 %v623
        %v1398 = vunpack.c.l.b16 %v624
        %v1399 = vunpack.c.h.b16 %v624
        %v1400 = vunpack.c.l.b16 %v625
        %v1401 = vunpack.c.h.b16 %v625
        %v1402 = vunpack.c.l.b16 %v626
        %v1403 = vunpack.c.h.b16 %v626
        %v1404 = vunpack.c.l.b16 %v627
        %v1405 = vunpack.c.h.b16 %v627
        %v1406 = vunpack.c.l.b16 %v628
        %v1407 = vunpack.c.h.b16 %v628
        %v1408 = vunpack.c.l.b16 %v629
        %v1409 = vunpack.c.h.b16 %v629
        %v1410 = vunpack.c.l.b16 %v630
        %v1411 = vunpack.c.h.b16 %v630
        %v1412 = vunpack.c.l.b16 %v631
        %v1413 = vunpack.c.h.b16 %v631
        %v1414 = vunpack.c.l.b16 %v632
        %v1415 = vunpack.c.h.b16 %v632
        %v1416 = vunpack.c.l.b16 %v633
        %v1417 = vunpack.c.h.b16 %v633
        %v1418 = vunpack.c.l.b16 %v634
        %v1419 = vunpack.c.h.b16 %v634
        %v1420 = vunpack.c.l.b16 %v635
        %v1421 = vunpack.c.h.b16 %v635
        %v1422 = vunpack.c.l.b16 %v636
        %v1423 = vunpack.c.h.b16 %v636
        %v1424 = vunpack.c.l.b16 %v637
        %v1425 = vunpack.c.h.b16 %v637
        %v1426 = vunpack.c.l.b16 %v638
        %v1427 = vunpack.c.h.b16 %v638
        %v1428 = vunpack.c.l.b16 %v639
        %v1429 = vunpack.c.h.b16 %v639
        %v1430 = vunpack.c.l.b16 %v640
        %v1431 = vunpack.c.h.b16 %v640
        %v1432 = vunpack.c.l.b16 %v641
        %v1433 = vunpack.c.h.b16 %v641
        %v1434 = vunpack.c.l.b16 %v642
        %v1435 = vunpack.c.h.b16 %v642
        %v1436 = vunpack.c.l.b16 %v643
        %v1437 = vunpack.c.h.b16 %v643
        %v1438 = vunpack.c.l.b16 %v644
        %v1439 = vunpack.c.h.b16 %v644
        %v1440 = vunpack.c.l.b16 %v645
        %v1441 = vunpack.c.h.b16 %v645
        %v1442 = vunpack.c.l.b16 %v646
        %v1443 = vunpack.c.h.b16 %v646
        %v1444 = vunpack.c.l.b16 %v647
        %v1445 = vunpack.c.h.b16 %v647
        %v1446 = vunpack.c.l.b16 %v648
        %v1447 = vunpack.c.h.b16 %v648
        %v1448 = vunpack.c.l.b16 %v649
        %v1449 = vunpack.c.h.b16 %v649
        %v1450 = vunpack.c.l.b16 %v650
        %v1451 = vunpack.c.h.b16 %v650
        %v1452 = vunpack.c.l.b16 %v651
        %v1453 = vunpack.c.h.b16 %v651
        %v1454 = vunpack.c.l.b16 %v652
        %v1455 = vunpack.c.h.b16 %v652
        %v1456 = vunpack.c.l.b16 %v653
        %v1457 = vunpack.c.h.b16 %v653
        %v1458 = vunpack.c.l.b16 %v654
        %v1459 = vunpack.c.h.b16 %v654
        %v1460 = vunpack.c.l.b16 %v655
        %v1461 = vunpack.c.h.b16 %v655
        %v1462 = vunpack.c.l.b16 %v656
        %v1463 = vunpack.c.h.b16 %v656
        %v1464 = vunpack.c.l.b16 %v657
        %v1465 = vunpack.c.h.b16 %v657
        %v1466 = vunpack.c.l.b16 %v658
        %v1467 = vunpack.c.h.b16 %v658
        %v1468 = vunpack.c.l.b16 %v659
        %v1469 = vunpack.c.h.b16 %v659
        %v1470 = vpack.c.b16 %v966, %v958
        %v1471 = vpack.c.b16 %v967, %v959
        %v1472 = vpack.c.b16 %v968, %v960
        %v1473 = vpack.c.b16 %v969, %v961
        %v1474 = vpack.c.b16 %v970, %v962
        %v1475 = vpack.c.b16 %v971, %v963
        %v1476 = vpack.c.b16 %v972, %v964
        %v1477 = vpack.c.b16 %v973, %v965
        %v1478 = vpack.c.b16 %v982, %v974
        %v1479 = vpack.c.b16 %v983, %v975
        %v1480 = vpack.c.b16 %v984, %v976
        %v1481 = vpack.c.b16 %v985, %v977
        %v1482 = vpack.c.b16 %v986, %v978
        %v1483 = vpack.c.b16 %v987, %v979
        %v1484 = vpack.c.b16 %v988, %v980
        %v1485 = vpack.c.b16 %v989, %v981
        %v1486 = vpack.c.b16 %v998, %v990
        %v1487 = vpack.c.b16 %v999, %v991
        %v1488 = vpack.c.b16 %v1000, %v992
        %v1489 = vpack.c.b16 %v1001, %v993
        %v1490 = vpack.c.b16 %v1002, %v994
        %v1491 = vpack.c.b16 %v1003, %v995
        %v1492 = vpack.c.b16 %v1004, %v996
        %v1493 = vpack.c.b16 %v1005, %v997
        %v1494 = vpack.c.b16 %v1014, %v1006
        %v1495 = vpack.c.b16 %v1015, %v1007
        %v1496 = vpack.c.b16 %v1016, %v1008
        %v1497 = vpack.c.b16 %v1017, %v1009
        %v1498 = vpack.c.b16 %v1018, %v1010
        %v1499 = vpack.c.b16 %v1019, %v1011
        %v1500 = vpack.c.b16 %v1020, %v1012
        %v1501 = vpack.c.b16 %v1021, %v1013
        %v1502 = vpack.c.b16 %v1030, %v1022
        %v1503 = vpack.c.b16 %v1031, %v1023
        %v1504 = vpack.c.b16 %v1032, %v1024
        %v1505 = vpack.c.b16 %v1033, %v1025
        %v1506 = vpack.c.b16 %v1034, %v1026
        %v1507 = vpack.c.b16 %v1035, %v1027
        %v1508 = vpack.c.b16 %v1036, %v1028
        %v1509 = vpack.c.b16 %v1037, %v1029
        %v1510 = vpack.c.b16 %v1046, %v1038
        %v1511 = vpack.c.b16 %v1047, %v1039
        %v1512 = vpack.c.b16 %v1048, %v1040
        %v1513 = vpack.c.b16 %v1049, %v1041
        %v1514 = vpack.c.b16 %v1050, %v1042
        %v1515 = vpack.c.b16 %v1051, %v1043
        %v1516 = vpack.c.b16 %v1052, %v1044
        %v1517 = vpack.c.b16 %v1053, %v1045
        %v1518 = vpack.c.b16 %v1062, %v1054
        %v1519 = vpack.c.b16 %v1063, %v1055
        %v1520 = vpack.c.b16 %v1064, %v1056
        %v1521 = vpack.c.b16 %v1065, %v1057
        %v1522 = vpack.c.b16 %v1066, %v1058
        %v1523 = vpack.c.b16 %v1067, %v1059
        %v1524 = vpack.c.b16 %v1068, %v1060
        %v1525 = vpack.c.b16 %v1069, %v1061
        %v1526 = vpack.c.b16 %v1078, %v1070
        %v1527 = vpack.c.b16 %v1079, %v1071
        %v1528 = vpack.c.b16 %v1080, %v1072
        %v1529 = vpack.c.b16 %v1081, %v1073
        %v1530 = vpack.c.b16 %v1082, %v1074
        %v1531 = vpack.c.b16 %v1083, %v1075
        %v1532 = vpack.c.b16 %v1084, %v1076
        %v1533 = vpack.c.b16 %v1085, %v1077
        %v1534 = vpack.c.b16 %v1094, %v1086
        %v1535 = vpack.c.b16 %v1095, %v1087
        %v1536 = vpack.c.b16 %v1096, %v1088
        %v1537 = vpack.c.b16 %v1097, %v1089
        %v1538 = vpack.c.b16 %v1098, %v1090
        %v1539 = vpack.c.b16 %v1099, %v1091
        %v1540 = vpack.c.b16 %v1100, %v1092
        %v1541 = vpack.c.b16 %v1101, %v1093
        %v1542 = vpack.c.b16 %v1110, %v1102
        %v1543 = vpack.c.b16 %v1111, %v1103
        %v1544 = vpack.c.b16 %v1112, %v1104
        %v1545 = vpack.c.b16 %v1113, %v1105
        %v1546 = vpack.c.b16 %v1114, %v1106
        %v1547 = vpack.c.b16 %v1115, %v1107
        %v1548 = vpack.c.b16 %v1116, %v1108
        %v1549 = vpack.c.b16 %v1117, %v1109
        %v1550 = vpack.c.b16 %v1126, %v1118
        %v1551 = vpack.c.b16 %v1127, %v1119
        %v1552 = vpack.c.b16 %v1128, %v1120
        %v1553 = vpack.c.b16 %v1129, %v1121
        %v1554 = vpack.c.b16 %v1130, %v1122
        %v1555 = vpack.c.b16 %v1131, %v1123
        %v1556 = vpack.c.b16 %v1132, %v1124
        %v1557 = vpack.c.b16 %v1133, %v1125
        %v1558 = vpack.c.b16 %v1142, %v1134
        %v1559 = vpack.c.b16 %v1143, %v1135
        %v1560 = vpack.c.b16 %v1144, %v1136
        %v1561 = vpack.c.b16 %v1145, %v1137
        %v1562 = vpack.c.b16 %v1146, %v1138
        %v1563 = vpack.c.b16 %v1147, %v1139
        %v1564 = vpack.c.b16 %v1148, %v1140
        %v1565 = vpack.c.b16 %v1149, %v1141
        %v1566 = vpack.c.b16 %v1158, %v1150
        %v1567 = vpack.c.b16 %v1159, %v1151
        %v1568 = vpack.c.b16 %v1160, %v1152
        %v1569 = vpack.c.b16 %v1161, %v1153
        %v1570 = vpack.c.b16 %v1162, %v1154
        %v1571 = vpack.c.b16 %v1163, %v1155
        %v1572 = vpack.c.b16 %v1164, %v1156
        %v1573 = vpack.c.b16 %v1165, %v1157
        %v1574 = vpack.c.b16 %v1174, %v1166
        %v1575 = vpack.c.b16 %v1175, %v1167
        %v1576 = vpack.c.b16 %v1176, %v1168
        %v1577 = vpack.c.b16 %v1177, %v1169
        %v1578 = vpack.c.b16 %v1178, %v1170
        %v1579 = vpack.c.b16 %v1179, %v1171
        %v1580 = vpack.c.b16 %v1180, %v1172
        %v1581 = vpack.c.b16 %v1181, %v1173
        %v1582 = vpack.c.b16 %v1190, %v1182
        %v1583 = vpack.c.b16 %v1191, %v1183
        %v1584 = vpack.c.b16 %v1192, %v1184
        %v1585 = vpack.c.b16 %v1193, %v1185
        %v1586 = vpack.c.b16 %v1194, %v1186
        %v1587 = vpack.c.b16 %v1195, %v1187
        %v1588 = vpack.c.b16 %v1196, %v1188
        %v1589 = vpack.c.b16 %v1197, %v1189
        %v1590 = vpack.c.b16 %v1206, %v1198
        %v1591 = vpack.c.b16 %v1207, %v1199
        %v1592 = vpack.c.b16 %v1208, %v1200
        %v1593 = vpack.c.b16 %v1209, %v1201
        %v1594 = vpack.c.b16 %v1210, %v1202
        %v1595 = vpack.c.b16 %v1211, %v1203
        %v1596 = vpack.c.b16 %v1212, %v1204
        %v1597 = vpack.c.b16 %v1213, %v1205
        %v1598 = vpack.c.b16 %v1222, %v1214
        %v1599 = vpack.c.b16 %v1223, %v1215
        %v1600 = vpack.c.b16 %v1224, %v1216
        %v1601 = vpack.c.b16 %v1225, %v1217
        %v1602 = vpack.c.b16 %v1226, %v1218
        %v1603 = vpack.c.b16 %v1227, %v1219
        %v1604 = vpack.c.b16 %v1228, %v1220
        %v1605 = vpack.c.b16 %v1229, %v1221
        %v1606 = vpack.c.b16 %v1238, %v1230
        %v1607 = vpack.c.b16 %v1239, %v1231
        %v1608 = vpack.c.b16 %v1240, %v1232
        %v1609 = vpack.c.b16 %v1241, %v1233
        %v1610 = vpack.c.b16 %v1242, %v1234
        %v1611 = vpack.c.b16 %v1243, %v1235
        %v1612 = vpack.c.b16 %v1244, %v1236
        %v1613 = vpack.c.b16 %v1245, %v1237
        %v1614 = vpack.c.b16 %v1254, %v1246
        %v1615 = vpack.c.b16 %v1255, %v1247
        %v1616 = vpack.c.b16 %v1256, %v1248
        %v1617 = vpack.c.b16 %v1257, %v1249
        %v1618 = vpack.c.b16 %v1258, %v1250
        %v1619 = vpack.c.b16 %v1259, %v1251
        %v1620 = vpack.c.b16 %v1260, %v1252
        %v1621 = vpack.c.b16 %v1261, %v1253
        %v1622 = vpack.c.b16 %v1270, %v1262
        %v1623 = vpack.c.b16 %v1271, %v1263
        %v1624 = vpack.c.b16 %v1272, %v1264
        %v1625 = vpack.c.b16 %v1273, %v1265
        %v1626 = vpack.c.b16 %v1274, %v1266
        %v1627 = vpack.c.b16 %v1275, %v1267
        %v1628 = vpack.c.b16 %v1276, %v1268
        %v1629 = vpack.c.b16 %v1277, %v1269
        %v1630 = vpack.c.b16 %v1286, %v1278
        %v1631 = vpack.c.b16 %v1287, %v1279
        %v1632 = vpack.c.b16 %v1288, %v1280
        %v1633 = vpack.c.b16 %v1289, %v1281
        %v1634 = vpack.c.b16 %v1290, %v1282
        %v1635 = vpack.c.b16 %v1291, %v1283
        %v1636 = vpack.c.b16 %v1292, %v1284
        %v1637 = vpack.c.b16 %v1293, %v1285
        %v1638 = vpack.c.b16 %v1302, %v1294
        %v1639 = vpack.c.b16 %v1303, %v1295
        %v1640 = vpack.c.b16 %v1304, %v1296
        %v1641 = vpack.c.b16 %v1305, %v1297
        %v1642 = vpack.c.b16 %v1306, %v1298
        %v1643 = vpack.c.b16 %v1307, %v1299
        %v1644 = vpack.c.b16 %v1308, %v1300
        %v1645 = vpack.c.b16 %v1309, %v1301
        %v1646 = vpack.c.b16 %v1318, %v1310
        %v1647 = vpack.c.b16 %v1319, %v1311
        %v1648 = vpack.c.b16 %v1320, %v1312
        %v1649 = vpack.c.b16 %v1321, %v1313
        %v1650 = vpack.c.b16 %v1322, %v1314
        %v1651 = vpack.c.b16 %v1323, %v1315
        %v1652 = vpack.c.b16 %v1324, %v1316
        %v1653 = vpack.c.b16 %v1325, %v1317
        %v1654 = vpack.c.b16 %v1334, %v1326
        %v1655 = vpack.c.b16 %v1335, %v1327
        %v1656 = vpack.c.b16 %v1336, %v1328
        %v1657 = vpack.c.b16 %v1337, %v1329
        %v1658 = vpack.c.b16 %v1338, %v1330
        %v1659 = vpack.c.b16 %v1339, %v1331
        %v1660 = vpack.c.b16 %v1340, %v1332
        %v1661 = vpack.c.b16 %v1341, %v1333
        %v1662 = vpack.c.b16 %v1350, %v1342
        %v1663 = vpack.c.b16 %v1351, %v1343
        %v1664 = vpack.c.b16 %v1352, %v1344
        %v1665 = vpack.c.b16 %v1353, %v1345
        %v1666 = vpack.c.b16 %v1354, %v1346
        %v1667 = vpack.c.b16 %v1355, %v1347
        %v1668 = vpack.c.b16 %v1356, %v1348
        %v1669 = vpack.c.b16 %v1357, %v1349
        %v1670 = vpack.c.b16 %v1366, %v1358
        %v1671 = vpack.c.b16 %v1367, %v1359
        %v1672 = vpack.c.b16 %v1368, %v1360
        %v1673 = vpack.c.b16 %v1369, %v1361
        %v1674 = vpack.c.b16 %v1370, %v1362
        %v1675 = vpack.c.b16 %v1371, %v1363
        %v1676 = vpack.c.b16 %v1372, %v1364
        %v1677 = vpack.c.b16 %v1373, %v1365
        %v1678 = vpack.c.b16 %v1382, %v1374
        %v1679 = vpack.c.b16 %v1383, %v1375
        %v1680 = vpack.c.b16 %v1384, %v1376
        %v1681 = vpack.c.b16 %v1385, %v1377
        %v1682 = vpack.c.b16 %v1386, %v1378
        %v1683 = vpack.c.b16 %v1387, %v1379
        %v1684 = vpack.c.b16 %v1388, %v1380
        %v1685 = vpack.c.b16 %v1389, %v1381
        %v1686 = vpack.c.b16 %v1398, %v1390
        %v1687 = vpack.c.b16 %v1399, %v1391
        %v1688 = vpack.c.b16 %v1400, %v1392
        %v1689 = vpack.c.b16 %v1401, %v1393
        %v1690 = vpack.c.b16 %v1402, %v1394
        %v1691 = vpack.c.b16 %v1403, %v1395
        %v1692 = vpack.c.b16 %v1404, %v1396
        %v1693 = vpack.c.b16 %v1405, %v1397
        %v1694 = vpack.c.b16 %v1414, %v1406
        %v1695 = vpack.c.b16 %v1415, %v1407
        %v1696 = vpack.c.b16 %v1416, %v1408
        %v1697 = vpack.c.b16 %v1417, %v1409
        %v1698 = vpack.c.b16 %v1418, %v1410
        %v1699 = vpack.c.b16 %v1419, %v1411
        %v1700 = vpack.c.b16 %v1420, %v1412
        %v1701 = vpack.c.b16 %v1421, %v1413
        %v1702 = vpack.c.b16 %v1430, %v1422
        %v1703 = vpack.c.b16 %v1431, %v1423
        %v1704 = vpack.c.b16 %v1432, %v1424
        %v1705 = vpack.c.b16 %v1433, %v1425
        %v1706 = vpack.c.b16 %v1434, %v1426
        %v1707 = vpack.c.b16 %v1435, %v1427
        %v1708 = vpack.c.b16 %v1436, %v1428
        %v1709 = vpack.c.b16 %v1437, %v1429
        %v1710 = vpack.c.b16 %v1446, %v1438
        %v1711 = vpack.c.b16 %v1447, %v1439
        %v1712 = vpack.c.b16 %v1448, %v1440
        %v1713 = vpack.c.b16 %v1449, %v1441
        %v1714 = vpack.c.b16 %v1450, %v1442
        %v1715 = vpack.c.b16 %v1451, %v1443
        %v1716 = vpack.c.b16 %v1452, %v1444
        %v1717 = vpack.c.b16 %v1453, %v1445
        %v1718 = vpack.c.b16 %v1462, %v1454
        %v1719 = vpack.c.b16 %v1463, %v1455
        %v1720 = vpack.c.b16 %v1464, %v1456
        %v1721 = vpack.c.b16 %v1465, %v1457
        %v1722 = vpack.c.b16 %v1466, %v1458
        %v1723 = vpack.c.b16 %v1467, %v1459
        %v1724 = vpack.c.b16 %v1468, %v1460
        %v1725 = vpack.c.b16 %v1469, %v1461
        %1982 = vmatprep.subr.bf16.mxu0 %v1471
        %1983 = vmatpush1.bf16.msra.mxu0 %v1470
        %1984 = vmatprep.subr.bf16.mxu0 %v1479
        %1985 = vmatpush1.bf16.msra.mxu0 %v1478
        %1986 = vmatprep.subr.bf16.mxu0 %v1487
        %1987 = vmatpush1.bf16.msra.mxu0 %v1486
        %1988 = vmatprep.subr.bf16.mxu0 %v1495
        %1989 = vmatpush1.bf16.msra.mxu0 %v1494
        %1990 = vmatprep.subr.bf16.mxu0 %v1503
        %1991 = vmatpush1.bf16.msra.mxu0 %v1502
        %1992 = vmatprep.subr.bf16.mxu0 %v1511
        %1993 = vmatpush1.bf16.msra.mxu0 %v1510
        %1994 = vmatprep.subr.bf16.mxu0 %v1519
        %1995 = vmatpush1.bf16.msra.mxu0 %v1518
        %1996 = vmatprep.subr.bf16.mxu0 %v1527
        %1997 = vmatpush1.bf16.msra.mxu0 %v1526
        %1998 = vmatprep.subr.bf16.mxu0 %v1535
        %1999 = vmatpush1.bf16.msra.mxu0 %v1534
        %2000 = vmatprep.subr.bf16.mxu0 %v1543
        %2001 = vmatpush1.bf16.msra.mxu0 %v1542
        %2002 = vmatprep.subr.bf16.mxu0 %v1551
        %2003 = vmatpush1.bf16.msra.mxu0 %v1550
        %2004 = vmatprep.subr.bf16.mxu0 %v1559
        %2005 = vmatpush1.bf16.msra.mxu0 %v1558
        %2006 = vmatprep.subr.bf16.mxu0 %v1567
        %2007 = vmatpush1.bf16.msra.mxu0 %v1566
        %2008 = vmatprep.subr.bf16.mxu0 %v1575
        %2009 = vmatpush1.bf16.msra.mxu0 %v1574
        %2010 = vmatprep.subr.bf16.mxu0 %v1583
        %2011 = vmatpush1.bf16.msra.mxu0 %v1582
        %2012 = vmatprep.subr.bf16.mxu0 %v1591
        %2013 = vmatpush1.bf16.msra.mxu0 %v1590
        %2014 = vmatprep.mubr.bf16.mxu0 %v365
        %2015 = vmatmul.mubr.bf16.gmra.mrb[0].mxu0 %v364
        %v2016 = vpop.f32.mrb[0].mxu0
        %v2017 = vadd.f32 %v665, %v2016
        %v2018 = vpop.f32.mrb[0].mxu0
        %v2019 = vadd.f32 %v669, %v2018
        %v2020 = vpop.f32.mrb[0].mxu0
        %v2021 = vadd.f32 %v665, %v2020
        %v2022 = vpop.f32.mrb[0].mxu0
        %v2023 = vadd.f32 %v669, %v2022
        %2024 = vmatprep.mubr.bf16.mxu0 %v369
        %2025 = vmatmul.mubr.bf16.gmra.mrb[0].mxu0 %v368
        %v2026 = vpop.f32.mrb[0].mxu0
        %v2027 = vadd.f32 %v665, %v2026
        %v2028 = vpop.f32.mrb[0].mxu0
        %v2029 = vadd.f32 %v669, %v2028
        %v2030 = vpop.f32.mrb[0].mxu0
        %v2031 = vadd.f32 %v665, %v2030
        %v2032 = vpop.f32.mrb[0].mxu0
        %v2033 = vadd.f32 %v669, %v2032
        %2034 = vmatprep.mubr.bf16.mxu0 %v373
        %2035 = vmatmul.mubr.bf16.gmra.mrb[0].mxu0 %v372
        %v2036 = vpop.f32.mrb[0].mxu0
        %v2037 = vadd.f32 %v665, %v2036
        %v2038 = vpop.f32.mrb[0].mxu0
        %v2039 = vadd.f32 %v669, %v2038
        %v2040 = vpop.f32.mrb[0].mxu0
        %v2041 = vadd.f32 %v665, %v2040
        %v2042 = vpop.f32.mrb[0].mxu0
        %v2043 = vadd.f32 %v669, %v2042
        %2044 = vmatprep.mubr.bf16.mxu0 %v377
        %2045 = vmatmul.mubr.bf16.gmra.mrb[0].mxu0 %v376
        %v2046 = vpop.f32.mrb[0].mxu0
        %v2047 = vadd.f32 %v665, %v2046
        %v2048 = vpop.f32.mrb[0].mxu0
        %v2049 = vadd.f32 %v669, %v2048
        %v2050 = vpop.f32.mrb[0].mxu0
        %v2051 = vadd.f32 %v665, %v2050
        %v2052 = vpop.f32.mrb[0].mxu0
        %v2053 = vadd.f32 %v669, %v2052
        %2054 = vmatprep.mubr.bf16.mxu0 %v381
        %2055 = vmatmul.mubr.bf16.gmra.mrb[0].mxu0 %v380
        %v2056 = vpop.f32.mrb[0].mxu0
        %v2057 = vadd.f32 %v665, %v2056
        %v2058 = vpop.f32.mrb[0].mxu0
        %v2059 = vadd.f32 %v669, %v2058
        %v2060 = vpop.f32.mrb[0].mxu0
        %v2061 = vadd.f32 %v665, %v2060
        %v2062 = vpop.f32.mrb[0].mxu0
        %v2063 = vadd.f32 %v669, %v2062
        %2064 = vmatprep.mubr.bf16.mxu0 %v385
        %2065 = vmatmul.mubr.bf16.gmra.mrb[0].mxu0 %v384
        %v2066 = vpop.f32.mrb[0].mxu0
        %v2067 = vadd.f32 %v665, %v2066
        %v2068 = vpop.f32.mrb[0].mxu0
        %v2069 = vadd.f32 %v669, %v2068
        %v2070 = vpop.f32.mrb[0].mxu0
        %v2071 = vadd.f32 %v665, %v2070
        %v2072 = vpop.f32.mrb[0].mxu0
        %v2073 = vadd.f32 %v669, %v2072
        %2074 = vmatprep.mubr.bf16.mxu0 %v389
        %2075 = vmatmul.mubr.bf16.gmra.mrb[0].mxu0 %v388
        %v2076 = vpop.f32.mrb[0].mxu0
        %v2077 = vadd.f32 %v665, %v2076
        %v2078 = vpop.f32.mrb[0].mxu0
        %v2079 = vadd.f32 %v669, %v2078
        %v2080 = vpop.f32.mrb[0].mxu0
        %v2081 = vadd.f32 %v665, %v2080
        %v2082 = vpop.f32.mrb[0].mxu0
        %v2083 = vadd.f32 %v669, %v2082
        %2084 = vmatprep.mubr.bf16.mxu0 %v393
        %2085 = vmatmul.mubr.bf16.gmra.mrb[0].mxu0 %v392
        %v2086 = vpop.f32.mrb[0].mxu0
        %v2087 = vadd.f32 %v665, %v2086
        %v2088 = vpop.f32.mrb[0].mxu0
        %v2089 = vadd.f32 %v669, %v2088
        %v2090 = vpop.f32.mrb[0].mxu0
        %v2091 = vadd.f32 %v665, %v2090
        %v2092 = vpop.f32.mrb[0].mxu0
        %v2093 = vadd.f32 %v669, %v2092
        %2094 = vmatprep.mubr.bf16.mxu0 %v397
        %2095 = vmatmul.mubr.bf16.gmra.mrb[0].mxu0 %v396
        %v2096 = vpop.f32.mrb[0].mxu0
        %v2097 = vadd.f32 %v665, %v2096
        %v2098 = vpop.f32.mrb[0].mxu0
        %v2099 = vadd.f32 %v669, %v2098
        %v2100 = vpop.f32.mrb[0].mxu0
        %v2101 = vadd.f32 %v665, %v2100
        %v2102 = vpop.f32.mrb[0].mxu0
        %v2103 = vadd.f32 %v669, %v2102
        %2104 = vmatprep.mubr.bf16.mxu0 %v401
        %2105 = vmatmul.mubr.bf16.gmra.mrb[0].mxu0 %v400
        %v2106 = vpop.f32.mrb[0].mxu0
        %v2107 = vadd.f32 %v665, %v2106
        %v2108 = vpop.f32.mrb[0].mxu0
        %v2109 = vadd.f32 %v669, %v2108
        %v2110 = vpop.f32.mrb[0].mxu0
        %v2111 = vpop.f32.mrb[0].mxu0
        %2112 = vdwg.mxu0
        %2113 = vmatprep.subr.bf16.mxu0 %v1599
        %2114 = vmatpush1.bf16.msra.mxu0 %v1598
        %2115 = vmatprep.subr.bf16.mxu0 %v1607
        %2116 = vmatpush1.bf16.msra.mxu0 %v1606
        %2117 = vmatprep.subr.bf16.mxu0 %v1615
        %2118 = vmatpush1.bf16.msra.mxu0 %v1614
        %2119 = vmatprep.subr.bf16.mxu0 %v1623
        %2120 = vmatpush1.bf16.msra.mxu0 %v1622
        %2121 = vmatprep.subr.bf16.mxu0 %v1631
        %2122 = vmatpush1.bf16.msra.mxu0 %v1630
        %2123 = vmatprep.subr.bf16.mxu0 %v1639
        %2124 = vmatpush1.bf16.msra.mxu0 %v1638
        %2125 = vmatprep.subr.bf16.mxu0 %v1647
        %2126 = vmatpush1.bf16.msra.mxu0 %v1646
        %2127 = vmatprep.subr.bf16.mxu0 %v1655
        %2128 = vmatpush1.bf16.msra.mxu0 %v1654
        %2129 = vmatprep.subr.bf16.mxu0 %v1663
        %2130 = vmatpush1.bf16.msra.mxu0 %v1662
        %2131 = vmatprep.subr.bf16.mxu0 %v1671
        %2132 = vmatpush1.bf16.msra.mxu0 %v1670
        %2133 = vmatprep.subr.bf16.mxu0 %v1679
        %2134 = vmatpush1.bf16.msra.mxu0 %v1678
        %2135 = vmatprep.subr.bf16.mxu0 %v1687
        %2136 = vmatpush1.bf16.msra.mxu0 %v1686
        %2137 = vmatprep.subr.bf16.mxu0 %v1695
        %2138 = vmatpush1.bf16.msra.mxu0 %v1694
        %2139 = vmatprep.subr.bf16.mxu0 %v1703
        %2140 = vmatpush1.bf16.msra.mxu0 %v1702
        %2141 = vmatprep.subr.bf16.mxu0 %v1711
        %2142 = vmatpush1.bf16.msra.mxu0 %v1710
        %2143 = vmatprep.subr.bf16.mxu0 %v1719
        %2144 = vmatpush1.bf16.msra.mxu0 %v1718
        %2145 = vmatprep.mubr.bf16.mxu0 %v367
        %2146 = vmatmul.mubr.bf16.gmra.mrb[0].mxu0 %v366
        %v2147 = vpop.f32.mrb[0].mxu0
        %v2148 = vadd.f32 %v2017, %v2147
        %v2149 = vpop.f32.mrb[0].mxu0
        %v2150 = vadd.f32 %v2019, %v2149
        %v2151 = vpop.f32.mrb[0].mxu0
        %v2152 = vadd.f32 %v2021, %v2151
        %v2153 = vpop.f32.mrb[0].mxu0
        %v2154 = vadd.f32 %v2023, %v2153
        %2155 = vmatprep.mubr.bf16.mxu0 %v371
        %2156 = vmatmul.mubr.bf16.gmra.mrb[0].mxu0 %v370
        %v2157 = vpop.f32.mrb[0].mxu0
        %v2158 = vadd.f32 %v2027, %v2157
        %v2159 = vpop.f32.mrb[0].mxu0
        %v2160 = vadd.f32 %v2029, %v2159
        %v2161 = vpop.f32.mrb[0].mxu0
        %v2162 = vadd.f32 %v2031, %v2161
        %v2163 = vpop.f32.mrb[0].mxu0
        %v2164 = vadd.f32 %v2033, %v2163
        %2165 = vmatprep.mubr.bf16.mxu0 %v375
        %2166 = vmatmul.mubr.bf16.gmra.mrb[0].mxu0 %v374
        %v2167 = vpop.f32.mrb[0].mxu0
        %v2168 = vadd.f32 %v2037, %v2167
        %v2169 = vpop.f32.mrb[0].mxu0
        %v2170 = vadd.f32 %v2039, %v2169
        %v2171 = vpop.f32.mrb[0].mxu0
        %v2172 = vadd.f32 %v2041, %v2171
        %v2173 = vpop.f32.mrb[0].mxu0
        %v2174 = vadd.f32 %v2043, %v2173
        %2175 = vmatprep.mubr.bf16.mxu0 %v379
        %2176 = vmatmul.mubr.bf16.gmra.mrb[0].mxu0 %v378
        %v2177 = vpop.f32.mrb[0].mxu0
        %v2178 = vadd.f32 %v2047, %v2177
        %v2179 = vpop.f32.mrb[0].mxu0
        %v2180 = vadd.f32 %v2049, %v2179
        %v2181 = vpop.f32.mrb[0].mxu0
        %v2182 = vadd.f32 %v2051, %v2181
        %v2183 = vpop.f32.mrb[0].mxu0
        %v2184 = vadd.f32 %v2053, %v2183
        %2185 = vmatprep.mubr.bf16.mxu0 %v383
        %2186 = vmatmul.mubr.bf16.gmra.mrb[0].mxu0 %v382
        %v2187 = vpop.f32.mrb[0].mxu0
        %v2188 = vadd.f32 %v2057, %v2187
        %v2189 = vpop.f32.mrb[0].mxu0
        %v2190 = vadd.f32 %v2059, %v2189
        %v2191 = vpop.f32.mrb[0].mxu0
        %v2192 = vadd.f32 %v2061, %v2191
        %v2193 = vpop.f32.mrb[0].mxu0
        %v2194 = vadd.f32 %v2063, %v2193
        %2195 = vmatprep.mubr.bf16.mxu0 %v387
        %2196 = vmatmul.mubr.bf16.gmra.mrb[0].mxu0 %v386
        %v2197 = vpop.f32.mrb[0].mxu0
        %v2198 = vadd.f32 %v2067, %v2197
        %v2199 = vpop.f32.mrb[0].mxu0
        %v2200 = vadd.f32 %v2069, %v2199
        %v2201 = vpop.f32.mrb[0].mxu0
        %v2202 = vadd.f32 %v2071, %v2201
        %v2203 = vpop.f32.mrb[0].mxu0
        %v2204 = vadd.f32 %v2073, %v2203
        %2205 = vmatprep.mubr.bf16.mxu0 %v391
        %2206 = vmatmul.mubr.bf16.gmra.mrb[0].mxu0 %v390
        %v2207 = vpop.f32.mrb[0].mxu0
        %v2208 = vadd.f32 %v2077, %v2207
        %v2209 = vpop.f32.mrb[0].mxu0
        %v2210 = vadd.f32 %v2079, %v2209
        %v2211 = vpop.f32.mrb[0].mxu0
        %v2212 = vadd.f32 %v2081, %v2211
        %v2213 = vpop.f32.mrb[0].mxu0
        %v2214 = vadd.f32 %v2083, %v2213
        %2215 = vmatprep.mubr.bf16.mxu0 %v395
        %2216 = vmatmul.mubr.bf16.gmra.mrb[0].mxu0 %v394
        %v2217 = vpop.f32.mrb[0].mxu0
        %v2218 = vadd.f32 %v2087, %v2217
        %v2219 = vpop.f32.mrb[0].mxu0
        %v2220 = vadd.f32 %v2089, %v2219
        %v2221 = vpop.f32.mrb[0].mxu0
        %v2222 = vadd.f32 %v2091, %v2221
        %v2223 = vpop.f32.mrb[0].mxu0
        %v2224 = vadd.f32 %v2093, %v2223
        %2225 = vmatprep.mubr.bf16.mxu0 %v399
        %2226 = vmatmul.mubr.bf16.gmra.mrb[0].mxu0 %v398
        %v2227 = vpop.f32.mrb[0].mxu0
        %v2228 = vadd.f32 %v2097, %v2227
        %v2229 = vpop.f32.mrb[0].mxu0
        %v2230 = vadd.f32 %v2099, %v2229
        %v2231 = vpop.f32.mrb[0].mxu0
        %v2232 = vadd.f32 %v2101, %v2231
        %v2233 = vpop.f32.mrb[0].mxu0
        %v2234 = vadd.f32 %v2103, %v2233
        %2235 = vmatprep.mubr.bf16.mxu0 %v403
        %2236 = vmatmul.mubr.bf16.gmra.mrb[0].mxu0 %v402
        %v2237 = vpop.f32.mrb[0].mxu0
        %v2238 = vadd.f32 %v2107, %v2237
        %v2239 = vpop.f32.mrb[0].mxu0
        %v2240 = vadd.f32 %v2109, %v2239
        %v2241 = vpop.f32.mrb[0].mxu0
        %v2242 = vpop.f32.mrb[0].mxu0
        %2243 = vdwg.mxu0
        %2244 = vmatprep.subr.bf16.mxu0 %v1473
        %2245 = vmatpush1.bf16.msra.mxu0 %v1472
        %2246 = vmatprep.subr.bf16.mxu0 %v1481
        %2247 = vmatpush1.bf16.msra.mxu0 %v1480
        %2248 = vmatprep.subr.bf16.mxu0 %v1489
        %2249 = vmatpush1.bf16.msra.mxu0 %v1488
        %2250 = vmatprep.subr.bf16.mxu0 %v1497
        %2251 = vmatpush1.bf16.msra.mxu0 %v1496
        %2252 = vmatprep.subr.bf16.mxu0 %v1505
        %2253 = vmatpush1.bf16.msra.mxu0 %v1504
        %2254 = vmatprep.subr.bf16.mxu0 %v1513
        %2255 = vmatpush1.bf16.msra.mxu0 %v1512
        %2256 = vmatprep.subr.bf16.mxu0 %v1521
        %2257 = vmatpush1.bf16.msra.mxu0 %v1520
        %2258 = vmatprep.subr.bf16.mxu0 %v1529
        %2259 = vmatpush1.bf16.msra.mxu0 %v1528
        %2260 = vmatprep.subr.bf16.mxu0 %v1537
        %2261 = vmatpush1.bf16.msra.mxu0 %v1536
        %2262 = vmatprep.subr.bf16.mxu0 %v1545
        %2263 = vmatpush1.bf16.msra.mxu0 %v1544
        %2264 = vmatprep.subr.bf16.mxu0 %v1553
        %2265 = vmatpush1.bf16.msra.mxu0 %v1552
        %2266 = vmatprep.subr.bf16.mxu0 %v1561
        %2267 = vmatpush1.bf16.msra.mxu0 %v1560
        %2268 = vmatprep.subr.bf16.mxu0 %v1569
        %2269 = vmatpush1.bf16.msra.mxu0 %v1568
        %2270 = vmatprep.subr.bf16.mxu0 %v1577
        %2271 = vmatpush1.bf16.msra.mxu0 %v1576
        %2272 = vmatprep.subr.bf16.mxu0 %v1585
        %2273 = vmatpush1.bf16.msra.mxu0 %v1584
        %2274 = vmatprep.subr.bf16.mxu0 %v1593
        %2275 = vmatpush1.bf16.msra.mxu0 %v1592
        %2276 = vmatprep.mubr.bf16.mxu0 %v365
        %2277 = vmatmul.mubr.bf16.gmra.mrb[0].mxu0 %v364
        %v2278 = vpop.f32.mrb[0].mxu0
        %v2279 = vadd.f32 %v673, %v2278
        %v2280 = vpop.f32.mrb[0].mxu0
        %v2281 = vadd.f32 %v677, %v2280
        %v2282 = vpop.f32.mrb[0].mxu0
        %v2283 = vadd.f32 %v673, %v2282
        %v2284 = vpop.f32.mrb[0].mxu0
        %v2285 = vadd.f32 %v677, %v2284
        %2286 = vmatprep.mubr.bf16.mxu0 %v369
        %2287 = vmatmul.mubr.bf16.gmra.mrb[0].mxu0 %v368
        %v2288 = vpop.f32.mrb[0].mxu0
        %v2289 = vadd.f32 %v673, %v2288
        %v2290 = vpop.f32.mrb[0].mxu0
        %v2291 = vadd.f32 %v677, %v2290
        %v2292 = vpop.f32.mrb[0].mxu0
        %v2293 = vadd.f32 %v673, %v2292
        %v2294 = vpop.f32.mrb[0].mxu0
        %v2295 = vadd.f32 %v677, %v2294
        %2296 = vmatprep.mubr.bf16.mxu0 %v373
        %2297 = vmatmul.mubr.bf16.gmra.mrb[0].mxu0 %v372
        %v2298 = vpop.f32.mrb[0].mxu0
        %v2299 = vadd.f32 %v673, %v2298
        %v2300 = vpop.f32.mrb[0].mxu0
        %v2301 = vadd.f32 %v677, %v2300
        %v2302 = vpop.f32.mrb[0].mxu0
        %v2303 = vadd.f32 %v673, %v2302
        %v2304 = vpop.f32.mrb[0].mxu0
        %v2305 = vadd.f32 %v677, %v2304
        %2306 = vmatprep.mubr.bf16.mxu0 %v377
        %2307 = vmatmul.mubr.bf16.gmra.mrb[0].mxu0 %v376
        %v2308 = vpop.f32.mrb[0].mxu0
        %v2309 = vadd.f32 %v673, %v2308
        %v2310 = vpop.f32.mrb[0].mxu0
        %v2311 = vadd.f32 %v677, %v2310
        %v2312 = vpop.f32.mrb[0].mxu0
        %v2313 = vadd.f32 %v673, %v2312
        %v2314 = vpop.f32.mrb[0].mxu0
        %v2315 = vadd.f32 %v677, %v2314
        %2316 = vmatprep.mubr.bf16.mxu0 %v381
        %2317 = vmatmul.mubr.bf16.gmra.mrb[0].mxu0 %v380
        %v2318 = vpop.f32.mrb[0].mxu0
        %v2319 = vadd.f32 %v673, %v2318
        %v2320 = vpop.f32.mrb[0].mxu0
        %v2321 = vadd.f32 %v677, %v2320
        %v2322 = vpop.f32.mrb[0].mxu0
        %v2323 = vadd.f32 %v673, %v2322
        %v2324 = vpop.f32.mrb[0].mxu0
        %v2325 = vadd.f32 %v677, %v2324
        %2326 = vmatprep.mubr.bf16.mxu0 %v385
        %2327 = vmatmul.mubr.bf16.gmra.mrb[0].mxu0 %v384
        %v2328 = vpop.f32.mrb[0].mxu0
        %v2329 = vadd.f32 %v673, %v2328
        %v2330 = vpop.f32.mrb[0].mxu0
        %v2331 = vadd.f32 %v677, %v2330
        %v2332 = vpop.f32.mrb[0].mxu0
        %v2333 = vadd.f32 %v673, %v2332
        %v2334 = vpop.f32.mrb[0].mxu0
        %v2335 = vadd.f32 %v677, %v2334
        %2336 = vmatprep.mubr.bf16.mxu0 %v389
        %2337 = vmatmul.mubr.bf16.gmra.mrb[0].mxu0 %v388
        %v2338 = vpop.f32.mrb[0].mxu0
        %v2339 = vadd.f32 %v673, %v2338
        %v2340 = vpop.f32.mrb[0].mxu0
        %v2341 = vadd.f32 %v677, %v2340
        %v2342 = vpop.f32.mrb[0].mxu0
        %v2343 = vadd.f32 %v673, %v2342
        %v2344 = vpop.f32.mrb[0].mxu0
        %v2345 = vadd.f32 %v677, %v2344
        %2346 = vmatprep.mubr.bf16.mxu0 %v393
        %2347 = vmatmul.mubr.bf16.gmra.mrb[0].mxu0 %v392
        %v2348 = vpop.f32.mrb[0].mxu0
        %v2349 = vadd.f32 %v673, %v2348
        %v2350 = vpop.f32.mrb[0].mxu0
        %v2351 = vadd.f32 %v677, %v2350
        %v2352 = vpop.f32.mrb[0].mxu0
        %v2353 = vadd.f32 %v673, %v2352
        %v2354 = vpop.f32.mrb[0].mxu0
        %v2355 = vadd.f32 %v677, %v2354
        %2356 = vmatprep.mubr.bf16.mxu0 %v397
        %2357 = vmatmul.mubr.bf16.gmra.mrb[0].mxu0 %v396
        %v2358 = vpop.f32.mrb[0].mxu0
        %v2359 = vadd.f32 %v673, %v2358
        %v2360 = vpop.f32.mrb[0].mxu0
        %v2361 = vadd.f32 %v677, %v2360
        %v2362 = vpop.f32.mrb[0].mxu0
        %v2363 = vadd.f32 %v673, %v2362
        %v2364 = vpop.f32.mrb[0].mxu0
        %v2365 = vadd.f32 %v677, %v2364
        %2366 = vmatprep.mubr.bf16.mxu0 %v401
        %2367 = vmatmul.mubr.bf16.gmra.mrb[0].mxu0 %v400
        %v2368 = vpop.f32.mrb[0].mxu0
        %v2369 = vadd.f32 %v673, %v2368
        %v2370 = vpop.f32.mrb[0].mxu0
        %v2371 = vadd.f32 %v677, %v2370
        %v2372 = vpop.f32.mrb[0].mxu0
        %v2373 = vpop.f32.mrb[0].mxu0
        %2374 = vdwg.mxu0
        %2375 = vmatprep.subr.bf16.mxu0 %v1601
        %2376 = vmatpush1.bf16.msra.mxu0 %v1600
        %2377 = vmatprep.subr.bf16.mxu0 %v1609
        %2378 = vmatpush1.bf16.msra.mxu0 %v1608
        %2379 = vmatprep.subr.bf16.mxu0 %v1617
        %2380 = vmatpush1.bf16.msra.mxu0 %v1616
        %2381 = vmatprep.subr.bf16.mxu0 %v1625
        %2382 = vmatpush1.bf16.msra.mxu0 %v1624
        %2383 = vmatprep.subr.bf16.mxu0 %v1633
        %2384 = vmatpush1.bf16.msra.mxu0 %v1632
        %2385 = vmatprep.subr.bf16.mxu0 %v1641
        %2386 = vmatpush1.bf16.msra.mxu0 %v1640
        %2387 = vmatprep.subr.bf16.mxu0 %v1649
        %2388 = vmatpush1.bf16.msra.mxu0 %v1648
        %2389 = vmatprep.subr.bf16.mxu0 %v1657
        %2390 = vmatpush1.bf16.msra.mxu0 %v1656
        %2391 = vmatprep.subr.bf16.mxu0 %v1665
        %2392 = vmatpush1.bf16.msra.mxu0 %v1664
        %2393 = vmatprep.subr.bf16.mxu0 %v1673
        %2394 = vmatpush1.bf16.msra.mxu0 %v1672
        %2395 = vmatprep.subr.bf16.mxu0 %v1681
        %2396 = vmatpush1.bf16.msra.mxu0 %v1680
        %2397 = vmatprep.subr.bf16.mxu0 %v1689
        %2398 = vmatpush1.bf16.msra.mxu0 %v1688
        %2399 = vmatprep.subr.bf16.mxu0 %v1697
        %2400 = vmatpush1.bf16.msra.mxu0 %v1696
        %2401 = vmatprep.subr.bf16.mxu0 %v1705
        %2402 = vmatpush1.bf16.msra.mxu0 %v1704
        %2403 = vmatprep.subr.bf16.mxu0 %v1713
        %2404 = vmatpush1.bf16.msra.mxu0 %v1712
        %2405 = vmatprep.subr.bf16.mxu0 %v1721
        %2406 = vmatpush1.bf16.msra.mxu0 %v1720
        %2407 = vmatprep.mubr.bf16.mxu0 %v367
        %2408 = vmatmul.mubr.bf16.gmra.mrb[0].mxu0 %v366
        %v2409 = vpop.f32.mrb[0].mxu0
        %v2410 = vadd.f32 %v2279, %v2409
        %v2411 = vpop.f32.mrb[0].mxu0
        %v2412 = vadd.f32 %v2281, %v2411
        %v2413 = vpop.f32.mrb[0].mxu0
        %v2414 = vadd.f32 %v2283, %v2413
        %v2415 = vpop.f32.mrb[0].mxu0
        %v2416 = vadd.f32 %v2285, %v2415
        %2417 = vmatprep.mubr.bf16.mxu0 %v371
        %2418 = vmatmul.mubr.bf16.gmra.mrb[0].mxu0 %v370
        %v2419 = vpop.f32.mrb[0].mxu0
        %v2420 = vadd.f32 %v2289, %v2419
        %v2421 = vpop.f32.mrb[0].mxu0
        %v2422 = vadd.f32 %v2291, %v2421
        %v2423 = vpop.f32.mrb[0].mxu0
        %v2424 = vadd.f32 %v2293, %v2423
        %v2425 = vpop.f32.mrb[0].mxu0
        %v2426 = vadd.f32 %v2295, %v2425
        %2427 = vmatprep.mubr.bf16.mxu0 %v375
        %2428 = vmatmul.mubr.bf16.gmra.mrb[0].mxu0 %v374
        %v2429 = vpop.f32.mrb[0].mxu0
        %v2430 = vadd.f32 %v2299, %v2429
        %v2431 = vpop.f32.mrb[0].mxu0
        %v2432 = vadd.f32 %v2301, %v2431
        %v2433 = vpop.f32.mrb[0].mxu0
        %v2434 = vadd.f32 %v2303, %v2433
        %v2435 = vpop.f32.mrb[0].mxu0
        %v2436 = vadd.f32 %v2305, %v2435
        %2437 = vmatprep.mubr.bf16.mxu0 %v379
        %2438 = vmatmul.mubr.bf16.gmra.mrb[0].mxu0 %v378
        %v2439 = vpop.f32.mrb[0].mxu0
        %v2440 = vadd.f32 %v2309, %v2439
        %v2441 = vpop.f32.mrb[0].mxu0
        %v2442 = vadd.f32 %v2311, %v2441
        %v2443 = vpop.f32.mrb[0].mxu0
        %v2444 = vadd.f32 %v2313, %v2443
        %v2445 = vpop.f32.mrb[0].mxu0
        %v2446 = vadd.f32 %v2315, %v2445
        %2447 = vmatprep.mubr.bf16.mxu0 %v383
        %2448 = vmatmul.mubr.bf16.gmra.mrb[0].mxu0 %v382
        %v2449 = vpop.f32.mrb[0].mxu0
        %v2450 = vadd.f32 %v2319, %v2449
        %v2451 = vpop.f32.mrb[0].mxu0
        %v2452 = vadd.f32 %v2321, %v2451
        %v2453 = vpop.f32.mrb[0].mxu0
        %v2454 = vadd.f32 %v2323, %v2453
        %v2455 = vpop.f32.mrb[0].mxu0
        %v2456 = vadd.f32 %v2325, %v2455
        %2457 = vmatprep.mubr.bf16.mxu0 %v387
        %2458 = vmatmul.mubr.bf16.gmra.mrb[0].mxu0 %v386
        %v2459 = vpop.f32.mrb[0].mxu0
        %v2460 = vadd.f32 %v2329, %v2459
        %v2461 = vpop.f32.mrb[0].mxu0
        %v2462 = vadd.f32 %v2331, %v2461
        %v2463 = vpop.f32.mrb[0].mxu0
        %v2464 = vadd.f32 %v2333, %v2463
        %v2465 = vpop.f32.mrb[0].mxu0
        %v2466 = vadd.f32 %v2335, %v2465
        %2467 = vmatprep.mubr.bf16.mxu0 %v391
        %2468 = vmatmul.mubr.bf16.gmra.mrb[0].mxu0 %v390
        %v2469 = vpop.f32.mrb[0].mxu0
        %v2470 = vadd.f32 %v2339, %v2469
        %v2471 = vpop.f32.mrb[0].mxu0
        %v2472 = vadd.f32 %v2341, %v2471
        %v2473 = vpop.f32.mrb[0].mxu0
        %v2474 = vadd.f32 %v2343, %v2473
        %v2475 = vpop.f32.mrb[0].mxu0
        %v2476 = vadd.f32 %v2345, %v2475
        %2477 = vmatprep.mubr.bf16.mxu0 %v395
        %2478 = vmatmul.mubr.bf16.gmra.mrb[0].mxu0 %v394
        %v2479 = vpop.f32.mrb[0].mxu0
        %v2480 = vadd.f32 %v2349, %v2479
        %v2481 = vpop.f32.mrb[0].mxu0
        %v2482 = vadd.f32 %v2351, %v2481
        %v2483 = vpop.f32.mrb[0].mxu0
        %v2484 = vadd.f32 %v2353, %v2483
        %v2485 = vpop.f32.mrb[0].mxu0
        %v2486 = vadd.f32 %v2355, %v2485
        %2487 = vmatprep.mubr.bf16.mxu0 %v399
        %2488 = vmatmul.mubr.bf16.gmra.mrb[0].mxu0 %v398
        %v2489 = vpop.f32.mrb[0].mxu0
        %v2490 = vadd.f32 %v2359, %v2489
        %v2491 = vpop.f32.mrb[0].mxu0
        %v2492 = vadd.f32 %v2361, %v2491
        %v2493 = vpop.f32.mrb[0].mxu0
        %v2494 = vadd.f32 %v2363, %v2493
        %v2495 = vpop.f32.mrb[0].mxu0
        %v2496 = vadd.f32 %v2365, %v2495
        %2497 = vmatprep.mubr.bf16.mxu0 %v403
        %2498 = vmatmul.mubr.bf16.gmra.mrb[0].mxu0 %v402
        %v2499 = vpop.f32.mrb[0].mxu0
        %v2500 = vadd.f32 %v2369, %v2499
        %v2501 = vpop.f32.mrb[0].mxu0
        %v2502 = vadd.f32 %v2371, %v2501
        %v2503 = vpop.f32.mrb[0].mxu0
        %v2504 = vpop.f32.mrb[0].mxu0
        %2505 = vdwg.mxu0
        %2506 = vmatprep.subr.bf16.mxu0 %v1475
        %2507 = vmatpush1.bf16.msra.mxu0 %v1474
        %2508 = vmatprep.subr.bf16.mxu0 %v1483
        %2509 = vmatpush1.bf16.msra.mxu0 %v1482
        %2510 = vmatprep.subr.bf16.mxu0 %v1491
        %2511 = vmatpush1.bf16.msra.mxu0 %v1490
        %2512 = vmatprep.subr.bf16.mxu0 %v1499
        %2513 = vmatpush1.bf16.msra.mxu0 %v1498
        %2514 = vmatprep.subr.bf16.mxu0 %v1507
        %2515 = vmatpush1.bf16.msra.mxu0 %v1506
        %2516 = vmatprep.subr.bf16.mxu0 %v1515
        %2517 = vmatpush1.bf16.msra.mxu0 %v1514
        %2518 = vmatprep.subr.bf16.mxu0 %v1523
        %2519 = vmatpush1.bf16.msra.mxu0 %v1522
        %2520 = vmatprep.subr.bf16.mxu0 %v1531
        %2521 = vmatpush1.bf16.msra.mxu0 %v1530
        %2522 = vmatprep.subr.bf16.mxu0 %v1539
        %2523 = vmatpush1.bf16.msra.mxu0 %v1538
        %2524 = vmatprep.subr.bf16.mxu0 %v1547
        %2525 = vmatpush1.bf16.msra.mxu0 %v1546
        %2526 = vmatprep.subr.bf16.mxu0 %v1555
        %2527 = vmatpush1.bf16.msra.mxu0 %v1554
        %2528 = vmatprep.subr.bf16.mxu0 %v1563
        %2529 = vmatpush1.bf16.msra.mxu0 %v1562
        %2530 = vmatprep.subr.bf16.mxu0 %v1571
        %2531 = vmatpush1.bf16.msra.mxu0 %v1570
        %2532 = vmatprep.subr.bf16.mxu0 %v1579
        %2533 = vmatpush1.bf16.msra.mxu0 %v1578
        %2534 = vmatprep.subr.bf16.mxu0 %v1587
        %2535 = vmatpush1.bf16.msra.mxu0 %v1586
        %2536 = vmatprep.subr.bf16.mxu0 %v1595
        %2537 = vmatpush1.bf16.msra.mxu0 %v1594
        %2538 = vmatprep.mubr.bf16.mxu0 %v365
        %2539 = vmatmul.mubr.bf16.gmra.mrb[0].mxu0 %v364
        %v2540 = vpop.f32.mrb[0].mxu0
        %v2541 = vadd.f32 %v681, %v2540
        %v2542 = vpop.f32.mrb[0].mxu0
        %v2543 = vadd.f32 %v685, %v2542
        %v2544 = vpop.f32.mrb[0].mxu0
        %v2545 = vadd.f32 %v681, %v2544
        %v2546 = vpop.f32.mrb[0].mxu0
        %v2547 = vadd.f32 %v685, %v2546
        %2548 = vmatprep.mubr.bf16.mxu0 %v369
        %2549 = vmatmul.mubr.bf16.gmra.mrb[0].mxu0 %v368
        %v2550 = vpop.f32.mrb[0].mxu0
        %v2551 = vadd.f32 %v681, %v2550
        %v2552 = vpop.f32.mrb[0].mxu0
        %v2553 = vadd.f32 %v685, %v2552
        %v2554 = vpop.f32.mrb[0].mxu0
        %v2555 = vadd.f32 %v681, %v2554
        %v2556 = vpop.f32.mrb[0].mxu0
        %v2557 = vadd.f32 %v685, %v2556
        %2558 = vmatprep.mubr.bf16.mxu0 %v373
        %2559 = vmatmul.mubr.bf16.gmra.mrb[0].mxu0 %v372
        %v2560 = vpop.f32.mrb[0].mxu0
        %v2561 = vadd.f32 %v681, %v2560
        %v2562 = vpop.f32.mrb[0].mxu0
        %v2563 = vadd.f32 %v685, %v2562
        %v2564 = vpop.f32.mrb[0].mxu0
        %v2565 = vadd.f32 %v681, %v2564
        %v2566 = vpop.f32.mrb[0].mxu0
        %v2567 = vadd.f32 %v685, %v2566
        %2568 = vmatprep.mubr.bf16.mxu0 %v377
        %2569 = vmatmul.mubr.bf16.gmra.mrb[0].mxu0 %v376
        %v2570 = vpop.f32.mrb[0].mxu0
        %v2571 = vadd.f32 %v681, %v2570
        %v2572 = vpop.f32.mrb[0].mxu0
        %v2573 = vadd.f32 %v685, %v2572
        %v2574 = vpop.f32.mrb[0].mxu0
        %v2575 = vadd.f32 %v681, %v2574
        %v2576 = vpop.f32.mrb[0].mxu0
        %v2577 = vadd.f32 %v685, %v2576
        %2578 = vmatprep.mubr.bf16.mxu0 %v381
        %2579 = vmatmul.mubr.bf16.gmra.mrb[0].mxu0 %v380
        %v2580 = vpop.f32.mrb[0].mxu0
        %v2581 = vadd.f32 %v681, %v2580
        %v2582 = vpop.f32.mrb[0].mxu0
        %v2583 = vadd.f32 %v685, %v2582
        %v2584 = vpop.f32.mrb[0].mxu0
        %v2585 = vadd.f32 %v681, %v2584
        %v2586 = vpop.f32.mrb[0].mxu0
        %v2587 = vadd.f32 %v685, %v2586
        %2588 = vmatprep.mubr.bf16.mxu0 %v385
        %2589 = vmatmul.mubr.bf16.gmra.mrb[0].mxu0 %v384
        %v2590 = vpop.f32.mrb[0].mxu0
        %v2591 = vadd.f32 %v681, %v2590
        %v2592 = vpop.f32.mrb[0].mxu0
        %v2593 = vadd.f32 %v685, %v2592
        %v2594 = vpop.f32.mrb[0].mxu0
        %v2595 = vadd.f32 %v681, %v2594
        %v2596 = vpop.f32.mrb[0].mxu0
        %v2597 = vadd.f32 %v685, %v2596
        %2598 = vmatprep.mubr.bf16.mxu0 %v389
        %2599 = vmatmul.mubr.bf16.gmra.mrb[0].mxu0 %v388
        %v2600 = vpop.f32.mrb[0].mxu0
        %v2601 = vadd.f32 %v681, %v2600
        %v2602 = vpop.f32.mrb[0].mxu0
        %v2603 = vadd.f32 %v685, %v2602
        %v2604 = vpop.f32.mrb[0].mxu0
        %v2605 = vadd.f32 %v681, %v2604
        %v2606 = vpop.f32.mrb[0].mxu0
        %v2607 = vadd.f32 %v685, %v2606
        %2608 = vmatprep.mubr.bf16.mxu0 %v393
        %2609 = vmatmul.mubr.bf16.gmra.mrb[0].mxu0 %v392
        %v2610 = vpop.f32.mrb[0].mxu0
        %v2611 = vadd.f32 %v681, %v2610
        %v2612 = vpop.f32.mrb[0].mxu0
        %v2613 = vadd.f32 %v685, %v2612
        %v2614 = vpop.f32.mrb[0].mxu0
        %v2615 = vadd.f32 %v681, %v2614
        %v2616 = vpop.f32.mrb[0].mxu0
        %v2617 = vadd.f32 %v685, %v2616
        %2618 = vmatprep.mubr.bf16.mxu0 %v397
        %2619 = vmatmul.mubr.bf16.gmra.mrb[0].mxu0 %v396
        %v2620 = vpop.f32.mrb[0].mxu0
        %v2621 = vadd.f32 %v681, %v2620
        %v2622 = vpop.f32.mrb[0].mxu0
        %v2623 = vadd.f32 %v685, %v2622
        %v2624 = vpop.f32.mrb[0].mxu0
        %v2625 = vadd.f32 %v681, %v2624
        %v2626 = vpop.f32.mrb[0].mxu0
        %v2627 = vadd.f32 %v685, %v2626
        %2628 = vmatprep.mubr.bf16.mxu0 %v401
        %2629 = vmatmul.mubr.bf16.gmra.mrb[0].mxu0 %v400
        %v2630 = vpop.f32.mrb[0].mxu0
        %v2631 = vadd.f32 %v681, %v2630
        %v2632 = vpop.f32.mrb[0].mxu0
        %v2633 = vadd.f32 %v685, %v2632
        %v2634 = vpop.f32.mrb[0].mxu0
        %v2635 = vpop.f32.mrb[0].mxu0
        %2636 = vdwg.mxu0
        %2637 = vmatprep.subr.bf16.mxu0 %v1603
        %2638 = vmatpush1.bf16.msra.mxu0 %v1602
        %2639 = vmatprep.subr.bf16.mxu0 %v1611
        %2640 = vmatpush1.bf16.msra.mxu0 %v1610
        %2641 = vmatprep.subr.bf16.mxu0 %v1619
        %2642 = vmatpush1.bf16.msra.mxu0 %v1618
        %2643 = vmatprep.subr.bf16.mxu0 %v1627
        %2644 = vmatpush1.bf16.msra.mxu0 %v1626
        %2645 = vmatprep.subr.bf16.mxu0 %v1635
        %2646 = vmatpush1.bf16.msra.mxu0 %v1634
        %2647 = vmatprep.subr.bf16.mxu0 %v1643
        %2648 = vmatpush1.bf16.msra.mxu0 %v1642
        %2649 = vmatprep.subr.bf16.mxu0 %v1651
        %2650 = vmatpush1.bf16.msra.mxu0 %v1650
        %2651 = vmatprep.subr.bf16.mxu0 %v1659
        %2652 = vmatpush1.bf16.msra.mxu0 %v1658
        %2653 = vmatprep.subr.bf16.mxu0 %v1667
        %2654 = vmatpush1.bf16.msra.mxu0 %v1666
        %2655 = vmatprep.subr.bf16.mxu0 %v1675
        %2656 = vmatpush1.bf16.msra.mxu0 %v1674
        %2657 = vmatprep.subr.bf16.mxu0 %v1683
        %2658 = vmatpush1.bf16.msra.mxu0 %v1682
        %2659 = vmatprep.subr.bf16.mxu0 %v1691
        %2660 = vmatpush1.bf16.msra.mxu0 %v1690
        %2661 = vmatprep.subr.bf16.mxu0 %v1699
        %2662 = vmatpush1.bf16.msra.mxu0 %v1698
        %2663 = vmatprep.subr.bf16.mxu0 %v1707
        %2664 = vmatpush1.bf16.msra.mxu0 %v1706
        %2665 = vmatprep.subr.bf16.mxu0 %v1715
        %2666 = vmatpush1.bf16.msra.mxu0 %v1714
        %2667 = vmatprep.subr.bf16.mxu0 %v1723
        %2668 = vmatpush1.bf16.msra.mxu0 %v1722
        %2669 = vmatprep.mubr.bf16.mxu0 %v367
        %2670 = vmatmul.mubr.bf16.gmra.mrb[0].mxu0 %v366
        %v2671 = vpop.f32.mrb[0].mxu0
        %v2672 = vadd.f32 %v2541, %v2671
        %v2673 = vpop.f32.mrb[0].mxu0
        %v2674 = vadd.f32 %v2543, %v2673
        %v2675 = vpop.f32.mrb[0].mxu0
        %v2676 = vadd.f32 %v2545, %v2675
        %v2677 = vpop.f32.mrb[0].mxu0
        %v2678 = vadd.f32 %v2547, %v2677
        %2679 = vmatprep.mubr.bf16.mxu0 %v371
        %2680 = vmatmul.mubr.bf16.gmra.mrb[0].mxu0 %v370
        %v2681 = vpop.f32.mrb[0].mxu0
        %v2682 = vadd.f32 %v2551, %v2681
        %v2683 = vpop.f32.mrb[0].mxu0
        %v2684 = vadd.f32 %v2553, %v2683
        %v2685 = vpop.f32.mrb[0].mxu0
        %v2686 = vadd.f32 %v2555, %v2685
        %v2687 = vpop.f32.mrb[0].mxu0
        %v2688 = vadd.f32 %v2557, %v2687
        %2689 = vmatprep.mubr.bf16.mxu0 %v375
        %2690 = vmatmul.mubr.bf16.gmra.mrb[0].mxu0 %v374
        %v2691 = vpop.f32.mrb[0].mxu0
        %v2692 = vadd.f32 %v2561, %v2691
        %v2693 = vpop.f32.mrb[0].mxu0
        %v2694 = vadd.f32 %v2563, %v2693
        %v2695 = vpop.f32.mrb[0].mxu0
        %v2696 = vadd.f32 %v2565, %v2695
        %v2697 = vpop.f32.mrb[0].mxu0
        %v2698 = vadd.f32 %v2567, %v2697
        %2699 = vmatprep.mubr.bf16.mxu0 %v379
        %2700 = vmatmul.mubr.bf16.gmra.mrb[0].mxu0 %v378
        %v2701 = vpop.f32.mrb[0].mxu0
        %v2702 = vadd.f32 %v2571, %v2701
        %v2703 = vpop.f32.mrb[0].mxu0
        %v2704 = vadd.f32 %v2573, %v2703
        %v2705 = vpop.f32.mrb[0].mxu0
        %v2706 = vadd.f32 %v2575, %v2705
        %v2707 = vpop.f32.mrb[0].mxu0
        %v2708 = vadd.f32 %v2577, %v2707
        %2709 = vmatprep.mubr.bf16.mxu0 %v383
        %2710 = vmatmul.mubr.bf16.gmra.mrb[0].mxu0 %v382
        %v2711 = vpop.f32.mrb[0].mxu0
        %v2712 = vadd.f32 %v2581, %v2711
        %v2713 = vpop.f32.mrb[0].mxu0
        %v2714 = vadd.f32 %v2583, %v2713
        %v2715 = vpop.f32.mrb[0].mxu0
        %v2716 = vadd.f32 %v2585, %v2715
        %v2717 = vpop.f32.mrb[0].mxu0
        %v2718 = vadd.f32 %v2587, %v2717
        %2719 = vmatprep.mubr.bf16.mxu0 %v387
        %2720 = vmatmul.mubr.bf16.gmra.mrb[0].mxu0 %v386
        %v2721 = vpop.f32.mrb[0].mxu0
        %v2722 = vadd.f32 %v2591, %v2721
        %v2723 = vpop.f32.mrb[0].mxu0
        %v2724 = vadd.f32 %v2593, %v2723
        %v2725 = vpop.f32.mrb[0].mxu0
        %v2726 = vadd.f32 %v2595, %v2725
        %v2727 = vpop.f32.mrb[0].mxu0
        %v2728 = vadd.f32 %v2597, %v2727
        %2729 = vmatprep.mubr.bf16.mxu0 %v391
        %2730 = vmatmul.mubr.bf16.gmra.mrb[0].mxu0 %v390
        %v2731 = vpop.f32.mrb[0].mxu0
        %v2732 = vadd.f32 %v2601, %v2731
        %v2733 = vpop.f32.mrb[0].mxu0
        %v2734 = vadd.f32 %v2603, %v2733
        %v2735 = vpop.f32.mrb[0].mxu0
        %v2736 = vadd.f32 %v2605, %v2735
        %v2737 = vpop.f32.mrb[0].mxu0
        %v2738 = vadd.f32 %v2607, %v2737
        %2739 = vmatprep.mubr.bf16.mxu0 %v395
        %2740 = vmatmul.mubr.bf16.gmra.mrb[0].mxu0 %v394
        %v2741 = vpop.f32.mrb[0].mxu0
        %v2742 = vadd.f32 %v2611, %v2741
        %v2743 = vpop.f32.mrb[0].mxu0
        %v2744 = vadd.f32 %v2613, %v2743
        %v2745 = vpop.f32.mrb[0].mxu0
        %v2746 = vadd.f32 %v2615, %v2745
        %v2747 = vpop.f32.mrb[0].mxu0
        %v2748 = vadd.f32 %v2617, %v2747
        %2749 = vmatprep.mubr.bf16.mxu0 %v399
        %2750 = vmatmul.mubr.bf16.gmra.mrb[0].mxu0 %v398
        %v2751 = vpop.f32.mrb[0].mxu0
        %v2752 = vadd.f32 %v2621, %v2751
        %v2753 = vpop.f32.mrb[0].mxu0
        %v2754 = vadd.f32 %v2623, %v2753
        %v2755 = vpop.f32.mrb[0].mxu0
        %v2756 = vadd.f32 %v2625, %v2755
        %v2757 = vpop.f32.mrb[0].mxu0
        %v2758 = vadd.f32 %v2627, %v2757
        %2759 = vmatprep.mubr.bf16.mxu0 %v403
        %2760 = vmatmul.mubr.bf16.gmra.mrb[0].mxu0 %v402
        %v2761 = vpop.f32.mrb[0].mxu0
        %v2762 = vadd.f32 %v2631, %v2761
        %v2763 = vpop.f32.mrb[0].mxu0
        %v2764 = vadd.f32 %v2633, %v2763
        %v2765 = vpop.f32.mrb[0].mxu0
        %v2766 = vpop.f32.mrb[0].mxu0
        %2767 = vdwg.mxu0
        %2768 = vmatprep.subr.bf16.mxu0 %v1477
        %2769 = vmatpush1.bf16.msra.mxu0 %v1476
        %2770 = vmatprep.subr.bf16.mxu0 %v1485
        %2771 = vmatpush1.bf16.msra.mxu0 %v1484
        %2772 = vmatprep.subr.bf16.mxu0 %v1493
        %2773 = vmatpush1.bf16.msra.mxu0 %v1492
        %2774 = vmatprep.subr.bf16.mxu0 %v1501
        %2775 = vmatpush1.bf16.msra.mxu0 %v1500
        %2776 = vmatprep.subr.bf16.mxu0 %v1509
        %2777 = vmatpush1.bf16.msra.mxu0 %v1508
        %2778 = vmatprep.subr.bf16.mxu0 %v1517
        %2779 = vmatpush1.bf16.msra.mxu0 %v1516
        %2780 = vmatprep.subr.bf16.mxu0 %v1525
        %2781 = vmatpush1.bf16.msra.mxu0 %v1524
        %2782 = vmatprep.subr.bf16.mxu0 %v1533
        %2783 = vmatpush1.bf16.msra.mxu0 %v1532
        %2784 = vmatprep.subr.bf16.mxu0 %v1541
        %2785 = vmatpush1.bf16.msra.mxu0 %v1540
        %2786 = vmatprep.subr.bf16.mxu0 %v1549
        %2787 = vmatpush1.bf16.msra.mxu0 %v1548
        %2788 = vmatprep.subr.bf16.mxu0 %v1557
        %2789 = vmatpush1.bf16.msra.mxu0 %v1556
        %2790 = vmatprep.subr.bf16.mxu0 %v1565
        %2791 = vmatpush1.bf16.msra.mxu0 %v1564
        %2792 = vmatprep.subr.bf16.mxu0 %v1573
        %2793 = vmatpush1.bf16.msra.mxu0 %v1572
        %2794 = vmatprep.subr.bf16.mxu0 %v1581
        %2795 = vmatpush1.bf16.msra.mxu0 %v1580
        %2796 = vmatprep.subr.bf16.mxu0 %v1589
        %2797 = vmatpush1.bf16.msra.mxu0 %v1588
        %2798 = vmatprep.subr.bf16.mxu0 %v1597
        %2799 = vmatpush1.bf16.msra.mxu0 %v1596
        %2800 = vmatprep.mubr.bf16.mxu0 %v365
        %2801 = vmatmul.mubr.bf16.gmra.mrb[0].mxu0 %v364
        %v2802 = vpop.f32.mrb[0].mxu0
        %v2803 = vadd.f32 %v689, %v2802
        %v2804 = vpop.f32.mrb[0].mxu0
        %v2805 = vadd.f32 %v693, %v2804
        %v2806 = vpop.f32.mrb[0].mxu0
        %v2807 = vadd.f32 %v689, %v2806
        %v2808 = vpop.f32.mrb[0].mxu0
        %v2809 = vadd.f32 %v693, %v2808
        %2810 = vmatprep.mubr.bf16.mxu0 %v369
        %2811 = vmatmul.mubr.bf16.gmra.mrb[0].mxu0 %v368
        %v2812 = vpop.f32.mrb[0].mxu0
        %v2813 = vadd.f32 %v689, %v2812
        %v2814 = vpop.f32.mrb[0].mxu0
        %v2815 = vadd.f32 %v693, %v2814
        %v2816 = vpop.f32.mrb[0].mxu0
        %v2817 = vadd.f32 %v689, %v2816
        %v2818 = vpop.f32.mrb[0].mxu0
        %v2819 = vadd.f32 %v693, %v2818
        %2820 = vmatprep.mubr.bf16.mxu0 %v373
        %2821 = vmatmul.mubr.bf16.gmra.mrb[0].mxu0 %v372
        %v2822 = vpop.f32.mrb[0].mxu0
        %v2823 = vadd.f32 %v689, %v2822
        %v2824 = vpop.f32.mrb[0].mxu0
        %v2825 = vadd.f32 %v693, %v2824
        %v2826 = vpop.f32.mrb[0].mxu0
        %v2827 = vadd.f32 %v689, %v2826
        %v2828 = vpop.f32.mrb[0].mxu0
        %v2829 = vadd.f32 %v693, %v2828
        %2830 = vmatprep.mubr.bf16.mxu0 %v377
        %2831 = vmatmul.mubr.bf16.gmra.mrb[0].mxu0 %v376
        %v2832 = vpop.f32.mrb[0].mxu0
        %v2833 = vadd.f32 %v689, %v2832
        %v2834 = vpop.f32.mrb[0].mxu0
        %v2835 = vadd.f32 %v693, %v2834
        %v2836 = vpop.f32.mrb[0].mxu0
        %v2837 = vadd.f32 %v689, %v2836
        %v2838 = vpop.f32.mrb[0].mxu0
        %v2839 = vadd.f32 %v693, %v2838
        %2840 = vmatprep.mubr.bf16.mxu0 %v381
        %2841 = vmatmul.mubr.bf16.gmra.mrb[0].mxu0 %v380
        %v2842 = vpop.f32.mrb[0].mxu0
        %v2843 = vadd.f32 %v689, %v2842
        %v2844 = vpop.f32.mrb[0].mxu0
        %v2845 = vadd.f32 %v693, %v2844
        %v2846 = vpop.f32.mrb[0].mxu0
        %v2847 = vadd.f32 %v689, %v2846
        %v2848 = vpop.f32.mrb[0].mxu0
        %v2849 = vadd.f32 %v693, %v2848
        %2850 = vmatprep.mubr.bf16.mxu0 %v385
        %2851 = vmatmul.mubr.bf16.gmra.mrb[0].mxu0 %v384
        %v2852 = vpop.f32.mrb[0].mxu0
        %v2853 = vadd.f32 %v689, %v2852
        %v2854 = vpop.f32.mrb[0].mxu0
        %v2855 = vadd.f32 %v693, %v2854
        %v2856 = vpop.f32.mrb[0].mxu0
        %v2857 = vadd.f32 %v689, %v2856
        %v2858 = vpop.f32.mrb[0].mxu0
        %v2859 = vadd.f32 %v693, %v2858
        %2860 = vmatprep.mubr.bf16.mxu0 %v389
        %2861 = vmatmul.mubr.bf16.gmra.mrb[0].mxu0 %v388
        %v2862 = vpop.f32.mrb[0].mxu0
        %v2863 = vadd.f32 %v689, %v2862
        %v2864 = vpop.f32.mrb[0].mxu0
        %v2865 = vadd.f32 %v693, %v2864
        %v2866 = vpop.f32.mrb[0].mxu0
        %v2867 = vadd.f32 %v689, %v2866
        %v2868 = vpop.f32.mrb[0].mxu0
        %v2869 = vadd.f32 %v693, %v2868
        %2870 = vmatprep.mubr.bf16.mxu0 %v393
        %2871 = vmatmul.mubr.bf16.gmra.mrb[0].mxu0 %v392
        %v2872 = vpop.f32.mrb[0].mxu0
        %v2873 = vadd.f32 %v689, %v2872
        %v2874 = vpop.f32.mrb[0].mxu0
        %v2875 = vadd.f32 %v693, %v2874
        %v2876 = vpop.f32.mrb[0].mxu0
        %v2877 = vadd.f32 %v689, %v2876
        %v2878 = vpop.f32.mrb[0].mxu0
        %v2879 = vadd.f32 %v693, %v2878
        %2880 = vmatprep.mubr.bf16.mxu0 %v397
        %2881 = vmatmul.mubr.bf16.gmra.mrb[0].mxu0 %v396
        %v2882 = vpop.f32.mrb[0].mxu0
        %v2883 = vadd.f32 %v689, %v2882
        %v2884 = vpop.f32.mrb[0].mxu0
        %v2885 = vadd.f32 %v693, %v2884
        %v2886 = vpop.f32.mrb[0].mxu0
        %v2887 = vadd.f32 %v689, %v2886
        %v2888 = vpop.f32.mrb[0].mxu0
        %v2889 = vadd.f32 %v693, %v2888
        %2890 = vmatprep.mubr.bf16.mxu0 %v401
        %2891 = vmatmul.mubr.bf16.gmra.mrb[0].mxu0 %v400
        %v2892 = vpop.f32.mrb[0].mxu0
        %v2893 = vadd.f32 %v689, %v2892
        %v2894 = vpop.f32.mrb[0].mxu0
        %v2895 = vadd.f32 %v693, %v2894
        %v2896 = vpop.f32.mrb[0].mxu0
        %v2897 = vpop.f32.mrb[0].mxu0
        %2898 = vdwg.mxu0
        %2899 = vmatprep.subr.bf16.mxu0 %v1605
        %2900 = vmatpush1.bf16.msra.mxu0 %v1604
        %2901 = vmatprep.subr.bf16.mxu0 %v1613
        %2902 = vmatpush1.bf16.msra.mxu0 %v1612
        %2903 = vmatprep.subr.bf16.mxu0 %v1621
        %2904 = vmatpush1.bf16.msra.mxu0 %v1620
        %2905 = vmatprep.subr.bf16.mxu0 %v1629
        %2906 = vmatpush1.bf16.msra.mxu0 %v1628
        %2907 = vmatprep.subr.bf16.mxu0 %v1637
        %2908 = vmatpush1.bf16.msra.mxu0 %v1636
        %2909 = vmatprep.subr.bf16.mxu0 %v1645
        %2910 = vmatpush1.bf16.msra.mxu0 %v1644
        %2911 = vmatprep.subr.bf16.mxu0 %v1653
        %2912 = vmatpush1.bf16.msra.mxu0 %v1652
        %2913 = vmatprep.subr.bf16.mxu0 %v1661
        %2914 = vmatpush1.bf16.msra.mxu0 %v1660
        %2915 = vmatprep.subr.bf16.mxu0 %v1669
        %2916 = vmatpush1.bf16.msra.mxu0 %v1668
        %2917 = vmatprep.subr.bf16.mxu0 %v1677
        %2918 = vmatpush1.bf16.msra.mxu0 %v1676
        %2919 = vmatprep.subr.bf16.mxu0 %v1685
        %2920 = vmatpush1.bf16.msra.mxu0 %v1684
        %2921 = vmatprep.subr.bf16.mxu0 %v1693
        %2922 = vmatpush1.bf16.msra.mxu0 %v1692
        %2923 = vmatprep.subr.bf16.mxu0 %v1701
        %2924 = vmatpush1.bf16.msra.mxu0 %v1700
        %2925 = vmatprep.subr.bf16.mxu0 %v1709
        %2926 = vmatpush1.bf16.msra.mxu0 %v1708
        %2927 = vmatprep.subr.bf16.mxu0 %v1717
        %2928 = vmatpush1.bf16.msra.mxu0 %v1716
        %2929 = vmatprep.subr.bf16.mxu0 %v1725
        %2930 = vmatpush1.bf16.msra.mxu0 %v1724
        %2931 = vmatprep.mubr.bf16.mxu0 %v367
        %2932 = vmatmul.mubr.bf16.gmra.mrb[0].mxu0 %v366
        %v2933 = vpop.f32.mrb[0].mxu0
        %v2934 = vadd.f32 %v2803, %v2933
        %v2935 = vpop.f32.mrb[0].mxu0
        %v2936 = vadd.f32 %v2805, %v2935
        %v2937 = vpop.f32.mrb[0].mxu0
        %v2938 = vadd.f32 %v2807, %v2937
        %v2939 = vpop.f32.mrb[0].mxu0
        %v2940 = vadd.f32 %v2809, %v2939
        %2941 = vmatprep.mubr.bf16.mxu0 %v371
        %2942 = vmatmul.mubr.bf16.gmra.mrb[0].mxu0 %v370
        %v2943 = vpop.f32.mrb[0].mxu0
        %v2944 = vadd.f32 %v2813, %v2943
        %v2945 = vpop.f32.mrb[0].mxu0
        %v2946 = vadd.f32 %v2815, %v2945
        %v2947 = vpop.f32.mrb[0].mxu0
        %v2948 = vadd.f32 %v2817, %v2947
        %v2949 = vpop.f32.mrb[0].mxu0
        %v2950 = vadd.f32 %v2819, %v2949
        %2951 = vmatprep.mubr.bf16.mxu0 %v375
        %2952 = vmatmul.mubr.bf16.gmra.mrb[0].mxu0 %v374
        %v2953 = vpop.f32.mrb[0].mxu0
        %v2954 = vadd.f32 %v2823, %v2953
        %v2955 = vpop.f32.mrb[0].mxu0
        %v2956 = vadd.f32 %v2825, %v2955
        %v2957 = vpop.f32.mrb[0].mxu0
        %v2958 = vadd.f32 %v2827, %v2957
        %v2959 = vpop.f32.mrb[0].mxu0
        %v2960 = vadd.f32 %v2829, %v2959
        %2961 = vmatprep.mubr.bf16.mxu0 %v379
        %2962 = vmatmul.mubr.bf16.gmra.mrb[0].mxu0 %v378
        %v2963 = vpop.f32.mrb[0].mxu0
        %v2964 = vadd.f32 %v2833, %v2963
        %v2965 = vpop.f32.mrb[0].mxu0
        %v2966 = vadd.f32 %v2835, %v2965
        %v2967 = vpop.f32.mrb[0].mxu0
        %v2968 = vadd.f32 %v2837, %v2967
        %v2969 = vpop.f32.mrb[0].mxu0
        %v2970 = vadd.f32 %v2839, %v2969
        %2971 = vmatprep.mubr.bf16.mxu0 %v383
        %2972 = vmatmul.mubr.bf16.gmra.mrb[0].mxu0 %v382
        %v2973 = vpop.f32.mrb[0].mxu0
        %v2974 = vadd.f32 %v2843, %v2973
        %v2975 = vpop.f32.mrb[0].mxu0
        %v2976 = vadd.f32 %v2845, %v2975
        %v2977 = vpop.f32.mrb[0].mxu0
        %v2978 = vadd.f32 %v2847, %v2977
        %v2979 = vpop.f32.mrb[0].mxu0
        %v2980 = vadd.f32 %v2849, %v2979
        %2981 = vmatprep.mubr.bf16.mxu0 %v387
        %2982 = vmatmul.mubr.bf16.gmra.mrb[0].mxu0 %v386
        %v2983 = vpop.f32.mrb[0].mxu0
        %v2984 = vadd.f32 %v2853, %v2983
        %v2985 = vpop.f32.mrb[0].mxu0
        %v2986 = vadd.f32 %v2855, %v2985
        %v2987 = vpop.f32.mrb[0].mxu0
        %v2988 = vadd.f32 %v2857, %v2987
        %v2989 = vpop.f32.mrb[0].mxu0
        %v2990 = vadd.f32 %v2859, %v2989
        %2991 = vmatprep.mubr.bf16.mxu0 %v391
        %2992 = vmatmul.mubr.bf16.gmra.mrb[0].mxu0 %v390
        %v2993 = vpop.f32.mrb[0].mxu0
        %v2994 = vadd.f32 %v2863, %v2993
        %v2995 = vpop.f32.mrb[0].mxu0
        %v2996 = vadd.f32 %v2865, %v2995
        %v2997 = vpop.f32.mrb[0].mxu0
        %v2998 = vadd.f32 %v2867, %v2997
        %v2999 = vpop.f32.mrb[0].mxu0
        %v3000 = vadd.f32 %v2869, %v2999
        %3001 = vmatprep.mubr.bf16.mxu0 %v395
        %3002 = vmatmul.mubr.bf16.gmra.mrb[0].mxu0 %v394
        %v3003 = vpop.f32.mrb[0].mxu0
        %v3004 = vadd.f32 %v2873, %v3003
        %v3005 = vpop.f32.mrb[0].mxu0
        %v3006 = vadd.f32 %v2875, %v3005
        %v3007 = vpop.f32.mrb[0].mxu0
        %v3008 = vadd.f32 %v2877, %v3007
        %v3009 = vpop.f32.mrb[0].mxu0
        %v3010 = vadd.f32 %v2879, %v3009
        %3011 = vmatprep.mubr.bf16.mxu0 %v399
        %3012 = vmatmul.mubr.bf16.gmra.mrb[0].mxu0 %v398
        %v3013 = vpop.f32.mrb[0].mxu0
        %v3014 = vadd.f32 %v2883, %v3013
        %v3015 = vpop.f32.mrb[0].mxu0
        %v3016 = vadd.f32 %v2885, %v3015
        %v3017 = vpop.f32.mrb[0].mxu0
        %v3018 = vadd.f32 %v2887, %v3017
        %v3019 = vpop.f32.mrb[0].mxu0
        %v3020 = vadd.f32 %v2889, %v3019
        %3021 = vmatprep.mubr.bf16.mxu0 %v403
        %3022 = vmatmul.mubr.bf16.gmra.mrb[0].mxu0 %v402
        %v3023 = vpop.f32.mrb[0].mxu0
        %v3024 = vadd.f32 %v2893, %v3023
        %v3025 = vpop.f32.mrb[0].mxu0
        %v3026 = vadd.f32 %v2895, %v3025
        %v3027 = vpop.f32.mrb[0].mxu0
        %v3028 = vpop.f32.mrb[0].mxu0
        %3029 = vdwg.mxu0
        %v3030 = vmax.f32 %v2148, 0.0
        %v3031 = vmax.f32 %v2150, 0.0
        %v3032 = vmax.f32 %v2410, 0.0
        %v3033 = vmax.f32 %v2412, 0.0
        %v3034 = vmax.f32 %v2672, 0.0
        %v3035 = vmax.f32 %v2674, 0.0
        %v3036 = vmax.f32 %v2934, 0.0
        %v3037 = vmax.f32 %v2936, 0.0
        %v3038 = vmax.f32 %v2152, 0.0
        %v3039 = vmax.f32 %v2154, 0.0
        %v3040 = vmax.f32 %v2414, 0.0
        %v3041 = vmax.f32 %v2416, 0.0
        %v3042 = vmax.f32 %v2676, 0.0
        %v3043 = vmax.f32 %v2678, 0.0
        %v3044 = vmax.f32 %v2938, 0.0
        %v3045 = vmax.f32 %v2940, 0.0
        %v3046 = vmax.f32 %v2158, 0.0
        %v3047 = vmax.f32 %v2160, 0.0
        %v3048 = vmax.f32 %v2420, 0.0
        %v3049 = vmax.f32 %v2422, 0.0
        %v3050 = vmax.f32 %v2682, 0.0
        %v3051 = vmax.f32 %v2684, 0.0
        %v3052 = vmax.f32 %v2944, 0.0
        %v3053 = vmax.f32 %v2946, 0.0
        %v3054 = vmax.f32 %v2162, 0.0
        %v3055 = vmax.f32 %v2164, 0.0
        %v3056 = vmax.f32 %v2424, 0.0
        %v3057 = vmax.f32 %v2426, 0.0
        %v3058 = vmax.f32 %v2686, 0.0
        %v3059 = vmax.f32 %v2688, 0.0
        %v3060 = vmax.f32 %v2948, 0.0
        %v3061 = vmax.f32 %v2950, 0.0
        %v3062 = vmax.f32 %v2168, 0.0
        %v3063 = vmax.f32 %v2170, 0.0
        %v3064 = vmax.f32 %v2430, 0.0
        %v3065 = vmax.f32 %v2432, 0.0
        %v3066 = vmax.f32 %v2692, 0.0
        %v3067 = vmax.f32 %v2694, 0.0
        %v3068 = vmax.f32 %v2954, 0.0
        %v3069 = vmax.f32 %v2956, 0.0
        %v3070 = vmax.f32 %v2172, 0.0
        %v3071 = vmax.f32 %v2174, 0.0
        %v3072 = vmax.f32 %v2434, 0.0
        %v3073 = vmax.f32 %v2436, 0.0
        %v3074 = vmax.f32 %v2696, 0.0
        %v3075 = vmax.f32 %v2698, 0.0
        %v3076 = vmax.f32 %v2958, 0.0
        %v3077 = vmax.f32 %v2960, 0.0
        %v3078 = vmax.f32 %v2178, 0.0
        %v3079 = vmax.f32 %v2180, 0.0
        %v3080 = vmax.f32 %v2440, 0.0
        %v3081 = vmax.f32 %v2442, 0.0
        %v3082 = vmax.f32 %v2702, 0.0
        %v3083 = vmax.f32 %v2704, 0.0
        %v3084 = vmax.f32 %v2964, 0.0
        %v3085 = vmax.f32 %v2966, 0.0
        %v3086 = vmax.f32 %v2182, 0.0
        %v3087 = vmax.f32 %v2184, 0.0
        %v3088 = vmax.f32 %v2444, 0.0
        %v3089 = vmax.f32 %v2446, 0.0
        %v3090 = vmax.f32 %v2706, 0.0
        %v3091 = vmax.f32 %v2708, 0.0
        %v3092 = vmax.f32 %v2968, 0.0
        %v3093 = vmax.f32 %v2970, 0.0
        %v3094 = vmax.f32 %v2188, 0.0
        %v3095 = vmax.f32 %v2190, 0.0
        %v3096 = vmax.f32 %v2450, 0.0
        %v3097 = vmax.f32 %v2452, 0.0
        %v3098 = vmax.f32 %v2712, 0.0
        %v3099 = vmax.f32 %v2714, 0.0
        %v3100 = vmax.f32 %v2974, 0.0
        %v3101 = vmax.f32 %v2976, 0.0
        %v3102 = vmax.f32 %v2192, 0.0
        %v3103 = vmax.f32 %v2194, 0.0
        %v3104 = vmax.f32 %v2454, 0.0
        %v3105 = vmax.f32 %v2456, 0.0
        %v3106 = vmax.f32 %v2716, 0.0
        %v3107 = vmax.f32 %v2718, 0.0
        %v3108 = vmax.f32 %v2978, 0.0
        %v3109 = vmax.f32 %v2980, 0.0
        %v3110 = vmax.f32 %v2198, 0.0
        %v3111 = vmax.f32 %v2200, 0.0
        %v3112 = vmax.f32 %v2460, 0.0
        %v3113 = vmax.f32 %v2462, 0.0
        %v3114 = vmax.f32 %v2722, 0.0
        %v3115 = vmax.f32 %v2724, 0.0
        %v3116 = vmax.f32 %v2984, 0.0
        %v3117 = vmax.f32 %v2986, 0.0
        %v3118 = vmax.f32 %v2202, 0.0
        %v3119 = vmax.f32 %v2204, 0.0
        %v3120 = vmax.f32 %v2464, 0.0
        %v3121 = vmax.f32 %v2466, 0.0
        %v3122 = vmax.f32 %v2726, 0.0
        %v3123 = vmax.f32 %v2728, 0.0
        %v3124 = vmax.f32 %v2988, 0.0
        %v3125 = vmax.f32 %v2990, 0.0
        %v3126 = vmax.f32 %v2208, 0.0
        %v3127 = vmax.f32 %v2210, 0.0
        %v3128 = vmax.f32 %v2470, 0.0
        %v3129 = vmax.f32 %v2472, 0.0
        %v3130 = vmax.f32 %v2732, 0.0
        %v3131 = vmax.f32 %v2734, 0.0
        %v3132 = vmax.f32 %v2994, 0.0
        %v3133 = vmax.f32 %v2996, 0.0
        %v3134 = vmax.f32 %v2212, 0.0
        %v3135 = vmax.f32 %v2214, 0.0
        %v3136 = vmax.f32 %v2474, 0.0
        %v3137 = vmax.f32 %v2476, 0.0
        %v3138 = vmax.f32 %v2736, 0.0
        %v3139 = vmax.f32 %v2738, 0.0
        %v3140 = vmax.f32 %v2998, 0.0
        %v3141 = vmax.f32 %v3000, 0.0
        %v3142 = vmax.f32 %v2218, 0.0
        %v3143 = vmax.f32 %v2220, 0.0
        %v3144 = vmax.f32 %v2480, 0.0
        %v3145 = vmax.f32 %v2482, 0.0
        %v3146 = vmax.f32 %v2742, 0.0
        %v3147 = vmax.f32 %v2744, 0.0
        %v3148 = vmax.f32 %v3004, 0.0
        %v3149 = vmax.f32 %v3006, 0.0
        %v3150 = vmax.f32 %v2222, 0.0
        %v3151 = vmax.f32 %v2224, 0.0
        %v3152 = vmax.f32 %v2484, 0.0
        %v3153 = vmax.f32 %v2486, 0.0
        %v3154 = vmax.f32 %v2746, 0.0
        %v3155 = vmax.f32 %v2748, 0.0
        %v3156 = vmax.f32 %v3008, 0.0
        %v3157 = vmax.f32 %v3010, 0.0
        %v3158 = vmax.f32 %v2228, 0.0
        %v3159 = vmax.f32 %v2230, 0.0
        %v3160 = vmax.f32 %v2490, 0.0
        %v3161 = vmax.f32 %v2492, 0.0
        %v3162 = vmax.f32 %v2752, 0.0
        %v3163 = vmax.f32 %v2754, 0.0
        %v3164 = vmax.f32 %v3014, 0.0
        %v3165 = vmax.f32 %v3016, 0.0
        %v3166 = vmax.f32 %v2232, 0.0
        %v3167 = vmax.f32 %v2234, 0.0
        %v3168 = vmax.f32 %v2494, 0.0
        %v3169 = vmax.f32 %v2496, 0.0
        %v3170 = vmax.f32 %v2756, 0.0
        %v3171 = vmax.f32 %v2758, 0.0
        %v3172 = vmax.f32 %v3018, 0.0
        %v3173 = vmax.f32 %v3020, 0.0
        %v3174 = vmax.f32 %v2238, 0.0
        %v3175 = vmax.f32 %v2240, 0.0
        %v3176 = vmax.f32 %v2500, 0.0
        %v3177 = vmax.f32 %v2502, 0.0
        %v3178 = vmax.f32 %v2762, 0.0
        %v3179 = vmax.f32 %v2764, 0.0
        %v3180 = vmax.f32 %v3024, 0.0
        %v3181 = vmax.f32 %v3026, 0.0
        %v3182 = vpack.c.bf16 %v3038, %v3030
        %v3183 = vpack.c.bf16 %v3039, %v3031
        %v3184 = vpack.c.bf16 %v3040, %v3032
        %v3185 = vpack.c.bf16 %v3041, %v3033
        %v3186 = vpack.c.bf16 %v3042, %v3034
        %v3187 = vpack.c.bf16 %v3043, %v3035
        %v3188 = vpack.c.bf16 %v3044, %v3036
        %v3189 = vpack.c.bf16 %v3045, %v3037
        %v3190 = vpack.c.bf16 %v3054, %v3046
        %v3191 = vpack.c.bf16 %v3055, %v3047
        %v3192 = vpack.c.bf16 %v3056, %v3048
        %v3193 = vpack.c.bf16 %v3057, %v3049
        %v3194 = vpack.c.bf16 %v3058, %v3050
        %v3195 = vpack.c.bf16 %v3059, %v3051
        %v3196 = vpack.c.bf16 %v3060, %v3052
        %v3197 = vpack.c.bf16 %v3061, %v3053
        %v3198 = vpack.c.bf16 %v3070, %v3062
        %v3199 = vpack.c.bf16 %v3071, %v3063
        %v3200 = vpack.c.bf16 %v3072, %v3064
        %v3201 = vpack.c.bf16 %v3073, %v3065
        %v3202 = vpack.c.bf16 %v3074, %v3066
        %v3203 = vpack.c.bf16 %v3075, %v3067
        %v3204 = vpack.c.bf16 %v3076, %v3068
        %v3205 = vpack.c.bf16 %v3077, %v3069
        %v3206 = vpack.c.bf16 %v3086, %v3078
        %v3207 = vpack.c.bf16 %v3087, %v3079
        %v3208 = vpack.c.bf16 %v3088, %v3080
        %v3209 = vpack.c.bf16 %v3089, %v3081
        %v3210 = vpack.c.bf16 %v3090, %v3082
        %v3211 = vpack.c.bf16 %v3091, %v3083
        %v3212 = vpack.c.bf16 %v3092, %v3084
        %v3213 = vpack.c.bf16 %v3093, %v3085
        %v3214 = vpack.c.bf16 %v3102, %v3094
        %v3215 = vpack.c.bf16 %v3103, %v3095
        %v3216 = vpack.c.bf16 %v3104, %v3096
        %v3217 = vpack.c.bf16 %v3105, %v3097
        %v3218 = vpack.c.bf16 %v3106, %v3098
        %v3219 = vpack.c.bf16 %v3107, %v3099
        %v3220 = vpack.c.bf16 %v3108, %v3100
        %v3221 = vpack.c.bf16 %v3109, %v3101
        %v3222 = vpack.c.bf16 %v3118, %v3110
        %v3223 = vpack.c.bf16 %v3119, %v3111
        %v3224 = vpack.c.bf16 %v3120, %v3112
        %v3225 = vpack.c.bf16 %v3121, %v3113
        %v3226 = vpack.c.bf16 %v3122, %v3114
        %v3227 = vpack.c.bf16 %v3123, %v3115
        %v3228 = vpack.c.bf16 %v3124, %v3116
        %v3229 = vpack.c.bf16 %v3125, %v3117
        %v3230 = vpack.c.bf16 %v3134, %v3126
        %v3231 = vpack.c.bf16 %v3135, %v3127
        %v3232 = vpack.c.bf16 %v3136, %v3128
        %v3233 = vpack.c.bf16 %v3137, %v3129
        %v3234 = vpack.c.bf16 %v3138, %v3130
        %v3235 = vpack.c.bf16 %v3139, %v3131
        %v3236 = vpack.c.bf16 %v3140, %v3132
        %v3237 = vpack.c.bf16 %v3141, %v3133
        %v3238 = vpack.c.bf16 %v3150, %v3142
        %v3239 = vpack.c.bf16 %v3151, %v3143
        %v3240 = vpack.c.bf16 %v3152, %v3144
        %v3241 = vpack.c.bf16 %v3153, %v3145
        %v3242 = vpack.c.bf16 %v3154, %v3146
        %v3243 = vpack.c.bf16 %v3155, %v3147
        %v3244 = vpack.c.bf16 %v3156, %v3148
        %v3245 = vpack.c.bf16 %v3157, %v3149
        %v3246 = vpack.c.bf16 %v3166, %v3158
        %v3247 = vpack.c.bf16 %v3167, %v3159
        %v3248 = vpack.c.bf16 %v3168, %v3160
        %v3249 = vpack.c.bf16 %v3169, %v3161
        %v3250 = vpack.c.bf16 %v3170, %v3162
        %v3251 = vpack.c.bf16 %v3171, %v3163
        %v3252 = vpack.c.bf16 %v3172, %v3164
        %v3253 = vpack.c.bf16 %v3173, %v3165
        %v3254 = vpack.c.bf16 %v3174, %v3174
        %v3255 = vpack.c.bf16 %v3175, %v3175
        %v3256 = vpack.c.bf16 %v3176, %v3176
        %v3257 = vpack.c.bf16 %v3177, %v3177
        %v3258 = vpack.c.bf16 %v3178, %v3178
        %v3259 = vpack.c.bf16 %v3179, %v3179
        %v3260 = vpack.c.bf16 %v3180, %v3180
        %v3261 = vpack.c.bf16 %v3181, %v3181
        %v3262 = vld [vmem:[#allocation8] sm:$0xff]
        %v3263 = vld [vmem:[#allocation8 + $0x8] sm:$0xff]
        %v3264 = vld [vmem:[#allocation8 + $0x10] sm:$0xff]
        %v3265 = vld [vmem:[#allocation8 + $0x18] sm:$0xff]
        %v3266 = vld [vmem:[#allocation8 + $0x20] sm:$0xff]
        %v3267 = vld [vmem:[#allocation8 + $0x28] sm:$0xff]
        %v3268 = vld [vmem:[#allocation8 + $0x30] sm:$0xff]
        %v3269 = vld [vmem:[#allocation8 + $0x38] sm:$0xff]
        %v3270 = vld [vmem:[#allocation8 + $0x40] sm:$0xff]
        %v3271 = vld [vmem:[#allocation8 + $0x48] sm:$0xff]
        %v3272 = vld [vmem:[#allocation8 + $0x50] sm:$0xff]
        %v3273 = vld [vmem:[#allocation8 + $0x58] sm:$0xff]
        %v3274 = vld [vmem:[#allocation8 + $0x60] sm:$0xff]
        %v3275 = vld [vmem:[#allocation8 + $0x68] sm:$0xff]
        %v3276 = vld [vmem:[#allocation8 + $0x70] sm:$0xff]
        %v3277 = vld [vmem:[#allocation8 + $0x78] sm:$0xff]
        %v3278 = vld [vmem:[#allocation8 + $0x80] sm:$0xff]
        %v3279 = vld [vmem:[#allocation8 + $0x88] sm:$0xff]
        %v3280 = vld [vmem:[#allocation8 + $0x90] sm:$0xff]
        %v3281 = vld [vmem:[#allocation8 + $0x98] sm:$0xff]
        %v3282 = vld [vmem:[#allocation8 + $0xa0] sm:$0xff]
        %v3283 = vld [vmem:[#allocation8 + $0xa8] sm:$0xff]
        %v3284 = vld [vmem:[#allocation8 + $0xb0] sm:$0xff]
        %v3285 = vld [vmem:[#allocation8 + $0xb8] sm:$0xff]
        %v3286 = vld [vmem:[#allocation8 + $0xc0] sm:$0xff]
        %v3287 = vld [vmem:[#allocation8 + $0xc8] sm:$0xff]
        %v3288 = vld [vmem:[#allocation8 + $0xd0] sm:$0xff]
        %v3289 = vld [vmem:[#allocation8 + $0xd8] sm:$0xff]
        %v3290 = vld [vmem:[#allocation8 + $0xe0] sm:$0xff]
        %v3291 = vld [vmem:[#allocation8 + $0xe8] sm:$0xff]
        %v3292 = vld [vmem:[#allocation8 + $0xf0] sm:$0xff]
        %v3293 = vld [vmem:[#allocation8 + $0xf8] sm:$0xff]
        %v3294 = vld [vmem:[#allocation8 + $0x100] sm:$0xff]
        %v3295 = vld [vmem:[#allocation8 + $0x108] sm:$0xff]
        %v3296 = vld [vmem:[#allocation8 + $0x110] sm:$0xff]
        %v3297 = vld [vmem:[#allocation8 + $0x118] sm:$0xff]
        %v3298 = vld [vmem:[#allocation8 + $0x120] sm:$0xff]
        %v3299 = vld [vmem:[#allocation8 + $0x128] sm:$0xff]
        %v3300 = vld [vmem:[#allocation8 + $0x130] sm:$0xff]
        %v3301 = vld [vmem:[#allocation8 + $0x138] sm:$0xff]
        %v3302 = vld [vmem:[#allocation8 + $0x140] sm:$0xff]
        %v3303 = vld [vmem:[#allocation8 + $0x148] sm:$0xff]
        %v3304 = vld [vmem:[#allocation8 + $0x150] sm:$0xff]
        %v3305 = vld [vmem:[#allocation8 + $0x158] sm:$0xff]
        %v3306 = vld [vmem:[#allocation8 + $0x160] sm:$0xff]
        %v3307 = vld [vmem:[#allocation8 + $0x168] sm:$0xff]
        %v3308 = vld [vmem:[#allocation8 + $0x170] sm:$0xff]
        %v3309 = vld [vmem:[#allocation8 + $0x178] sm:$0xff]
        %v3310 = vld [vmem:[#allocation8 + $0x180] sm:$0xff]
        %v3311 = vld [vmem:[#allocation8 + $0x188] sm:$0xff]
        %v3312 = vld [vmem:[#allocation8 + $0x190] sm:$0xff]
        %v3313 = vld [vmem:[#allocation8 + $0x198] sm:$0xff]
        %v3314 = vld [vmem:[#allocation8 + $0x1a0] sm:$0xff]
        %v3315 = vld [vmem:[#allocation8 + $0x1a8] sm:$0xff]
        %v3316 = vld [vmem:[#allocation8 + $0x1b0] sm:$0xff]
        %v3317 = vld [vmem:[#allocation8 + $0x1b8] sm:$0xff]
        %v3318 = vld [vmem:[#allocation8 + $0x1c0] sm:$0xff]
        %v3319 = vld [vmem:[#allocation8 + $0x1c8] sm:$0xff]
        %v3320 = vld [vmem:[#allocation8 + $0x1d0] sm:$0xff]
        %v3321 = vld [vmem:[#allocation8 + $0x1d8] sm:$0xff]
        %v3322 = vld [vmem:[#allocation8 + $0x1e0] sm:$0xff]
        %v3323 = vld [vmem:[#allocation8 + $0x1e8] sm:$0xff]
        %v3324 = vld [vmem:[#allocation8 + $0x1f0] sm:$0xff]
        %v3325 = vld [vmem:[#allocation8 + $0x1f8] sm:$0xff]
        %v3326 = vld [vmem:[#allocation8 + $0x200] sm:$0xff]
        %v3327 = vld [vmem:[#allocation8 + $0x208] sm:$0xff]
        %v3328 = vld [vmem:[#allocation8 + $0x210] sm:$0xff]
        %v3329 = vld [vmem:[#allocation8 + $0x218] sm:$0xff]
        %v3330 = vld [vmem:[#allocation8 + $0x220] sm:$0xff]
        %v3331 = vld [vmem:[#allocation8 + $0x228] sm:$0xff]
        %v3332 = vld [vmem:[#allocation8 + $0x230] sm:$0xff]
        %v3333 = vld [vmem:[#allocation8 + $0x238] sm:$0xff]
        %v3334 = vld [vmem:[#allocation8 + $0x240] sm:$0xff]
        %v3335 = vld [vmem:[#allocation8 + $0x248] sm:$0xff]
        %v3336 = vld [vmem:[#allocation8 + $0x250] sm:$0xff]
        %v3337 = vld [vmem:[#allocation8 + $0x258] sm:$0xff]
        %v3338 = vld [vmem:[#allocation8 + $0x260] sm:$0xff]
        %v3339 = vld [vmem:[#allocation8 + $0x268] sm:$0xff]
        %v3340 = vld [vmem:[#allocation8 + $0x270] sm:$0xff]
        %v3341 = vld [vmem:[#allocation8 + $0x278] sm:$0xff]
        %v3342 = vld [vmem:[#allocation8 + $0x280] sm:$0xff]
        %v3343 = vld [vmem:[#allocation8 + $0x288] sm:$0xff]
        %v3344 = vld [vmem:[#allocation8 + $0x290] sm:$0xff]
        %v3345 = vld [vmem:[#allocation8 + $0x298] sm:$0xff]
        %v3346 = vld [vmem:[#allocation8 + $0x2a0] sm:$0xff]
        %v3347 = vld [vmem:[#allocation8 + $0x2a8] sm:$0xff]
        %v3348 = vld [vmem:[#allocation8 + $0x2b0] sm:$0xff]
        %v3349 = vld [vmem:[#allocation8 + $0x2b8] sm:$0xff]
        %v3350 = vld [vmem:[#allocation8 + $0x2c0] sm:$0xff]
        %v3351 = vld [vmem:[#allocation8 + $0x2c8] sm:$0xff]
        %v3352 = vld [vmem:[#allocation8 + $0x2d0] sm:$0xff]
        %v3353 = vld [vmem:[#allocation8 + $0x2d8] sm:$0xff]
        %v3354 = vld [vmem:[#allocation8 + $0x2e0] sm:$0xff]
        %v3355 = vld [vmem:[#allocation8 + $0x2e8] sm:$0xff]
        %v3356 = vld [vmem:[#allocation8 + $0x2f0] sm:$0xff]
        %v3357 = vld [vmem:[#allocation8 + $0x2f8] sm:$0xff]
        %v3358 = vld [vmem:[#allocation8 + $0x300] sm:$0xff]
        %v3359 = vld [vmem:[#allocation8 + $0x308] sm:$0xff]
        %v3360 = vld [vmem:[#allocation8 + $0x310] sm:$0xff]
        %v3361 = vld [vmem:[#allocation8 + $0x318] sm:$0xff]
        %v3362 = vld [vmem:[#allocation8 + $0x320] sm:$0xff]
        %v3363 = vld [vmem:[#allocation8 + $0x328] sm:$0xff]
        %v3364 = vld [vmem:[#allocation8 + $0x330] sm:$0xff]
        %v3365 = vld [vmem:[#allocation8 + $0x338] sm:$0xff]
        %v3366 = vld [vmem:[#allocation8 + $0x340] sm:$0xff]
        %v3367 = vld [vmem:[#allocation8 + $0x348] sm:$0xff]
        %v3368 = vld [vmem:[#allocation8 + $0x350] sm:$0xff]
        %v3369 = vld [vmem:[#allocation8 + $0x358] sm:$0xff]
        %v3370 = vld [vmem:[#allocation8 + $0x360] sm:$0xff]
        %v3371 = vld [vmem:[#allocation8 + $0x368] sm:$0xff]
        %v3372 = vld [vmem:[#allocation8 + $0x370] sm:$0xff]
        %v3373 = vld [vmem:[#allocation8 + $0x378] sm:$0xff]
        %v3374 = vld [vmem:[#allocation8 + $0x380] sm:$0xff]
        %v3375 = vld [vmem:[#allocation8 + $0x388] sm:$0xff]
        %v3376 = vld [vmem:[#allocation8 + $0x390] sm:$0xff]
        %v3377 = vld [vmem:[#allocation8 + $0x398] sm:$0xff]
        %v3378 = vld [vmem:[#allocation8 + $0x3a0] sm:$0xff]
        %v3379 = vld [vmem:[#allocation8 + $0x3a8] sm:$0xff]
        %v3380 = vld [vmem:[#allocation8 + $0x3b0] sm:$0xff]
        %v3381 = vld [vmem:[#allocation8 + $0x3b8] sm:$0xff]
        %v3382 = vld [vmem:[#allocation8 + $0x3c0] sm:$0xff]
        %v3383 = vld [vmem:[#allocation8 + $0x3c8] sm:$0xff]
        %v3384 = vld [vmem:[#allocation8 + $0x3d0] sm:$0xff]
        %v3385 = vld [vmem:[#allocation8 + $0x3d8] sm:$0xff]
        %v3386 = vld [vmem:[#allocation8 + $0x3e0] sm:$0xff]
        %v3387 = vld [vmem:[#allocation8 + $0x3e8] sm:$0xff]
        %v3388 = vld [vmem:[#allocation8 + $0x3f0] sm:$0xff]
        %v3389 = vld [vmem:[#allocation8 + $0x3f8] sm:$0xff]
        %v3390 = vld [vmem:[#allocation8 + $0x400] sm:$0xff]
        %v3391 = vld [vmem:[#allocation8 + $0x408] sm:$0xff]
        %v3392 = vld [vmem:[#allocation8 + $0x410] sm:$0xff]
        %v3393 = vld [vmem:[#allocation8 + $0x418] sm:$0xff]
        %v3394 = vld [vmem:[#allocation8 + $0x420] sm:$0xff]
        %v3395 = vld [vmem:[#allocation8 + $0x428] sm:$0xff]
        %v3396 = vld [vmem:[#allocation8 + $0x430] sm:$0xff]
        %v3397 = vld [vmem:[#allocation8 + $0x438] sm:$0xff]
        %v3398 = vld [vmem:[#allocation8 + $0x440] sm:$0xff]
        %v3399 = vld [vmem:[#allocation8 + $0x448] sm:$0xff]
        %v3400 = vld [vmem:[#allocation8 + $0x450] sm:$0xff]
        %v3401 = vld [vmem:[#allocation8 + $0x458] sm:$0xff]
        %v3402 = vld [vmem:[#allocation8 + $0x460] sm:$0xff]
        %v3403 = vld [vmem:[#allocation8 + $0x468] sm:$0xff]
        %v3404 = vld [vmem:[#allocation8 + $0x470] sm:$0xff]
        %v3405 = vld [vmem:[#allocation8 + $0x478] sm:$0xff]
        %v3406 = vld [vmem:[#allocation8 + $0x480] sm:$0xff]
        %v3407 = vld [vmem:[#allocation8 + $0x488] sm:$0xff]
        %v3408 = vld [vmem:[#allocation8 + $0x490] sm:$0xff]
        %v3409 = vld [vmem:[#allocation8 + $0x498] sm:$0xff]
        %v3410 = vld [vmem:[#allocation8 + $0x4a0] sm:$0xff]
        %v3411 = vld [vmem:[#allocation8 + $0x4a8] sm:$0xff]
        %v3412 = vld [vmem:[#allocation8 + $0x4b0] sm:$0xff]
        %v3413 = vld [vmem:[#allocation8 + $0x4b8] sm:$0xff]
        %v3414 = vld [vmem:[#allocation8 + $0x4c0] sm:$0xff]
        %v3415 = vld [vmem:[#allocation8 + $0x4c8] sm:$0xff]
        %v3416 = vld [vmem:[#allocation8 + $0x4d0] sm:$0xff]
        %v3417 = vld [vmem:[#allocation8 + $0x4d8] sm:$0xff]
        %v3418 = vld [vmem:[#allocation8 + $0x4e0] sm:$0xff]
        %v3419 = vld [vmem:[#allocation8 + $0x4e8] sm:$0xff]
        %v3420 = vld [vmem:[#allocation8 + $0x4f0] sm:$0xff]
        %v3421 = vld [vmem:[#allocation8 + $0x4f8] sm:$0xff]
        %v3422 = vld [vmem:[#allocation8 + $0x500] sm:$0xff]
        %v3423 = vld [vmem:[#allocation8 + $0x508] sm:$0xff]
        %v3424 = vld [vmem:[#allocation8 + $0x510] sm:$0xff]
        %v3425 = vld [vmem:[#allocation8 + $0x518] sm:$0xff]
        %v3426 = vld [vmem:[#allocation8 + $0x520] sm:$0xff]
        %v3427 = vld [vmem:[#allocation8 + $0x528] sm:$0xff]
        %v3428 = vld [vmem:[#allocation8 + $0x530] sm:$0xff]
        %v3429 = vld [vmem:[#allocation8 + $0x538] sm:$0xff]
        %v3430 = vld [vmem:[#allocation8 + $0x540] sm:$0xff]
        %v3431 = vld [vmem:[#allocation8 + $0x548] sm:$0xff]
        %v3432 = vld [vmem:[#allocation8 + $0x550] sm:$0xff]
        %v3433 = vld [vmem:[#allocation8 + $0x558] sm:$0xff]
        %v3434 = vld [vmem:[#allocation8 + $0x560] sm:$0xff]
        %v3435 = vld [vmem:[#allocation8 + $0x568] sm:$0xff]
        %v3436 = vld [vmem:[#allocation8 + $0x570] sm:$0xff]
        %v3437 = vld [vmem:[#allocation8 + $0x578] sm:$0xff]
        %v3438 = vld [vmem:[#allocation8 + $0x580] sm:$0xff]
        %v3439 = vld [vmem:[#allocation8 + $0x588] sm:$0xff]
        %v3440 = vld [vmem:[#allocation8 + $0x590] sm:$0xff]
        %v3441 = vld [vmem:[#allocation8 + $0x598] sm:$0xff]
        %v3442 = vld [vmem:[#allocation8 + $0x5a0] sm:$0xff]
        %v3443 = vld [vmem:[#allocation8 + $0x5a8] sm:$0xff]
        %v3444 = vld [vmem:[#allocation8 + $0x5b0] sm:$0xff]
        %v3445 = vld [vmem:[#allocation8 + $0x5b8] sm:$0xff]
        %v3446 = vld [vmem:[#allocation8 + $0x5c0] sm:$0xff]
        %v3447 = vld [vmem:[#allocation8 + $0x5c8] sm:$0xff]
        %v3448 = vld [vmem:[#allocation8 + $0x5d0] sm:$0xff]
        %v3449 = vld [vmem:[#allocation8 + $0x5d8] sm:$0xff]
        %v3450 = vld [vmem:[#allocation8 + $0x5e0] sm:$0xff]
        %v3451 = vld [vmem:[#allocation8 + $0x5e8] sm:$0xff]
        %v3452 = vld [vmem:[#allocation8 + $0x5f0] sm:$0xff]
        %v3453 = vld [vmem:[#allocation8 + $0x5f8] sm:$0xff]
        %v3454 = vld [vmem:[#allocation8 + $0x600] sm:$0xff]
        %v3455 = vld [vmem:[#allocation8 + $0x608] sm:$0xff]
        %v3456 = vld [vmem:[#allocation8 + $0x610] sm:$0xff]
        %v3457 = vld [vmem:[#allocation8 + $0x618] sm:$0xff]
        %v3458 = vld [vmem:[#allocation8 + $0x620] sm:$0xff]
        %v3459 = vld [vmem:[#allocation8 + $0x628] sm:$0xff]
        %v3460 = vld [vmem:[#allocation8 + $0x630] sm:$0xff]
        %v3461 = vld [vmem:[#allocation8 + $0x638] sm:$0xff]
        %v3462 = vld [vmem:[#allocation8 + $0x640] sm:$0xff]
        %v3463 = vld [vmem:[#allocation8 + $0x648] sm:$0xff]
        %v3464 = vld [vmem:[#allocation8 + $0x650] sm:$0xff]
        %v3465 = vld [vmem:[#allocation8 + $0x658] sm:$0xff]
        %v3466 = vld [vmem:[#allocation8 + $0x660] sm:$0xff]
        %v3467 = vld [vmem:[#allocation8 + $0x668] sm:$0xff]
        %v3468 = vld [vmem:[#allocation8 + $0x670] sm:$0xff]
        %v3469 = vld [vmem:[#allocation8 + $0x678] sm:$0xff]
        %v3470 = vld [vmem:[#allocation8 + $0x680] sm:$0xff]
        %v3471 = vld [vmem:[#allocation8 + $0x688] sm:$0xff]
        %v3472 = vld [vmem:[#allocation8 + $0x690] sm:$0xff]
        %v3473 = vld [vmem:[#allocation8 + $0x698] sm:$0xff]
        %v3474 = vld [vmem:[#allocation8 + $0x6a0] sm:$0xff]
        %v3475 = vld [vmem:[#allocation8 + $0x6a8] sm:$0xff]
        %v3476 = vld [vmem:[#allocation8 + $0x6b0] sm:$0xff]
        %v3477 = vld [vmem:[#allocation8 + $0x6b8] sm:$0xff]
        %v3478 = vld [vmem:[#allocation8 + $0x6c0] sm:$0xff]
        %v3479 = vld [vmem:[#allocation8 + $0x6c8] sm:$0xff]
        %v3480 = vld [vmem:[#allocation8 + $0x6d0] sm:$0xff]
        %v3481 = vld [vmem:[#allocation8 + $0x6d8] sm:$0xff]
        %v3482 = vld [vmem:[#allocation8 + $0x6e0] sm:$0xff]
        %v3483 = vld [vmem:[#allocation8 + $0x6e8] sm:$0xff]
        %v3484 = vld [vmem:[#allocation8 + $0x6f0] sm:$0xff]
        %v3485 = vld [vmem:[#allocation8 + $0x6f8] sm:$0xff]
        %v3486 = vld [vmem:[#allocation8 + $0x700] sm:$0xff]
        %v3487 = vld [vmem:[#allocation8 + $0x708] sm:$0xff]
        %v3488 = vld [vmem:[#allocation8 + $0x710] sm:$0xff]
        %v3489 = vld [vmem:[#allocation8 + $0x718] sm:$0xff]
        %v3490 = vld [vmem:[#allocation8 + $0x720] sm:$0xff]
        %v3491 = vld [vmem:[#allocation8 + $0x728] sm:$0xff]
        %v3492 = vld [vmem:[#allocation8 + $0x730] sm:$0xff]
        %v3493 = vld [vmem:[#allocation8 + $0x738] sm:$0xff]
        %v3494 = vld [vmem:[#allocation8 + $0x740] sm:$0xff]
        %v3495 = vld [vmem:[#allocation8 + $0x748] sm:$0xff]
        %v3496 = vld [vmem:[#allocation8 + $0x750] sm:$0xff]
        %v3497 = vld [vmem:[#allocation8 + $0x758] sm:$0xff]
        %v3498 = vld [vmem:[#allocation8 + $0x760] sm:$0xff]
        %v3499 = vld [vmem:[#allocation8 + $0x768] sm:$0xff]
        %v3500 = vld [vmem:[#allocation8 + $0x770] sm:$0xff]
        %v3501 = vld [vmem:[#allocation8 + $0x778] sm:$0xff]
        %v3502 = vld [vmem:[#allocation8 + $0x780] sm:$0xff]
        %v3503 = vld [vmem:[#allocation8 + $0x788] sm:$0xff]
        %v3504 = vld [vmem:[#allocation8 + $0x790] sm:$0xff]
        %v3505 = vld [vmem:[#allocation8 + $0x798] sm:$0xff]
        %v3506 = vld [vmem:[#allocation8 + $0x7a0] sm:$0xff]
        %v3507 = vld [vmem:[#allocation8 + $0x7a8] sm:$0xff]
        %v3508 = vld [vmem:[#allocation8 + $0x7b0] sm:$0xff]
        %v3509 = vld [vmem:[#allocation8 + $0x7b8] sm:$0xff]
        %v3510 = vld [vmem:[#allocation8 + $0x7c0] sm:$0xff]
        %v3511 = vld [vmem:[#allocation8 + $0x7c8] sm:$0xff]
        %v3512 = vld [vmem:[#allocation8 + $0x7d0] sm:$0xff]
        %v3513 = vld [vmem:[#allocation8 + $0x7d8] sm:$0xff]
        %v3514 = vld [vmem:[#allocation8 + $0x7e0] sm:$0xff]
        %v3515 = vld [vmem:[#allocation8 + $0x7e8] sm:$0xff]
        %v3516 = vld [vmem:[#allocation8 + $0x7f0] sm:$0xff]
        %v3517 = vld [vmem:[#allocation8 + $0x7f8] sm:$0xff]
        %v3518 = vld [vmem:[%s4] sm:$0xf]
        %v3520 = vlaneseq
        %v3521 = vshrl.u32 %v3520, 7
        %v3522 = vsub.s32 0, %v3521
        %v3523 = vrot.slane %v3518, %v3522
        %v3524 = vlaneseq
        %v3525 = vshrl.u32 %v3524, 7
        %v3526 = vsub.s32 1, %v3525
        %v3527 = vrot.slane %v3518, %v3526
        %v3528 = vlaneseq
        %v3529 = vshrl.u32 %v3528, 7
        %v3530 = vsub.s32 2, %v3529
        %v3531 = vrot.slane %v3518, %v3530
        %v3532 = vlaneseq
        %v3533 = vshrl.u32 %v3532, 7
        %v3534 = vsub.s32 3, %v3533
        %v3535 = vrot.slane %v3518, %v3534
        %v3796 = vunpack.c.l.b16 %v3262
        %v3797 = vunpack.c.h.b16 %v3262
        %v3798 = vunpack.c.l.b16 %v3263
        %v3799 = vunpack.c.h.b16 %v3263
        %v3800 = vunpack.c.l.b16 %v3264
        %v3801 = vunpack.c.h.b16 %v3264
        %v3802 = vunpack.c.l.b16 %v3265
        %v3803 = vunpack.c.h.b16 %v3265
        %v3804 = vunpack.c.l.b16 %v3266
        %v3805 = vunpack.c.h.b16 %v3266
        %v3806 = vunpack.c.l.b16 %v3267
        %v3807 = vunpack.c.h.b16 %v3267
        %v3808 = vunpack.c.l.b16 %v3268
        %v3809 = vunpack.c.h.b16 %v3268
        %v3810 = vunpack.c.l.b16 %v3269
        %v3811 = vunpack.c.h.b16 %v3269
        %v3812 = vunpack.c.l.b16 %v3270
        %v3813 = vunpack.c.h.b16 %v3270
        %v3814 = vunpack.c.l.b16 %v3271
        %v3815 = vunpack.c.h.b16 %v3271
        %v3816 = vunpack.c.l.b16 %v3272
        %v3817 = vunpack.c.h.b16 %v3272
        %v3818 = vunpack.c.l.b16 %v3273
        %v3819 = vunpack.c.h.b16 %v3273
        %v3820 = vunpack.c.l.b16 %v3274
        %v3821 = vunpack.c.h.b16 %v3274
        %v3822 = vunpack.c.l.b16 %v3275
        %v3823 = vunpack.c.h.b16 %v3275
        %v3824 = vunpack.c.l.b16 %v3276
        %v3825 = vunpack.c.h.b16 %v3276
        %v3826 = vunpack.c.l.b16 %v3277
        %v3827 = vunpack.c.h.b16 %v3277
        %v3828 = vunpack.c.l.b16 %v3278
        %v3829 = vunpack.c.h.b16 %v3278
        %v3830 = vunpack.c.l.b16 %v3279
        %v3831 = vunpack.c.h.b16 %v3279
        %v3832 = vunpack.c.l.b16 %v3280
        %v3833 = vunpack.c.h.b16 %v3280
        %v3834 = vunpack.c.l.b16 %v3281
        %v3835 = vunpack.c.h.b16 %v3281
        %v3836 = vunpack.c.l.b16 %v3282
        %v3837 = vunpack.c.h.b16 %v3282
        %v3838 = vunpack.c.l.b16 %v3283
        %v3839 = vunpack.c.h.b16 %v3283
        %v3840 = vunpack.c.l.b16 %v3284
        %v3841 = vunpack.c.h.b16 %v3284
        %v3842 = vunpack.c.l.b16 %v3285
        %v3843 = vunpack.c.h.b16 %v3285
        %v3844 = vunpack.c.l.b16 %v3286
        %v3845 = vunpack.c.h.b16 %v3286
        %v3846 = vunpack.c.l.b16 %v3287
        %v3847 = vunpack.c.h.b16 %v3287
        %v3848 = vunpack.c.l.b16 %v3288
        %v3849 = vunpack.c.h.b16 %v3288
        %v3850 = vunpack.c.l.b16 %v3289
        %v3851 = vunpack.c.h.b16 %v3289
        %v3852 = vunpack.c.l.b16 %v3290
        %v3853 = vunpack.c.h.b16 %v3290
        %v3854 = vunpack.c.l.b16 %v3291
        %v3855 = vunpack.c.h.b16 %v3291
        %v3856 = vunpack.c.l.b16 %v3292
        %v3857 = vunpack.c.h.b16 %v3292
        %v3858 = vunpack.c.l.b16 %v3293
        %v3859 = vunpack.c.h.b16 %v3293
        %v3860 = vunpack.c.l.b16 %v3294
        %v3861 = vunpack.c.h.b16 %v3294
        %v3862 = vunpack.c.l.b16 %v3295
        %v3863 = vunpack.c.h.b16 %v3295
        %v3864 = vunpack.c.l.b16 %v3296
        %v3865 = vunpack.c.h.b16 %v3296
        %v3866 = vunpack.c.l.b16 %v3297
        %v3867 = vunpack.c.h.b16 %v3297
        %v3868 = vunpack.c.l.b16 %v3298
        %v3869 = vunpack.c.h.b16 %v3298
        %v3870 = vunpack.c.l.b16 %v3299
        %v3871 = vunpack.c.h.b16 %v3299
        %v3872 = vunpack.c.l.b16 %v3300
        %v3873 = vunpack.c.h.b16 %v3300
        %v3874 = vunpack.c.l.b16 %v3301
        %v3875 = vunpack.c.h.b16 %v3301
        %v3876 = vunpack.c.l.b16 %v3302
        %v3877 = vunpack.c.h.b16 %v3302
        %v3878 = vunpack.c.l.b16 %v3303
        %v3879 = vunpack.c.h.b16 %v3303
        %v3880 = vunpack.c.l.b16 %v3304
        %v3881 = vunpack.c.h.b16 %v3304
        %v3882 = vunpack.c.l.b16 %v3305
        %v3883 = vunpack.c.h.b16 %v3305
        %v3884 = vunpack.c.l.b16 %v3306
        %v3885 = vunpack.c.h.b16 %v3306
        %v3886 = vunpack.c.l.b16 %v3307
        %v3887 = vunpack.c.h.b16 %v3307
        %v3888 = vunpack.c.l.b16 %v3308
        %v3889 = vunpack.c.h.b16 %v3308
        %v3890 = vunpack.c.l.b16 %v3309
        %v3891 = vunpack.c.h.b16 %v3309
        %v3892 = vunpack.c.l.b16 %v3310
        %v3893 = vunpack.c.h.b16 %v3310
        %v3894 = vunpack.c.l.b16 %v3311
        %v3895 = vunpack.c.h.b16 %v3311
        %v3896 = vunpack.c.l.b16 %v3312
        %v3897 = vunpack.c.h.b16 %v3312
        %v3898 = vunpack.c.l.b16 %v3313
        %v3899 = vunpack.c.h.b16 %v3313
        %v3900 = vunpack.c.l.b16 %v3314
        %v3901 = vunpack.c.h.b16 %v3314
        %v3902 = vunpack.c.l.b16 %v3315
        %v3903 = vunpack.c.h.b16 %v3315
        %v3904 = vunpack.c.l.b16 %v3316
        %v3905 = vunpack.c.h.b16 %v3316
        %v3906 = vunpack.c.l.b16 %v3317
        %v3907 = vunpack.c.h.b16 %v3317
        %v3908 = vunpack.c.l.b16 %v3318
        %v3909 = vunpack.c.h.b16 %v3318
        %v3910 = vunpack.c.l.b16 %v3319
        %v3911 = vunpack.c.h.b16 %v3319
        %v3912 = vunpack.c.l.b16 %v3320
        %v3913 = vunpack.c.h.b16 %v3320
        %v3914 = vunpack.c.l.b16 %v3321
        %v3915 = vunpack.c.h.b16 %v3321
        %v3916 = vunpack.c.l.b16 %v3322
        %v3917 = vunpack.c.h.b16 %v3322
        %v3918 = vunpack.c.l.b16 %v3323
        %v3919 = vunpack.c.h.b16 %v3323
        %v3920 = vunpack.c.l.b16 %v3324
        %v3921 = vunpack.c.h.b16 %v3324
        %v3922 = vunpack.c.l.b16 %v3325
        %v3923 = vunpack.c.h.b16 %v3325
        %v3924 = vunpack.c.l.b16 %v3326
        %v3925 = vunpack.c.h.b16 %v3326
        %v3926 = vunpack.c.l.b16 %v3327
        %v3927 = vunpack.c.h.b16 %v3327
        %v3928 = vunpack.c.l.b16 %v3328
        %v3929 = vunpack.c.h.b16 %v3328
        %v3930 = vunpack.c.l.b16 %v3329
        %v3931 = vunpack.c.h.b16 %v3329
        %v3932 = vunpack.c.l.b16 %v3330
        %v3933 = vunpack.c.h.b16 %v3330
        %v3934 = vunpack.c.l.b16 %v3331
        %v3935 = vunpack.c.h.b16 %v3331
        %v3936 = vunpack.c.l.b16 %v3332
        %v3937 = vunpack.c.h.b16 %v3332
        %v3938 = vunpack.c.l.b16 %v3333
        %v3939 = vunpack.c.h.b16 %v3333
        %v3940 = vunpack.c.l.b16 %v3334
        %v3941 = vunpack.c.h.b16 %v3334
        %v3942 = vunpack.c.l.b16 %v3335
        %v3943 = vunpack.c.h.b16 %v3335
        %v3944 = vunpack.c.l.b16 %v3336
        %v3945 = vunpack.c.h.b16 %v3336
        %v3946 = vunpack.c.l.b16 %v3337
        %v3947 = vunpack.c.h.b16 %v3337
        %v3948 = vunpack.c.l.b16 %v3338
        %v3949 = vunpack.c.h.b16 %v3338
        %v3950 = vunpack.c.l.b16 %v3339
        %v3951 = vunpack.c.h.b16 %v3339
        %v3952 = vunpack.c.l.b16 %v3340
        %v3953 = vunpack.c.h.b16 %v3340
        %v3954 = vunpack.c.l.b16 %v3341
        %v3955 = vunpack.c.h.b16 %v3341
        %v3956 = vunpack.c.l.b16 %v3342
        %v3957 = vunpack.c.h.b16 %v3342
        %v3958 = vunpack.c.l.b16 %v3343
        %v3959 = vunpack.c.h.b16 %v3343
        %v3960 = vunpack.c.l.b16 %v3344
        %v3961 = vunpack.c.h.b16 %v3344
        %v3962 = vunpack.c.l.b16 %v3345
        %v3963 = vunpack.c.h.b16 %v3345
        %v3964 = vunpack.c.l.b16 %v3346
        %v3965 = vunpack.c.h.b16 %v3346
        %v3966 = vunpack.c.l.b16 %v3347
        %v3967 = vunpack.c.h.b16 %v3347
        %v3968 = vunpack.c.l.b16 %v3348
        %v3969 = vunpack.c.h.b16 %v3348
        %v3970 = vunpack.c.l.b16 %v3349
        %v3971 = vunpack.c.h.b16 %v3349
        %v3972 = vunpack.c.l.b16 %v3350
        %v3973 = vunpack.c.h.b16 %v3350
        %v3974 = vunpack.c.l.b16 %v3351
        %v3975 = vunpack.c.h.b16 %v3351
        %v3976 = vunpack.c.l.b16 %v3352
        %v3977 = vunpack.c.h.b16 %v3352
        %v3978 = vunpack.c.l.b16 %v3353
        %v3979 = vunpack.c.h.b16 %v3353
        %v3980 = vunpack.c.l.b16 %v3354
        %v3981 = vunpack.c.h.b16 %v3354
        %v3982 = vunpack.c.l.b16 %v3355
        %v3983 = vunpack.c.h.b16 %v3355
        %v3984 = vunpack.c.l.b16 %v3356
        %v3985 = vunpack.c.h.b16 %v3356
        %v3986 = vunpack.c.l.b16 %v3357
        %v3987 = vunpack.c.h.b16 %v3357
        %v3988 = vunpack.c.l.b16 %v3358
        %v3989 = vunpack.c.h.b16 %v3358
        %v3990 = vunpack.c.l.b16 %v3359
        %v3991 = vunpack.c.h.b16 %v3359
        %v3992 = vunpack.c.l.b16 %v3360
        %v3993 = vunpack.c.h.b16 %v3360
        %v3994 = vunpack.c.l.b16 %v3361
        %v3995 = vunpack.c.h.b16 %v3361
        %v3996 = vunpack.c.l.b16 %v3362
        %v3997 = vunpack.c.h.b16 %v3362
        %v3998 = vunpack.c.l.b16 %v3363
        %v3999 = vunpack.c.h.b16 %v3363
        %v4000 = vunpack.c.l.b16 %v3364
        %v4001 = vunpack.c.h.b16 %v3364
        %v4002 = vunpack.c.l.b16 %v3365
        %v4003 = vunpack.c.h.b16 %v3365
        %v4004 = vunpack.c.l.b16 %v3366
        %v4005 = vunpack.c.h.b16 %v3366
        %v4006 = vunpack.c.l.b16 %v3367
        %v4007 = vunpack.c.h.b16 %v3367
        %v4008 = vunpack.c.l.b16 %v3368
        %v4009 = vunpack.c.h.b16 %v3368
        %v4010 = vunpack.c.l.b16 %v3369
        %v4011 = vunpack.c.h.b16 %v3369
        %v4012 = vunpack.c.l.b16 %v3370
        %v4013 = vunpack.c.h.b16 %v3370
        %v4014 = vunpack.c.l.b16 %v3371
        %v4015 = vunpack.c.h.b16 %v3371
        %v4016 = vunpack.c.l.b16 %v3372
        %v4017 = vunpack.c.h.b16 %v3372
        %v4018 = vunpack.c.l.b16 %v3373
        %v4019 = vunpack.c.h.b16 %v3373
        %v4020 = vunpack.c.l.b16 %v3374
        %v4021 = vunpack.c.h.b16 %v3374
        %v4022 = vunpack.c.l.b16 %v3375
        %v4023 = vunpack.c.h.b16 %v3375
        %v4024 = vunpack.c.l.b16 %v3376
        %v4025 = vunpack.c.h.b16 %v3376
        %v4026 = vunpack.c.l.b16 %v3377
        %v4027 = vunpack.c.h.b16 %v3377
        %v4028 = vunpack.c.l.b16 %v3378
        %v4029 = vunpack.c.h.b16 %v3378
        %v4030 = vunpack.c.l.b16 %v3379
        %v4031 = vunpack.c.h.b16 %v3379
        %v4032 = vunpack.c.l.b16 %v3380
        %v4033 = vunpack.c.h.b16 %v3380
        %v4034 = vunpack.c.l.b16 %v3381
        %v4035 = vunpack.c.h.b16 %v3381
        %v4036 = vunpack.c.l.b16 %v3382
        %v4037 = vunpack.c.h.b16 %v3382
        %v4038 = vunpack.c.l.b16 %v3383
        %v4039 = vunpack.c.h.b16 %v3383
        %v4040 = vunpack.c.l.b16 %v3384
        %v4041 = vunpack.c.h.b16 %v3384
        %v4042 = vunpack.c.l.b16 %v3385
        %v4043 = vunpack.c.h.b16 %v3385
        %v4044 = vunpack.c.l.b16 %v3386
        %v4045 = vunpack.c.h.b16 %v3386
        %v4046 = vunpack.c.l.b16 %v3387
        %v4047 = vunpack.c.h.b16 %v3387
        %v4048 = vunpack.c.l.b16 %v3388
        %v4049 = vunpack.c.h.b16 %v3388
        %v4050 = vunpack.c.l.b16 %v3389
        %v4051 = vunpack.c.h.b16 %v3389
        %v4052 = vunpack.c.l.b16 %v3390
        %v4053 = vunpack.c.h.b16 %v3390
        %v4054 = vunpack.c.l.b16 %v3391
        %v4055 = vunpack.c.h.b16 %v3391
        %v4056 = vunpack.c.l.b16 %v3392
        %v4057 = vunpack.c.h.b16 %v3392
        %v4058 = vunpack.c.l.b16 %v3393
        %v4059 = vunpack.c.h.b16 %v3393
        %v4060 = vunpack.c.l.b16 %v3394
        %v4061 = vunpack.c.h.b16 %v3394
        %v4062 = vunpack.c.l.b16 %v3395
        %v4063 = vunpack.c.h.b16 %v3395
        %v4064 = vunpack.c.l.b16 %v3396
        %v4065 = vunpack.c.h.b16 %v3396
        %v4066 = vunpack.c.l.b16 %v3397
        %v4067 = vunpack.c.h.b16 %v3397
        %v4068 = vunpack.c.l.b16 %v3398
        %v4069 = vunpack.c.h.b16 %v3398
        %v4070 = vunpack.c.l.b16 %v3399
        %v4071 = vunpack.c.h.b16 %v3399
        %v4072 = vunpack.c.l.b16 %v3400
        %v4073 = vunpack.c.h.b16 %v3400
        %v4074 = vunpack.c.l.b16 %v3401
        %v4075 = vunpack.c.h.b16 %v3401
        %v4076 = vunpack.c.l.b16 %v3402
        %v4077 = vunpack.c.h.b16 %v3402
        %v4078 = vunpack.c.l.b16 %v3403
        %v4079 = vunpack.c.h.b16 %v3403
        %v4080 = vunpack.c.l.b16 %v3404
        %v4081 = vunpack.c.h.b16 %v3404
        %v4082 = vunpack.c.l.b16 %v3405
        %v4083 = vunpack.c.h.b16 %v3405
        %v4084 = vunpack.c.l.b16 %v3406
        %v4085 = vunpack.c.h.b16 %v3406
        %v4086 = vunpack.c.l.b16 %v3407
        %v4087 = vunpack.c.h.b16 %v3407
        %v4088 = vunpack.c.l.b16 %v3408
        %v4089 = vunpack.c.h.b16 %v3408
        %v4090 = vunpack.c.l.b16 %v3409
        %v4091 = vunpack.c.h.b16 %v3409
        %v4092 = vunpack.c.l.b16 %v3410
        %v4093 = vunpack.c.h.b16 %v3410
        %v4094 = vunpack.c.l.b16 %v3411
        %v4095 = vunpack.c.h.b16 %v3411
        %v4096 = vunpack.c.l.b16 %v3412
        %v4097 = vunpack.c.h.b16 %v3412
        %v4098 = vunpack.c.l.b16 %v3413
        %v4099 = vunpack.c.h.b16 %v3413
        %v4100 = vunpack.c.l.b16 %v3414
        %v4101 = vunpack.c.h.b16 %v3414
        %v4102 = vunpack.c.l.b16 %v3415
        %v4103 = vunpack.c.h.b16 %v3415
        %v4104 = vunpack.c.l.b16 %v3416
        %v4105 = vunpack.c.h.b16 %v3416
        %v4106 = vunpack.c.l.b16 %v3417
        %v4107 = vunpack.c.h.b16 %v3417
        %v4108 = vunpack.c.l.b16 %v3418
        %v4109 = vunpack.c.h.b16 %v3418
        %v4110 = vunpack.c.l.b16 %v3419
        %v4111 = vunpack.c.h.b16 %v3419
        %v4112 = vunpack.c.l.b16 %v3420
        %v4113 = vunpack.c.h.b16 %v3420
        %v4114 = vunpack.c.l.b16 %v3421
        %v4115 = vunpack.c.h.b16 %v3421
        %v4116 = vunpack.c.l.b16 %v3422
        %v4117 = vunpack.c.h.b16 %v3422
        %v4118 = vunpack.c.l.b16 %v3423
        %v4119 = vunpack.c.h.b16 %v3423
        %v4120 = vunpack.c.l.b16 %v3424
        %v4121 = vunpack.c.h.b16 %v3424
        %v4122 = vunpack.c.l.b16 %v3425
        %v4123 = vunpack.c.h.b16 %v3425
        %v4124 = vunpack.c.l.b16 %v3426
        %v4125 = vunpack.c.h.b16 %v3426
        %v4126 = vunpack.c.l.b16 %v3427
        %v4127 = vunpack.c.h.b16 %v3427
        %v4128 = vunpack.c.l.b16 %v3428
        %v4129 = vunpack.c.h.b16 %v3428
        %v4130 = vunpack.c.l.b16 %v3429
        %v4131 = vunpack.c.h.b16 %v3429
        %v4132 = vunpack.c.l.b16 %v3430
        %v4133 = vunpack.c.h.b16 %v3430
        %v4134 = vunpack.c.l.b16 %v3431
        %v4135 = vunpack.c.h.b16 %v3431
        %v4136 = vunpack.c.l.b16 %v3432
        %v4137 = vunpack.c.h.b16 %v3432
        %v4138 = vunpack.c.l.b16 %v3433
        %v4139 = vunpack.c.h.b16 %v3433
        %v4140 = vunpack.c.l.b16 %v3434
        %v4141 = vunpack.c.h.b16 %v3434
        %v4142 = vunpack.c.l.b16 %v3435
        %v4143 = vunpack.c.h.b16 %v3435
        %v4144 = vunpack.c.l.b16 %v3436
        %v4145 = vunpack.c.h.b16 %v3436
        %v4146 = vunpack.c.l.b16 %v3437
        %v4147 = vunpack.c.h.b16 %v3437
        %v4148 = vunpack.c.l.b16 %v3438
        %v4149 = vunpack.c.h.b16 %v3438
        %v4150 = vunpack.c.l.b16 %v3439
        %v4151 = vunpack.c.h.b16 %v3439
        %v4152 = vunpack.c.l.b16 %v3440
        %v4153 = vunpack.c.h.b16 %v3440
        %v4154 = vunpack.c.l.b16 %v3441
        %v4155 = vunpack.c.h.b16 %v3441
        %v4156 = vunpack.c.l.b16 %v3442
        %v4157 = vunpack.c.h.b16 %v3442
        %v4158 = vunpack.c.l.b16 %v3443
        %v4159 = vunpack.c.h.b16 %v3443
        %v4160 = vunpack.c.l.b16 %v3444
        %v4161 = vunpack.c.h.b16 %v3444
        %v4162 = vunpack.c.l.b16 %v3445
        %v4163 = vunpack.c.h.b16 %v3445
        %v4164 = vunpack.c.l.b16 %v3446
        %v4165 = vunpack.c.h.b16 %v3446
        %v4166 = vunpack.c.l.b16 %v3447
        %v4167 = vunpack.c.h.b16 %v3447
        %v4168 = vunpack.c.l.b16 %v3448
        %v4169 = vunpack.c.h.b16 %v3448
        %v4170 = vunpack.c.l.b16 %v3449
        %v4171 = vunpack.c.h.b16 %v3449
        %v4172 = vunpack.c.l.b16 %v3450
        %v4173 = vunpack.c.h.b16 %v3450
        %v4174 = vunpack.c.l.b16 %v3451
        %v4175 = vunpack.c.h.b16 %v3451
        %v4176 = vunpack.c.l.b16 %v3452
        %v4177 = vunpack.c.h.b16 %v3452
        %v4178 = vunpack.c.l.b16 %v3453
        %v4179 = vunpack.c.h.b16 %v3453
        %v4180 = vunpack.c.l.b16 %v3454
        %v4181 = vunpack.c.h.b16 %v3454
        %v4182 = vunpack.c.l.b16 %v3455
        %v4183 = vunpack.c.h.b16 %v3455
        %v4184 = vunpack.c.l.b16 %v3456
        %v4185 = vunpack.c.h.b16 %v3456
        %v4186 = vunpack.c.l.b16 %v3457
        %v4187 = vunpack.c.h.b16 %v3457
        %v4188 = vunpack.c.l.b16 %v3458
        %v4189 = vunpack.c.h.b16 %v3458
        %v4190 = vunpack.c.l.b16 %v3459
        %v4191 = vunpack.c.h.b16 %v3459
        %v4192 = vunpack.c.l.b16 %v3460
        %v4193 = vunpack.c.h.b16 %v3460
        %v4194 = vunpack.c.l.b16 %v3461
        %v4195 = vunpack.c.h.b16 %v3461
        %v4196 = vunpack.c.l.b16 %v3462
        %v4197 = vunpack.c.h.b16 %v3462
        %v4198 = vunpack.c.l.b16 %v3463
        %v4199 = vunpack.c.h.b16 %v3463
        %v4200 = vunpack.c.l.b16 %v3464
        %v4201 = vunpack.c.h.b16 %v3464
        %v4202 = vunpack.c.l.b16 %v3465
        %v4203 = vunpack.c.h.b16 %v3465
        %v4204 = vunpack.c.l.b16 %v3466
        %v4205 = vunpack.c.h.b16 %v3466
        %v4206 = vunpack.c.l.b16 %v3467
        %v4207 = vunpack.c.h.b16 %v3467
        %v4208 = vunpack.c.l.b16 %v3468
        %v4209 = vunpack.c.h.b16 %v3468
        %v4210 = vunpack.c.l.b16 %v3469
        %v4211 = vunpack.c.h.b16 %v3469
        %v4212 = vunpack.c.l.b16 %v3470
        %v4213 = vunpack.c.h.b16 %v3470
        %v4214 = vunpack.c.l.b16 %v3471
        %v4215 = vunpack.c.h.b16 %v3471
        %v4216 = vunpack.c.l.b16 %v3472
        %v4217 = vunpack.c.h.b16 %v3472
        %v4218 = vunpack.c.l.b16 %v3473
        %v4219 = vunpack.c.h.b16 %v3473
        %v4220 = vunpack.c.l.b16 %v3474
        %v4221 = vunpack.c.h.b16 %v3474
        %v4222 = vunpack.c.l.b16 %v3475
        %v4223 = vunpack.c.h.b16 %v3475
        %v4224 = vunpack.c.l.b16 %v3476
        %v4225 = vunpack.c.h.b16 %v3476
        %v4226 = vunpack.c.l.b16 %v3477
        %v4227 = vunpack.c.h.b16 %v3477
        %v4228 = vunpack.c.l.b16 %v3478
        %v4229 = vunpack.c.h.b16 %v3478
        %v4230 = vunpack.c.l.b16 %v3479
        %v4231 = vunpack.c.h.b16 %v3479
        %v4232 = vunpack.c.l.b16 %v3480
        %v4233 = vunpack.c.h.b16 %v3480
        %v4234 = vunpack.c.l.b16 %v3481
        %v4235 = vunpack.c.h.b16 %v3481
        %v4236 = vunpack.c.l.b16 %v3482
        %v4237 = vunpack.c.h.b16 %v3482
        %v4238 = vunpack.c.l.b16 %v3483
        %v4239 = vunpack.c.h.b16 %v3483
        %v4240 = vunpack.c.l.b16 %v3484
        %v4241 = vunpack.c.h.b16 %v3484
        %v4242 = vunpack.c.l.b16 %v3485
        %v4243 = vunpack.c.h.b16 %v3485
        %v4244 = vunpack.c.l.b16 %v3486
        %v4245 = vunpack.c.h.b16 %v3486
        %v4246 = vunpack.c.l.b16 %v3487
        %v4247 = vunpack.c.h.b16 %v3487
        %v4248 = vunpack.c.l.b16 %v3488
        %v4249 = vunpack.c.h.b16 %v3488
        %v4250 = vunpack.c.l.b16 %v3489
        %v4251 = vunpack.c.h.b16 %v3489
        %v4252 = vunpack.c.l.b16 %v3490
        %v4253 = vunpack.c.h.b16 %v3490
        %v4254 = vunpack.c.l.b16 %v3491
        %v4255 = vunpack.c.h.b16 %v3491
        %v4256 = vunpack.c.l.b16 %v3492
        %v4257 = vunpack.c.h.b16 %v3492
        %v4258 = vunpack.c.l.b16 %v3493
        %v4259 = vunpack.c.h.b16 %v3493
        %v4260 = vunpack.c.l.b16 %v3494
        %v4261 = vunpack.c.h.b16 %v3494
        %v4262 = vunpack.c.l.b16 %v3495
        %v4263 = vunpack.c.h.b16 %v3495
        %v4264 = vunpack.c.l.b16 %v3496
        %v4265 = vunpack.c.h.b16 %v3496
        %v4266 = vunpack.c.l.b16 %v3497
        %v4267 = vunpack.c.h.b16 %v3497
        %v4268 = vunpack.c.l.b16 %v3498
        %v4269 = vunpack.c.h.b16 %v3498
        %v4270 = vunpack.c.l.b16 %v3499
        %v4271 = vunpack.c.h.b16 %v3499
        %v4272 = vunpack.c.l.b16 %v3500
        %v4273 = vunpack.c.h.b16 %v3500
        %v4274 = vunpack.c.l.b16 %v3501
        %v4275 = vunpack.c.h.b16 %v3501
        %v4276 = vunpack.c.l.b16 %v3502
        %v4277 = vunpack.c.h.b16 %v3502
        %v4278 = vunpack.c.l.b16 %v3503
        %v4279 = vunpack.c.h.b16 %v3503
        %v4280 = vunpack.c.l.b16 %v3504
        %v4281 = vunpack.c.h.b16 %v3504
        %v4282 = vunpack.c.l.b16 %v3505
        %v4283 = vunpack.c.h.b16 %v3505
        %v4284 = vunpack.c.l.b16 %v3506
        %v4285 = vunpack.c.h.b16 %v3506
        %v4286 = vunpack.c.l.b16 %v3507
        %v4287 = vunpack.c.h.b16 %v3507
        %v4288 = vunpack.c.l.b16 %v3508
        %v4289 = vunpack.c.h.b16 %v3508
        %v4290 = vunpack.c.l.b16 %v3509
        %v4291 = vunpack.c.h.b16 %v3509
        %v4292 = vunpack.c.l.b16 %v3510
        %v4293 = vunpack.c.h.b16 %v3510
        %v4294 = vunpack.c.l.b16 %v3511
        %v4295 = vunpack.c.h.b16 %v3511
        %v4296 = vunpack.c.l.b16 %v3512
        %v4297 = vunpack.c.h.b16 %v3512
        %v4298 = vunpack.c.l.b16 %v3513
        %v4299 = vunpack.c.h.b16 %v3513
        %v4300 = vunpack.c.l.b16 %v3514
        %v4301 = vunpack.c.h.b16 %v3514
        %v4302 = vunpack.c.l.b16 %v3515
        %v4303 = vunpack.c.h.b16 %v3515
        %v4304 = vunpack.c.l.b16 %v3516
        %v4305 = vunpack.c.h.b16 %v3516
        %v4306 = vunpack.c.l.b16 %v3517
        %v4307 = vunpack.c.h.b16 %v3517
        %v4308 = vpack.c.b16 %v3800, %v3796
        %v4309 = vpack.c.b16 %v3801, %v3797
        %v4310 = vpack.c.b16 %v3802, %v3798
        %v4311 = vpack.c.b16 %v3803, %v3799
        %v4312 = vpack.c.b16 %v3808, %v3804
        %v4313 = vpack.c.b16 %v3809, %v3805
        %v4314 = vpack.c.b16 %v3810, %v3806
        %v4315 = vpack.c.b16 %v3811, %v3807
        %v4316 = vpack.c.b16 %v3816, %v3812
        %v4317 = vpack.c.b16 %v3817, %v3813
        %v4318 = vpack.c.b16 %v3818, %v3814
        %v4319 = vpack.c.b16 %v3819, %v3815
        %v4320 = vpack.c.b16 %v3824, %v3820
        %v4321 = vpack.c.b16 %v3825, %v3821
        %v4322 = vpack.c.b16 %v3826, %v3822
        %v4323 = vpack.c.b16 %v3827, %v3823
        %v4324 = vpack.c.b16 %v3832, %v3828
        %v4325 = vpack.c.b16 %v3833, %v3829
        %v4326 = vpack.c.b16 %v3834, %v3830
        %v4327 = vpack.c.b16 %v3835, %v3831
        %v4328 = vpack.c.b16 %v3840, %v3836
        %v4329 = vpack.c.b16 %v3841, %v3837
        %v4330 = vpack.c.b16 %v3842, %v3838
        %v4331 = vpack.c.b16 %v3843, %v3839
        %v4332 = vpack.c.b16 %v3848, %v3844
        %v4333 = vpack.c.b16 %v3849, %v3845
        %v4334 = vpack.c.b16 %v3850, %v3846
        %v4335 = vpack.c.b16 %v3851, %v3847
        %v4336 = vpack.c.b16 %v3856, %v3852
        %v4337 = vpack.c.b16 %v3857, %v3853
        %v4338 = vpack.c.b16 %v3858, %v3854
        %v4339 = vpack.c.b16 %v3859, %v3855
        %v4340 = vpack.c.b16 %v3864, %v3860
        %v4341 = vpack.c.b16 %v3865, %v3861
        %v4342 = vpack.c.b16 %v3866, %v3862
        %v4343 = vpack.c.b16 %v3867, %v3863
        %v4344 = vpack.c.b16 %v3872, %v3868
        %v4345 = vpack.c.b16 %v3873, %v3869
        %v4346 = vpack.c.b16 %v3874, %v3870
        %v4347 = vpack.c.b16 %v3875, %v3871
        %v4348 = vpack.c.b16 %v3880, %v3876
        %v4349 = vpack.c.b16 %v3881, %v3877
        %v4350 = vpack.c.b16 %v3882, %v3878
        %v4351 = vpack.c.b16 %v3883, %v3879
        %v4352 = vpack.c.b16 %v3888, %v3884
        %v4353 = vpack.c.b16 %v3889, %v3885
        %v4354 = vpack.c.b16 %v3890, %v3886
        %v4355 = vpack.c.b16 %v3891, %v3887
        %v4356 = vpack.c.b16 %v3896, %v3892
        %v4357 = vpack.c.b16 %v3897, %v3893
        %v4358 = vpack.c.b16 %v3898, %v3894
        %v4359 = vpack.c.b16 %v3899, %v3895
        %v4360 = vpack.c.b16 %v3904, %v3900
        %v4361 = vpack.c.b16 %v3905, %v3901
        %v4362 = vpack.c.b16 %v3906, %v3902
        %v4363 = vpack.c.b16 %v3907, %v3903
        %v4364 = vpack.c.b16 %v3912, %v3908
        %v4365 = vpack.c.b16 %v3913, %v3909
        %v4366 = vpack.c.b16 %v3914, %v3910
        %v4367 = vpack.c.b16 %v3915, %v3911
        %v4368 = vpack.c.b16 %v3920, %v3916
        %v4369 = vpack.c.b16 %v3921, %v3917
        %v4370 = vpack.c.b16 %v3922, %v3918
        %v4371 = vpack.c.b16 %v3923, %v3919
        %v4372 = vpack.c.b16 %v3928, %v3924
        %v4373 = vpack.c.b16 %v3929, %v3925
        %v4374 = vpack.c.b16 %v3930, %v3926
        %v4375 = vpack.c.b16 %v3931, %v3927
        %v4376 = vpack.c.b16 %v3936, %v3932
        %v4377 = vpack.c.b16 %v3937, %v3933
        %v4378 = vpack.c.b16 %v3938, %v3934
        %v4379 = vpack.c.b16 %v3939, %v3935
        %v4380 = vpack.c.b16 %v3944, %v3940
        %v4381 = vpack.c.b16 %v3945, %v3941
        %v4382 = vpack.c.b16 %v3946, %v3942
        %v4383 = vpack.c.b16 %v3947, %v3943
        %v4384 = vpack.c.b16 %v3952, %v3948
        %v4385 = vpack.c.b16 %v3953, %v3949
        %v4386 = vpack.c.b16 %v3954, %v3950
        %v4387 = vpack.c.b16 %v3955, %v3951
        %v4388 = vpack.c.b16 %v3960, %v3956
        %v4389 = vpack.c.b16 %v3961, %v3957
        %v4390 = vpack.c.b16 %v3962, %v3958
        %v4391 = vpack.c.b16 %v3963, %v3959
        %v4392 = vpack.c.b16 %v3968, %v3964
        %v4393 = vpack.c.b16 %v3969, %v3965
        %v4394 = vpack.c.b16 %v3970, %v3966
        %v4395 = vpack.c.b16 %v3971, %v3967
        %v4396 = vpack.c.b16 %v3976, %v3972
        %v4397 = vpack.c.b16 %v3977, %v3973
        %v4398 = vpack.c.b16 %v3978, %v3974
        %v4399 = vpack.c.b16 %v3979, %v3975
        %v4400 = vpack.c.b16 %v3984, %v3980
        %v4401 = vpack.c.b16 %v3985, %v3981
        %v4402 = vpack.c.b16 %v3986, %v3982
        %v4403 = vpack.c.b16 %v3987, %v3983
        %v4404 = vpack.c.b16 %v3992, %v3988
        %v4405 = vpack.c.b16 %v3993, %v3989
        %v4406 = vpack.c.b16 %v3994, %v3990
        %v4407 = vpack.c.b16 %v3995, %v3991
        %v4408 = vpack.c.b16 %v4000, %v3996
        %v4409 = vpack.c.b16 %v4001, %v3997
        %v4410 = vpack.c.b16 %v4002, %v3998
        %v4411 = vpack.c.b16 %v4003, %v3999
        %v4412 = vpack.c.b16 %v4008, %v4004
        %v4413 = vpack.c.b16 %v4009, %v4005
        %v4414 = vpack.c.b16 %v4010, %v4006
        %v4415 = vpack.c.b16 %v4011, %v4007
        %v4416 = vpack.c.b16 %v4016, %v4012
        %v4417 = vpack.c.b16 %v4017, %v4013
        %v4418 = vpack.c.b16 %v4018, %v4014
        %v4419 = vpack.c.b16 %v4019, %v4015
        %v4420 = vpack.c.b16 %v4024, %v4020
        %v4421 = vpack.c.b16 %v4025, %v4021
        %v4422 = vpack.c.b16 %v4026, %v4022
        %v4423 = vpack.c.b16 %v4027, %v4023
        %v4424 = vpack.c.b16 %v4032, %v4028
        %v4425 = vpack.c.b16 %v4033, %v4029
        %v4426 = vpack.c.b16 %v4034, %v4030
        %v4427 = vpack.c.b16 %v4035, %v4031
        %v4428 = vpack.c.b16 %v4040, %v4036
        %v4429 = vpack.c.b16 %v4041, %v4037
        %v4430 = vpack.c.b16 %v4042, %v4038
        %v4431 = vpack.c.b16 %v4043, %v4039
        %v4432 = vpack.c.b16 %v4048, %v4044
        %v4433 = vpack.c.b16 %v4049, %v4045
        %v4434 = vpack.c.b16 %v4050, %v4046
        %v4435 = vpack.c.b16 %v4051, %v4047
        %v4436 = vpack.c.b16 %v4056, %v4052
        %v4437 = vpack.c.b16 %v4057, %v4053
        %v4438 = vpack.c.b16 %v4058, %v4054
        %v4439 = vpack.c.b16 %v4059, %v4055
        %v4440 = vpack.c.b16 %v4064, %v4060
        %v4441 = vpack.c.b16 %v4065, %v4061
        %v4442 = vpack.c.b16 %v4066, %v4062
        %v4443 = vpack.c.b16 %v4067, %v4063
        %v4444 = vpack.c.b16 %v4072, %v4068
        %v4445 = vpack.c.b16 %v4073, %v4069
        %v4446 = vpack.c.b16 %v4074, %v4070
        %v4447 = vpack.c.b16 %v4075, %v4071
        %v4448 = vpack.c.b16 %v4080, %v4076
        %v4449 = vpack.c.b16 %v4081, %v4077
        %v4450 = vpack.c.b16 %v4082, %v4078
        %v4451 = vpack.c.b16 %v4083, %v4079
        %v4452 = vpack.c.b16 %v4088, %v4084
        %v4453 = vpack.c.b16 %v4089, %v4085
        %v4454 = vpack.c.b16 %v4090, %v4086
        %v4455 = vpack.c.b16 %v4091, %v4087
        %v4456 = vpack.c.b16 %v4096, %v4092
        %v4457 = vpack.c.b16 %v4097, %v4093
        %v4458 = vpack.c.b16 %v4098, %v4094
        %v4459 = vpack.c.b16 %v4099, %v4095
        %v4460 = vpack.c.b16 %v4104, %v4100
        %v4461 = vpack.c.b16 %v4105, %v4101
        %v4462 = vpack.c.b16 %v4106, %v4102
        %v4463 = vpack.c.b16 %v4107, %v4103
        %v4464 = vpack.c.b16 %v4112, %v4108
        %v4465 = vpack.c.b16 %v4113, %v4109
        %v4466 = vpack.c.b16 %v4114, %v4110
        %v4467 = vpack.c.b16 %v4115, %v4111
        %v4468 = vpack.c.b16 %v4120, %v4116
        %v4469 = vpack.c.b16 %v4121, %v4117
        %v4470 = vpack.c.b16 %v4122, %v4118
        %v4471 = vpack.c.b16 %v4123, %v4119
        %v4472 = vpack.c.b16 %v4128, %v4124
        %v4473 = vpack.c.b16 %v4129, %v4125
        %v4474 = vpack.c.b16 %v4130, %v4126
        %v4475 = vpack.c.b16 %v4131, %v4127
        %v4476 = vpack.c.b16 %v4136, %v4132
        %v4477 = vpack.c.b16 %v4137, %v4133
        %v4478 = vpack.c.b16 %v4138, %v4134
        %v4479 = vpack.c.b16 %v4139, %v4135
        %v4480 = vpack.c.b16 %v4144, %v4140
        %v4481 = vpack.c.b16 %v4145, %v4141
        %v4482 = vpack.c.b16 %v4146, %v4142
        %v4483 = vpack.c.b16 %v4147, %v4143
        %v4484 = vpack.c.b16 %v4152, %v4148
        %v4485 = vpack.c.b16 %v4153, %v4149
        %v4486 = vpack.c.b16 %v4154, %v4150
        %v4487 = vpack.c.b16 %v4155, %v4151
        %v4488 = vpack.c.b16 %v4160, %v4156
        %v4489 = vpack.c.b16 %v4161, %v4157
        %v4490 = vpack.c.b16 %v4162, %v4158
        %v4491 = vpack.c.b16 %v4163, %v4159
        %v4492 = vpack.c.b16 %v4168, %v4164
        %v4493 = vpack.c.b16 %v4169, %v4165
        %v4494 = vpack.c.b16 %v4170, %v4166
        %v4495 = vpack.c.b16 %v4171, %v4167
        %v4496 = vpack.c.b16 %v4176, %v4172
        %v4497 = vpack.c.b16 %v4177, %v4173
        %v4498 = vpack.c.b16 %v4178, %v4174
        %v4499 = vpack.c.b16 %v4179, %v4175
        %v4500 = vpack.c.b16 %v4184, %v4180
        %v4501 = vpack.c.b16 %v4185, %v4181
        %v4502 = vpack.c.b16 %v4186, %v4182
        %v4503 = vpack.c.b16 %v4187, %v4183
        %v4504 = vpack.c.b16 %v4192, %v4188
        %v4505 = vpack.c.b16 %v4193, %v4189
        %v4506 = vpack.c.b16 %v4194, %v4190
        %v4507 = vpack.c.b16 %v4195, %v4191
        %v4508 = vpack.c.b16 %v4200, %v4196
        %v4509 = vpack.c.b16 %v4201, %v4197
        %v4510 = vpack.c.b16 %v4202, %v4198
        %v4511 = vpack.c.b16 %v4203, %v4199
        %v4512 = vpack.c.b16 %v4208, %v4204
        %v4513 = vpack.c.b16 %v4209, %v4205
        %v4514 = vpack.c.b16 %v4210, %v4206
        %v4515 = vpack.c.b16 %v4211, %v4207
        %v4516 = vpack.c.b16 %v4216, %v4212
        %v4517 = vpack.c.b16 %v4217, %v4213
        %v4518 = vpack.c.b16 %v4218, %v4214
        %v4519 = vpack.c.b16 %v4219, %v4215
        %v4520 = vpack.c.b16 %v4224, %v4220
        %v4521 = vpack.c.b16 %v4225, %v4221
        %v4522 = vpack.c.b16 %v4226, %v4222
        %v4523 = vpack.c.b16 %v4227, %v4223
        %v4524 = vpack.c.b16 %v4232, %v4228
        %v4525 = vpack.c.b16 %v4233, %v4229
        %v4526 = vpack.c.b16 %v4234, %v4230
        %v4527 = vpack.c.b16 %v4235, %v4231
        %v4528 = vpack.c.b16 %v4240, %v4236
        %v4529 = vpack.c.b16 %v4241, %v4237
        %v4530 = vpack.c.b16 %v4242, %v4238
        %v4531 = vpack.c.b16 %v4243, %v4239
        %v4532 = vpack.c.b16 %v4248, %v4244
        %v4533 = vpack.c.b16 %v4249, %v4245
        %v4534 = vpack.c.b16 %v4250, %v4246
        %v4535 = vpack.c.b16 %v4251, %v4247
        %v4536 = vpack.c.b16 %v4256, %v4252
        %v4537 = vpack.c.b16 %v4257, %v4253
        %v4538 = vpack.c.b16 %v4258, %v4254
        %v4539 = vpack.c.b16 %v4259, %v4255
        %v4540 = vpack.c.b16 %v4264, %v4260
        %v4541 = vpack.c.b16 %v4265, %v4261
        %v4542 = vpack.c.b16 %v4266, %v4262
        %v4543 = vpack.c.b16 %v4267, %v4263
        %v4544 = vpack.c.b16 %v4272, %v4268
        %v4545 = vpack.c.b16 %v4273, %v4269
        %v4546 = vpack.c.b16 %v4274, %v4270
        %v4547 = vpack.c.b16 %v4275, %v4271
        %v4548 = vpack.c.b16 %v4280, %v4276
        %v4549 = vpack.c.b16 %v4281, %v4277
        %v4550 = vpack.c.b16 %v4282, %v4278
        %v4551 = vpack.c.b16 %v4283, %v4279
        %v4552 = vpack.c.b16 %v4288, %v4284
        %v4553 = vpack.c.b16 %v4289, %v4285
        %v4554 = vpack.c.b16 %v4290, %v4286
        %v4555 = vpack.c.b16 %v4291, %v4287
        %v4556 = vpack.c.b16 %v4296, %v4292
        %v4557 = vpack.c.b16 %v4297, %v4293
        %v4558 = vpack.c.b16 %v4298, %v4294
        %v4559 = vpack.c.b16 %v4299, %v4295
        %v4560 = vpack.c.b16 %v4304, %v4300
        %v4561 = vpack.c.b16 %v4305, %v4301
        %v4562 = vpack.c.b16 %v4306, %v4302
        %v4563 = vpack.c.b16 %v4307, %v4303
        %4820 = vmatprep.subr.bf16.mxu0 %v4309
        %4821 = vmatpush1.bf16.msra.mxu0 %v4308
        %4822 = vmatprep.subr.bf16.mxu0 %v4313
        %4823 = vmatpush1.bf16.msra.mxu0 %v4312
        %4824 = vmatprep.subr.bf16.mxu0 %v4317
        %4825 = vmatpush1.bf16.msra.mxu0 %v4316
        %4826 = vmatprep.subr.bf16.mxu0 %v4321
        %4827 = vmatpush1.bf16.msra.mxu0 %v4320
        %4828 = vmatprep.subr.bf16.mxu0 %v4325
        %4829 = vmatpush1.bf16.msra.mxu0 %v4324
        %4830 = vmatprep.subr.bf16.mxu0 %v4329
        %4831 = vmatpush1.bf16.msra.mxu0 %v4328
        %4832 = vmatprep.subr.bf16.mxu0 %v4333
        %4833 = vmatpush1.bf16.msra.mxu0 %v4332
        %4834 = vmatprep.subr.bf16.mxu0 %v4337
        %4835 = vmatpush1.bf16.msra.mxu0 %v4336
        %4836 = vmatprep.subr.bf16.mxu0 %v4341
        %4837 = vmatpush1.bf16.msra.mxu0 %v4340
        %4838 = vmatprep.subr.bf16.mxu0 %v4345
        %4839 = vmatpush1.bf16.msra.mxu0 %v4344
        %4840 = vmatprep.subr.bf16.mxu0 %v4349
        %4841 = vmatpush1.bf16.msra.mxu0 %v4348
        %4842 = vmatprep.subr.bf16.mxu0 %v4353
        %4843 = vmatpush1.bf16.msra.mxu0 %v4352
        %4844 = vmatprep.subr.bf16.mxu0 %v4357
        %4845 = vmatpush1.bf16.msra.mxu0 %v4356
        %4846 = vmatprep.subr.bf16.mxu0 %v4361
        %4847 = vmatpush1.bf16.msra.mxu0 %v4360
        %4848 = vmatprep.subr.bf16.mxu0 %v4365
        %4849 = vmatpush1.bf16.msra.mxu0 %v4364
        %4850 = vmatprep.subr.bf16.mxu0 %v4369
        %4851 = vmatpush1.bf16.msra.mxu0 %v4368
        %4852 = vmatprep.mubr.bf16.mxu0 %v3183
        %4853 = vmatmul.mubr.bf16.gmra.mrb[0].mxu0 %v3182
        %v4854 = vpop.f32.mrb[0].mxu0
        %v4855 = vadd.f32 %v3523, %v4854
        %v4856 = vpop.f32.mrb[0].mxu0
        %v4857 = vadd.f32 %v3527, %v4856
        %v4858 = vpop.f32.mrb[0].mxu0
        %v4859 = vadd.f32 %v3523, %v4858
        %v4860 = vpop.f32.mrb[0].mxu0
        %v4861 = vadd.f32 %v3527, %v4860
        %4862 = vmatprep.mubr.bf16.mxu0 %v3191
        %4863 = vmatmul.mubr.bf16.gmra.mrb[0].mxu0 %v3190
        %v4864 = vpop.f32.mrb[0].mxu0
        %v4865 = vadd.f32 %v3523, %v4864
        %v4866 = vpop.f32.mrb[0].mxu0
        %v4867 = vadd.f32 %v3527, %v4866
        %v4868 = vpop.f32.mrb[0].mxu0
        %v4869 = vadd.f32 %v3523, %v4868
        %v4870 = vpop.f32.mrb[0].mxu0
        %v4871 = vadd.f32 %v3527, %v4870
        %4872 = vmatprep.mubr.bf16.mxu0 %v3199
        %4873 = vmatmul.mubr.bf16.gmra.mrb[0].mxu0 %v3198
        %v4874 = vpop.f32.mrb[0].mxu0
        %v4875 = vadd.f32 %v3523, %v4874
        %v4876 = vpop.f32.mrb[0].mxu0
        %v4877 = vadd.f32 %v3527, %v4876
        %v4878 = vpop.f32.mrb[0].mxu0
        %v4879 = vadd.f32 %v3523, %v4878
        %v4880 = vpop.f32.mrb[0].mxu0
        %v4881 = vadd.f32 %v3527, %v4880
        %4882 = vmatprep.mubr.bf16.mxu0 %v3207
        %4883 = vmatmul.mubr.bf16.gmra.mrb[0].mxu0 %v3206
        %v4884 = vpop.f32.mrb[0].mxu0
        %v4885 = vadd.f32 %v3523, %v4884
        %v4886 = vpop.f32.mrb[0].mxu0
        %v4887 = vadd.f32 %v3527, %v4886
        %v4888 = vpop.f32.mrb[0].mxu0
        %v4889 = vadd.f32 %v3523, %v4888
        %v4890 = vpop.f32.mrb[0].mxu0
        %v4891 = vadd.f32 %v3527, %v4890
        %4892 = vmatprep.mubr.bf16.mxu0 %v3215
        %4893 = vmatmul.mubr.bf16.gmra.mrb[0].mxu0 %v3214
        %v4894 = vpop.f32.mrb[0].mxu0
        %v4895 = vadd.f32 %v3523, %v4894
        %v4896 = vpop.f32.mrb[0].mxu0
        %v4897 = vadd.f32 %v3527, %v4896
        %v4898 = vpop.f32.mrb[0].mxu0
        %v4899 = vadd.f32 %v3523, %v4898
        %v4900 = vpop.f32.mrb[0].mxu0
        %v4901 = vadd.f32 %v3527, %v4900
        %4902 = vmatprep.mubr.bf16.mxu0 %v3223
        %4903 = vmatmul.mubr.bf16.gmra.mrb[0].mxu0 %v3222
        %v4904 = vpop.f32.mrb[0].mxu0
        %v4905 = vadd.f32 %v3523, %v4904
        %v4906 = vpop.f32.mrb[0].mxu0
        %v4907 = vadd.f32 %v3527, %v4906
        %v4908 = vpop.f32.mrb[0].mxu0
        %v4909 = vadd.f32 %v3523, %v4908
        %v4910 = vpop.f32.mrb[0].mxu0
        %v4911 = vadd.f32 %v3527, %v4910
        %4912 = vmatprep.mubr.bf16.mxu0 %v3231
        %4913 = vmatmul.mubr.bf16.gmra.mrb[0].mxu0 %v3230
        %v4914 = vpop.f32.mrb[0].mxu0
        %v4915 = vadd.f32 %v3523, %v4914
        %v4916 = vpop.f32.mrb[0].mxu0
        %v4917 = vadd.f32 %v3527, %v4916
        %v4918 = vpop.f32.mrb[0].mxu0
        %v4919 = vadd.f32 %v3523, %v4918
        %v4920 = vpop.f32.mrb[0].mxu0
        %v4921 = vadd.f32 %v3527, %v4920
        %4922 = vmatprep.mubr.bf16.mxu0 %v3239
        %4923 = vmatmul.mubr.bf16.gmra.mrb[0].mxu0 %v3238
        %v4924 = vpop.f32.mrb[0].mxu0
        %v4925 = vadd.f32 %v3523, %v4924
        %v4926 = vpop.f32.mrb[0].mxu0
        %v4927 = vadd.f32 %v3527, %v4926
        %v4928 = vpop.f32.mrb[0].mxu0
        %v4929 = vadd.f32 %v3523, %v4928
        %v4930 = vpop.f32.mrb[0].mxu0
        %v4931 = vadd.f32 %v3527, %v4930
        %4932 = vmatprep.mubr.bf16.mxu0 %v3247
        %4933 = vmatmul.mubr.bf16.gmra.mrb[0].mxu0 %v3246
        %v4934 = vpop.f32.mrb[0].mxu0
        %v4935 = vadd.f32 %v3523, %v4934
        %v4936 = vpop.f32.mrb[0].mxu0
        %v4937 = vadd.f32 %v3527, %v4936
        %v4938 = vpop.f32.mrb[0].mxu0
        %v4939 = vadd.f32 %v3523, %v4938
        %v4940 = vpop.f32.mrb[0].mxu0
        %v4941 = vadd.f32 %v3527, %v4940
        %4942 = vmatprep.mubr.bf16.mxu0 %v3255
        %4943 = vmatmul.mubr.bf16.gmra.mrb[0].mxu0 %v3254
        %v4944 = vpop.f32.mrb[0].mxu0
        %v4945 = vadd.f32 %v3523, %v4944
        %v4946 = vpop.f32.mrb[0].mxu0
        %v4947 = vadd.f32 %v3527, %v4946
        %v4948 = vpop.f32.mrb[0].mxu0
        %v4949 = vpop.f32.mrb[0].mxu0
        %4950 = vdwg.mxu0
        %4951 = vmatprep.subr.bf16.mxu0 %v4373
        %4952 = vmatpush1.bf16.msra.mxu0 %v4372
        %4953 = vmatprep.subr.bf16.mxu0 %v4377
        %4954 = vmatpush1.bf16.msra.mxu0 %v4376
        %4955 = vmatprep.subr.bf16.mxu0 %v4381
        %4956 = vmatpush1.bf16.msra.mxu0 %v4380
        %4957 = vmatprep.subr.bf16.mxu0 %v4385
        %4958 = vmatpush1.bf16.msra.mxu0 %v4384
        %4959 = vmatprep.subr.bf16.mxu0 %v4389
        %4960 = vmatpush1.bf16.msra.mxu0 %v4388
        %4961 = vmatprep.subr.bf16.mxu0 %v4393
        %4962 = vmatpush1.bf16.msra.mxu0 %v4392
        %4963 = vmatprep.subr.bf16.mxu0 %v4397
        %4964 = vmatpush1.bf16.msra.mxu0 %v4396
        %4965 = vmatprep.subr.bf16.mxu0 %v4401
        %4966 = vmatpush1.bf16.msra.mxu0 %v4400
        %4967 = vmatprep.subr.bf16.mxu0 %v4405
        %4968 = vmatpush1.bf16.msra.mxu0 %v4404
        %4969 = vmatprep.subr.bf16.mxu0 %v4409
        %4970 = vmatpush1.bf16.msra.mxu0 %v4408
        %4971 = vmatprep.subr.bf16.mxu0 %v4413
        %4972 = vmatpush1.bf16.msra.mxu0 %v4412
        %4973 = vmatprep.subr.bf16.mxu0 %v4417
        %4974 = vmatpush1.bf16.msra.mxu0 %v4416
        %4975 = vmatprep.subr.bf16.mxu0 %v4421
        %4976 = vmatpush1.bf16.msra.mxu0 %v4420
        %4977 = vmatprep.subr.bf16.mxu0 %v4425
        %4978 = vmatpush1.bf16.msra.mxu0 %v4424
        %4979 = vmatprep.subr.bf16.mxu0 %v4429
        %4980 = vmatpush1.bf16.msra.mxu0 %v4428
        %4981 = vmatprep.subr.bf16.mxu0 %v4433
        %4982 = vmatpush1.bf16.msra.mxu0 %v4432
        %4983 = vmatprep.mubr.bf16.mxu0 %v3185
        %4984 = vmatmul.mubr.bf16.gmra.mrb[0].mxu0 %v3184
        %v4985 = vpop.f32.mrb[0].mxu0
        %v4986 = vadd.f32 %v4855, %v4985
        %v4987 = vpop.f32.mrb[0].mxu0
        %v4988 = vadd.f32 %v4857, %v4987
        %v4989 = vpop.f32.mrb[0].mxu0
        %v4990 = vadd.f32 %v4859, %v4989
        %v4991 = vpop.f32.mrb[0].mxu0
        %v4992 = vadd.f32 %v4861, %v4991
        %4993 = vmatprep.mubr.bf16.mxu0 %v3193
        %4994 = vmatmul.mubr.bf16.gmra.mrb[0].mxu0 %v3192
        %v4995 = vpop.f32.mrb[0].mxu0
        %v4996 = vadd.f32 %v4865, %v4995
        %v4997 = vpop.f32.mrb[0].mxu0
        %v4998 = vadd.f32 %v4867, %v4997
        %v4999 = vpop.f32.mrb[0].mxu0
        %v5000 = vadd.f32 %v4869, %v4999
        %v5001 = vpop.f32.mrb[0].mxu0
        %v5002 = vadd.f32 %v4871, %v5001
        %5003 = vmatprep.mubr.bf16.mxu0 %v3201
        %5004 = vmatmul.mubr.bf16.gmra.mrb[0].mxu0 %v3200
        %v5005 = vpop.f32.mrb[0].mxu0
        %v5006 = vadd.f32 %v4875, %v5005
        %v5007 = vpop.f32.mrb[0].mxu0
        %v5008 = vadd.f32 %v4877, %v5007
        %v5009 = vpop.f32.mrb[0].mxu0
        %v5010 = vadd.f32 %v4879, %v5009
        %v5011 = vpop.f32.mrb[0].mxu0
        %v5012 = vadd.f32 %v4881, %v5011
        %5013 = vmatprep.mubr.bf16.mxu0 %v3209
        %5014 = vmatmul.mubr.bf16.gmra.mrb[0].mxu0 %v3208
        %v5015 = vpop.f32.mrb[0].mxu0
        %v5016 = vadd.f32 %v4885, %v5015
        %v5017 = vpop.f32.mrb[0].mxu0
        %v5018 = vadd.f32 %v4887, %v5017
        %v5019 = vpop.f32.mrb[0].mxu0
        %v5020 = vadd.f32 %v4889, %v5019
        %v5021 = vpop.f32.mrb[0].mxu0
        %v5022 = vadd.f32 %v4891, %v5021
        %5023 = vmatprep.mubr.bf16.mxu0 %v3217
        %5024 = vmatmul.mubr.bf16.gmra.mrb[0].mxu0 %v3216
        %v5025 = vpop.f32.mrb[0].mxu0
        %v5026 = vadd.f32 %v4895, %v5025
        %v5027 = vpop.f32.mrb[0].mxu0
        %v5028 = vadd.f32 %v4897, %v5027
        %v5029 = vpop.f32.mrb[0].mxu0
        %v5030 = vadd.f32 %v4899, %v5029
        %v5031 = vpop.f32.mrb[0].mxu0
        %v5032 = vadd.f32 %v4901, %v5031
        %5033 = vmatprep.mubr.bf16.mxu0 %v3225
        %5034 = vmatmul.mubr.bf16.gmra.mrb[0].mxu0 %v3224
        %v5035 = vpop.f32.mrb[0].mxu0
        %v5036 = vadd.f32 %v4905, %v5035
        %v5037 = vpop.f32.mrb[0].mxu0
        %v5038 = vadd.f32 %v4907, %v5037
        %v5039 = vpop.f32.mrb[0].mxu0
        %v5040 = vadd.f32 %v4909, %v5039
        %v5041 = vpop.f32.mrb[0].mxu0
        %v5042 = vadd.f32 %v4911, %v5041
        %5043 = vmatprep.mubr.bf16.mxu0 %v3233
        %5044 = vmatmul.mubr.bf16.gmra.mrb[0].mxu0 %v3232
        %v5045 = vpop.f32.mrb[0].mxu0
        %v5046 = vadd.f32 %v4915, %v5045
        %v5047 = vpop.f32.mrb[0].mxu0
        %v5048 = vadd.f32 %v4917, %v5047
        %v5049 = vpop.f32.mrb[0].mxu0
        %v5050 = vadd.f32 %v4919, %v5049
        %v5051 = vpop.f32.mrb[0].mxu0
        %v5052 = vadd.f32 %v4921, %v5051
        %5053 = vmatprep.mubr.bf16.mxu0 %v3241
        %5054 = vmatmul.mubr.bf16.gmra.mrb[0].mxu0 %v3240
        %v5055 = vpop.f32.mrb[0].mxu0
        %v5056 = vadd.f32 %v4925, %v5055
        %v5057 = vpop.f32.mrb[0].mxu0
        %v5058 = vadd.f32 %v4927, %v5057
        %v5059 = vpop.f32.mrb[0].mxu0
        %v5060 = vadd.f32 %v4929, %v5059
        %v5061 = vpop.f32.mrb[0].mxu0
        %v5062 = vadd.f32 %v4931, %v5061
        %5063 = vmatprep.mubr.bf16.mxu0 %v3249
        %5064 = vmatmul.mubr.bf16.gmra.mrb[0].mxu0 %v3248
        %v5065 = vpop.f32.mrb[0].mxu0
        %v5066 = vadd.f32 %v4935, %v5065
        %v5067 = vpop.f32.mrb[0].mxu0
        %v5068 = vadd.f32 %v4937, %v5067
        %v5069 = vpop.f32.mrb[0].mxu0
        %v5070 = vadd.f32 %v4939, %v5069
        %v5071 = vpop.f32.mrb[0].mxu0
        %v5072 = vadd.f32 %v4941, %v5071
        %5073 = vmatprep.mubr.bf16.mxu0 %v3257
        %5074 = vmatmul.mubr.bf16.gmra.mrb[0].mxu0 %v3256
        %v5075 = vpop.f32.mrb[0].mxu0
        %v5076 = vadd.f32 %v4945, %v5075
        %v5077 = vpop.f32.mrb[0].mxu0
        %v5078 = vadd.f32 %v4947, %v5077
        %v5079 = vpop.f32.mrb[0].mxu0
        %v5080 = vpop.f32.mrb[0].mxu0
        %5081 = vdwg.mxu0
        %5082 = vmatprep.subr.bf16.mxu0 %v4437
        %5083 = vmatpush1.bf16.msra.mxu0 %v4436
        %5084 = vmatprep.subr.bf16.mxu0 %v4441
        %5085 = vmatpush1.bf16.msra.mxu0 %v4440
        %5086 = vmatprep.subr.bf16.mxu0 %v4445
        %5087 = vmatpush1.bf16.msra.mxu0 %v4444
        %5088 = vmatprep.subr.bf16.mxu0 %v4449
        %5089 = vmatpush1.bf16.msra.mxu0 %v4448
        %5090 = vmatprep.subr.bf16.mxu0 %v4453
        %5091 = vmatpush1.bf16.msra.mxu0 %v4452
        %5092 = vmatprep.subr.bf16.mxu0 %v4457
        %5093 = vmatpush1.bf16.msra.mxu0 %v4456
        %5094 = vmatprep.subr.bf16.mxu0 %v4461
        %5095 = vmatpush1.bf16.msra.mxu0 %v4460
        %5096 = vmatprep.subr.bf16.mxu0 %v4465
        %5097 = vmatpush1.bf16.msra.mxu0 %v4464
        %5098 = vmatprep.subr.bf16.mxu0 %v4469
        %5099 = vmatpush1.bf16.msra.mxu0 %v4468
        %5100 = vmatprep.subr.bf16.mxu0 %v4473
        %5101 = vmatpush1.bf16.msra.mxu0 %v4472
        %5102 = vmatprep.subr.bf16.mxu0 %v4477
        %5103 = vmatpush1.bf16.msra.mxu0 %v4476
        %5104 = vmatprep.subr.bf16.mxu0 %v4481
        %5105 = vmatpush1.bf16.msra.mxu0 %v4480
        %5106 = vmatprep.subr.bf16.mxu0 %v4485
        %5107 = vmatpush1.bf16.msra.mxu0 %v4484
        %5108 = vmatprep.subr.bf16.mxu0 %v4489
        %5109 = vmatpush1.bf16.msra.mxu0 %v4488
        %5110 = vmatprep.subr.bf16.mxu0 %v4493
        %5111 = vmatpush1.bf16.msra.mxu0 %v4492
        %5112 = vmatprep.subr.bf16.mxu0 %v4497
        %5113 = vmatpush1.bf16.msra.mxu0 %v4496
        %5114 = vmatprep.mubr.bf16.mxu0 %v3187
        %5115 = vmatmul.mubr.bf16.gmra.mrb[0].mxu0 %v3186
        %v5116 = vpop.f32.mrb[0].mxu0
        %v5117 = vadd.f32 %v4986, %v5116
        %v5118 = vpop.f32.mrb[0].mxu0
        %v5119 = vadd.f32 %v4988, %v5118
        %v5120 = vpop.f32.mrb[0].mxu0
        %v5121 = vadd.f32 %v4990, %v5120
        %v5122 = vpop.f32.mrb[0].mxu0
        %v5123 = vadd.f32 %v4992, %v5122
        %5124 = vmatprep.mubr.bf16.mxu0 %v3195
        %5125 = vmatmul.mubr.bf16.gmra.mrb[0].mxu0 %v3194
        %v5126 = vpop.f32.mrb[0].mxu0
        %v5127 = vadd.f32 %v4996, %v5126
        %v5128 = vpop.f32.mrb[0].mxu0
        %v5129 = vadd.f32 %v4998, %v5128
        %v5130 = vpop.f32.mrb[0].mxu0
        %v5131 = vadd.f32 %v5000, %v5130
        %v5132 = vpop.f32.mrb[0].mxu0
        %v5133 = vadd.f32 %v5002, %v5132
        %5134 = vmatprep.mubr.bf16.mxu0 %v3203
        %5135 = vmatmul.mubr.bf16.gmra.mrb[0].mxu0 %v3202
        %v5136 = vpop.f32.mrb[0].mxu0
        %v5137 = vadd.f32 %v5006, %v5136
        %v5138 = vpop.f32.mrb[0].mxu0
        %v5139 = vadd.f32 %v5008, %v5138
        %v5140 = vpop.f32.mrb[0].mxu0
        %v5141 = vadd.f32 %v5010, %v5140
        %v5142 = vpop.f32.mrb[0].mxu0
        %v5143 = vadd.f32 %v5012, %v5142
        %5144 = vmatprep.mubr.bf16.mxu0 %v3211
        %5145 = vmatmul.mubr.bf16.gmra.mrb[0].mxu0 %v3210
        %v5146 = vpop.f32.mrb[0].mxu0
        %v5147 = vadd.f32 %v5016, %v5146
        %v5148 = vpop.f32.mrb[0].mxu0
        %v5149 = vadd.f32 %v5018, %v5148
        %v5150 = vpop.f32.mrb[0].mxu0
        %v5151 = vadd.f32 %v5020, %v5150
        %v5152 = vpop.f32.mrb[0].mxu0
        %v5153 = vadd.f32 %v5022, %v5152
        %5154 = vmatprep.mubr.bf16.mxu0 %v3219
        %5155 = vmatmul.mubr.bf16.gmra.mrb[0].mxu0 %v3218
        %v5156 = vpop.f32.mrb[0].mxu0
        %v5157 = vadd.f32 %v5026, %v5156
        %v5158 = vpop.f32.mrb[0].mxu0
        %v5159 = vadd.f32 %v5028, %v5158
        %v5160 = vpop.f32.mrb[0].mxu0
        %v5161 = vadd.f32 %v5030, %v5160
        %v5162 = vpop.f32.mrb[0].mxu0
        %v5163 = vadd.f32 %v5032, %v5162
        %5164 = vmatprep.mubr.bf16.mxu0 %v3227
        %5165 = vmatmul.mubr.bf16.gmra.mrb[0].mxu0 %v3226
        %v5166 = vpop.f32.mrb[0].mxu0
        %v5167 = vadd.f32 %v5036, %v5166
        %v5168 = vpop.f32.mrb[0].mxu0
        %v5169 = vadd.f32 %v5038, %v5168
        %v5170 = vpop.f32.mrb[0].mxu0
        %v5171 = vadd.f32 %v5040, %v5170
        %v5172 = vpop.f32.mrb[0].mxu0
        %v5173 = vadd.f32 %v5042, %v5172
        %5174 = vmatprep.mubr.bf16.mxu0 %v3235
        %5175 = vmatmul.mubr.bf16.gmra.mrb[0].mxu0 %v3234
        %v5176 = vpop.f32.mrb[0].mxu0
        %v5177 = vadd.f32 %v5046, %v5176
        %v5178 = vpop.f32.mrb[0].mxu0
        %v5179 = vadd.f32 %v5048, %v5178
        %v5180 = vpop.f32.mrb[0].mxu0
        %v5181 = vadd.f32 %v5050, %v5180
        %v5182 = vpop.f32.mrb[0].mxu0
        %v5183 = vadd.f32 %v5052, %v5182
        %5184 = vmatprep.mubr.bf16.mxu0 %v3243
        %5185 = vmatmul.mubr.bf16.gmra.mrb[0].mxu0 %v3242
        %v5186 = vpop.f32.mrb[0].mxu0
        %v5187 = vadd.f32 %v5056, %v5186
        %v5188 = vpop.f32.mrb[0].mxu0
        %v5189 = vadd.f32 %v5058, %v5188
        %v5190 = vpop.f32.mrb[0].mxu0
        %v5191 = vadd.f32 %v5060, %v5190
        %v5192 = vpop.f32.mrb[0].mxu0
        %v5193 = vadd.f32 %v5062, %v5192
        %5194 = vmatprep.mubr.bf16.mxu0 %v3251
        %5195 = vmatmul.mubr.bf16.gmra.mrb[0].mxu0 %v3250
        %v5196 = vpop.f32.mrb[0].mxu0
        %v5197 = vadd.f32 %v5066, %v5196
        %v5198 = vpop.f32.mrb[0].mxu0
        %v5199 = vadd.f32 %v5068, %v5198
        %v5200 = vpop.f32.mrb[0].mxu0
        %v5201 = vadd.f32 %v5070, %v5200
        %v5202 = vpop.f32.mrb[0].mxu0
        %v5203 = vadd.f32 %v5072, %v5202
        %5204 = vmatprep.mubr.bf16.mxu0 %v3259
        %5205 = vmatmul.mubr.bf16.gmra.mrb[0].mxu0 %v3258
        %v5206 = vpop.f32.mrb[0].mxu0
        %v5207 = vadd.f32 %v5076, %v5206
        %v5208 = vpop.f32.mrb[0].mxu0
        %v5209 = vadd.f32 %v5078, %v5208
        %v5210 = vpop.f32.mrb[0].mxu0
        %v5211 = vpop.f32.mrb[0].mxu0
        %5212 = vdwg.mxu0
        %5213 = vmatprep.subr.bf16.mxu0 %v4501
        %5214 = vmatpush1.bf16.msra.mxu0 %v4500
        %5215 = vmatprep.subr.bf16.mxu0 %v4505
        %5216 = vmatpush1.bf16.msra.mxu0 %v4504
        %5217 = vmatprep.subr.bf16.mxu0 %v4509
        %5218 = vmatpush1.bf16.msra.mxu0 %v4508
        %5219 = vmatprep.subr.bf16.mxu0 %v4513
        %5220 = vmatpush1.bf16.msra.mxu0 %v4512
        %5221 = vmatprep.subr.bf16.mxu0 %v4517
        %5222 = vmatpush1.bf16.msra.mxu0 %v4516
        %5223 = vmatprep.subr.bf16.mxu0 %v4521
        %5224 = vmatpush1.bf16.msra.mxu0 %v4520
        %5225 = vmatprep.subr.bf16.mxu0 %v4525
        %5226 = vmatpush1.bf16.msra.mxu0 %v4524
        %5227 = vmatprep.subr.bf16.mxu0 %v4529
        %5228 = vmatpush1.bf16.msra.mxu0 %v4528
        %5229 = vmatprep.subr.bf16.mxu0 %v4533
        %5230 = vmatpush1.bf16.msra.mxu0 %v4532
        %5231 = vmatprep.subr.bf16.mxu0 %v4537
        %5232 = vmatpush1.bf16.msra.mxu0 %v4536
        %5233 = vmatprep.subr.bf16.mxu0 %v4541
        %5234 = vmatpush1.bf16.msra.mxu0 %v4540
        %5235 = vmatprep.subr.bf16.mxu0 %v4545
        %5236 = vmatpush1.bf16.msra.mxu0 %v4544
        %5237 = vmatprep.subr.bf16.mxu0 %v4549
        %5238 = vmatpush1.bf16.msra.mxu0 %v4548
        %5239 = vmatprep.subr.bf16.mxu0 %v4553
        %5240 = vmatpush1.bf16.msra.mxu0 %v4552
        %5241 = vmatprep.subr.bf16.mxu0 %v4557
        %5242 = vmatpush1.bf16.msra.mxu0 %v4556
        %5243 = vmatprep.subr.bf16.mxu0 %v4561
        %5244 = vmatpush1.bf16.msra.mxu0 %v4560
        %5245 = vmatprep.mubr.bf16.mxu0 %v3189
        %5246 = vmatmul.mubr.bf16.gmra.mrb[0].mxu0 %v3188
        %v5247 = vpop.f32.mrb[0].mxu0
        %v5248 = vadd.f32 %v5117, %v5247
        %v5249 = vpop.f32.mrb[0].mxu0
        %v5250 = vadd.f32 %v5119, %v5249
        %v5251 = vpop.f32.mrb[0].mxu0
        %v5252 = vadd.f32 %v5121, %v5251
        %v5253 = vpop.f32.mrb[0].mxu0
        %v5254 = vadd.f32 %v5123, %v5253
        %5255 = vmatprep.mubr.bf16.mxu0 %v3197
        %5256 = vmatmul.mubr.bf16.gmra.mrb[0].mxu0 %v3196
        %v5257 = vpop.f32.mrb[0].mxu0
        %v5258 = vadd.f32 %v5127, %v5257
        %v5259 = vpop.f32.mrb[0].mxu0
        %v5260 = vadd.f32 %v5129, %v5259
        %v5261 = vpop.f32.mrb[0].mxu0
        %v5262 = vadd.f32 %v5131, %v5261
        %v5263 = vpop.f32.mrb[0].mxu0
        %v5264 = vadd.f32 %v5133, %v5263
        %5265 = vmatprep.mubr.bf16.mxu0 %v3205
        %5266 = vmatmul.mubr.bf16.gmra.mrb[0].mxu0 %v3204
        %v5267 = vpop.f32.mrb[0].mxu0
        %v5268 = vadd.f32 %v5137, %v5267
        %v5269 = vpop.f32.mrb[0].mxu0
        %v5270 = vadd.f32 %v5139, %v5269
        %v5271 = vpop.f32.mrb[0].mxu0
        %v5272 = vadd.f32 %v5141, %v5271
        %v5273 = vpop.f32.mrb[0].mxu0
        %v5274 = vadd.f32 %v5143, %v5273
        %5275 = vmatprep.mubr.bf16.mxu0 %v3213
        %5276 = vmatmul.mubr.bf16.gmra.mrb[0].mxu0 %v3212
        %v5277 = vpop.f32.mrb[0].mxu0
        %v5278 = vadd.f32 %v5147, %v5277
        %v5279 = vpop.f32.mrb[0].mxu0
        %v5280 = vadd.f32 %v5149, %v5279
        %v5281 = vpop.f32.mrb[0].mxu0
        %v5282 = vadd.f32 %v5151, %v5281
        %v5283 = vpop.f32.mrb[0].mxu0
        %v5284 = vadd.f32 %v5153, %v5283
        %5285 = vmatprep.mubr.bf16.mxu0 %v3221
        %5286 = vmatmul.mubr.bf16.gmra.mrb[0].mxu0 %v3220
        %v5287 = vpop.f32.mrb[0].mxu0
        %v5288 = vadd.f32 %v5157, %v5287
        %v5289 = vpop.f32.mrb[0].mxu0
        %v5290 = vadd.f32 %v5159, %v5289
        %v5291 = vpop.f32.mrb[0].mxu0
        %v5292 = vadd.f32 %v5161, %v5291
        %v5293 = vpop.f32.mrb[0].mxu0
        %v5294 = vadd.f32 %v5163, %v5293
        %5295 = vmatprep.mubr.bf16.mxu0 %v3229
        %5296 = vmatmul.mubr.bf16.gmra.mrb[0].mxu0 %v3228
        %v5297 = vpop.f32.mrb[0].mxu0
        %v5298 = vadd.f32 %v5167, %v5297
        %v5299 = vpop.f32.mrb[0].mxu0
        %v5300 = vadd.f32 %v5169, %v5299
        %v5301 = vpop.f32.mrb[0].mxu0
        %v5302 = vadd.f32 %v5171, %v5301
        %v5303 = vpop.f32.mrb[0].mxu0
        %v5304 = vadd.f32 %v5173, %v5303
        %5305 = vmatprep.mubr.bf16.mxu0 %v3237
        %5306 = vmatmul.mubr.bf16.gmra.mrb[0].mxu0 %v3236
        %v5307 = vpop.f32.mrb[0].mxu0
        %v5308 = vadd.f32 %v5177, %v5307
        %v5309 = vpop.f32.mrb[0].mxu0
        %v5310 = vadd.f32 %v5179, %v5309
        %v5311 = vpop.f32.mrb[0].mxu0
        %v5312 = vadd.f32 %v5181, %v5311
        %v5313 = vpop.f32.mrb[0].mxu0
        %v5314 = vadd.f32 %v5183, %v5313
        %5315 = vmatprep.mubr.bf16.mxu0 %v3245
        %5316 = vmatmul.mubr.bf16.gmra.mrb[0].mxu0 %v3244
        %v5317 = vpop.f32.mrb[0].mxu0
        %v5318 = vadd.f32 %v5187, %v5317
        %v5319 = vpop.f32.mrb[0].mxu0
        %v5320 = vadd.f32 %v5189, %v5319
        %v5321 = vpop.f32.mrb[0].mxu0
        %v5322 = vadd.f32 %v5191, %v5321
        %v5323 = vpop.f32.mrb[0].mxu0
        %v5324 = vadd.f32 %v5193, %v5323
        %5325 = vmatprep.mubr.bf16.mxu0 %v3253
        %5326 = vmatmul.mubr.bf16.gmra.mrb[0].mxu0 %v3252
        %v5327 = vpop.f32.mrb[0].mxu0
        %v5328 = vadd.f32 %v5197, %v5327
        %v5329 = vpop.f32.mrb[0].mxu0
        %v5330 = vadd.f32 %v5199, %v5329
        %v5331 = vpop.f32.mrb[0].mxu0
        %v5332 = vadd.f32 %v5201, %v5331
        %v5333 = vpop.f32.mrb[0].mxu0
        %v5334 = vadd.f32 %v5203, %v5333
        %5335 = vmatprep.mubr.bf16.mxu0 %v3261
        %5336 = vmatmul.mubr.bf16.gmra.mrb[0].mxu0 %v3260
        %v5337 = vpop.f32.mrb[0].mxu0
        %v5338 = vadd.f32 %v5207, %v5337
        %v5339 = vpop.f32.mrb[0].mxu0
        %v5340 = vadd.f32 %v5209, %v5339
        %v5341 = vpop.f32.mrb[0].mxu0
        %v5342 = vpop.f32.mrb[0].mxu0
        %5343 = vdwg.mxu0
        %5344 = vmatprep.subr.bf16.mxu0 %v4311
        %5345 = vmatpush1.bf16.msra.mxu0 %v4310
        %5346 = vmatprep.subr.bf16.mxu0 %v4315
        %5347 = vmatpush1.bf16.msra.mxu0 %v4314
        %5348 = vmatprep.subr.bf16.mxu0 %v4319
        %5349 = vmatpush1.bf16.msra.mxu0 %v4318
        %5350 = vmatprep.subr.bf16.mxu0 %v4323
        %5351 = vmatpush1.bf16.msra.mxu0 %v4322
        %5352 = vmatprep.subr.bf16.mxu0 %v4327
        %5353 = vmatpush1.bf16.msra.mxu0 %v4326
        %5354 = vmatprep.subr.bf16.mxu0 %v4331
        %5355 = vmatpush1.bf16.msra.mxu0 %v4330
        %5356 = vmatprep.subr.bf16.mxu0 %v4335
        %5357 = vmatpush1.bf16.msra.mxu0 %v4334
        %5358 = vmatprep.subr.bf16.mxu0 %v4339
        %5359 = vmatpush1.bf16.msra.mxu0 %v4338
        %5360 = vmatprep.subr.bf16.mxu0 %v4343
        %5361 = vmatpush1.bf16.msra.mxu0 %v4342
        %5362 = vmatprep.subr.bf16.mxu0 %v4347
        %5363 = vmatpush1.bf16.msra.mxu0 %v4346
        %5364 = vmatprep.subr.bf16.mxu0 %v4351
        %5365 = vmatpush1.bf16.msra.mxu0 %v4350
        %5366 = vmatprep.subr.bf16.mxu0 %v4355
        %5367 = vmatpush1.bf16.msra.mxu0 %v4354
        %5368 = vmatprep.subr.bf16.mxu0 %v4359
        %5369 = vmatpush1.bf16.msra.mxu0 %v4358
        %5370 = vmatprep.subr.bf16.mxu0 %v4363
        %5371 = vmatpush1.bf16.msra.mxu0 %v4362
        %5372 = vmatprep.subr.bf16.mxu0 %v4367
        %5373 = vmatpush1.bf16.msra.mxu0 %v4366
        %5374 = vmatprep.subr.bf16.mxu0 %v4371
        %5375 = vmatpush1.bf16.msra.mxu0 %v4370
        %5376 = vmatprep.mubr.bf16.mxu0 %v3183
        %5377 = vmatmul.mubr.bf16.gmra.mrb[0].mxu0 %v3182
        %v5378 = vpop.f32.mrb[0].mxu0
        %v5379 = vadd.f32 %v3531, %v5378
        %v5380 = vpop.f32.mrb[0].mxu0
        %v5381 = vadd.f32 %v3535, %v5380
        %v5382 = vpop.f32.mrb[0].mxu0
        %v5383 = vadd.f32 %v3531, %v5382
        %v5384 = vpop.f32.mrb[0].mxu0
        %v5385 = vadd.f32 %v3535, %v5384
        %5386 = vmatprep.mubr.bf16.mxu0 %v3191
        %5387 = vmatmul.mubr.bf16.gmra.mrb[0].mxu0 %v3190
        %v5388 = vpop.f32.mrb[0].mxu0
        %v5389 = vadd.f32 %v3531, %v5388
        %v5390 = vpop.f32.mrb[0].mxu0
        %v5391 = vadd.f32 %v3535, %v5390
        %v5392 = vpop.f32.mrb[0].mxu0
        %v5393 = vadd.f32 %v3531, %v5392
        %v5394 = vpop.f32.mrb[0].mxu0
        %v5395 = vadd.f32 %v3535, %v5394
        %5396 = vmatprep.mubr.bf16.mxu0 %v3199
        %5397 = vmatmul.mubr.bf16.gmra.mrb[0].mxu0 %v3198
        %v5398 = vpop.f32.mrb[0].mxu0
        %v5399 = vadd.f32 %v3531, %v5398
        %v5400 = vpop.f32.mrb[0].mxu0
        %v5401 = vadd.f32 %v3535, %v5400
        %v5402 = vpop.f32.mrb[0].mxu0
        %v5403 = vadd.f32 %v3531, %v5402
        %v5404 = vpop.f32.mrb[0].mxu0
        %v5405 = vadd.f32 %v3535, %v5404
        %5406 = vmatprep.mubr.bf16.mxu0 %v3207
        %5407 = vmatmul.mubr.bf16.gmra.mrb[0].mxu0 %v3206
        %v5408 = vpop.f32.mrb[0].mxu0
        %v5409 = vadd.f32 %v3531, %v5408
        %v5410 = vpop.f32.mrb[0].mxu0
        %v5411 = vadd.f32 %v3535, %v5410
        %v5412 = vpop.f32.mrb[0].mxu0
        %v5413 = vadd.f32 %v3531, %v5412
        %v5414 = vpop.f32.mrb[0].mxu0
        %v5415 = vadd.f32 %v3535, %v5414
        %5416 = vmatprep.mubr.bf16.mxu0 %v3215
        %5417 = vmatmul.mubr.bf16.gmra.mrb[0].mxu0 %v3214
        %v5418 = vpop.f32.mrb[0].mxu0
        %v5419 = vadd.f32 %v3531, %v5418
        %v5420 = vpop.f32.mrb[0].mxu0
        %v5421 = vadd.f32 %v3535, %v5420
        %v5422 = vpop.f32.mrb[0].mxu0
        %v5423 = vadd.f32 %v3531, %v5422
        %v5424 = vpop.f32.mrb[0].mxu0
        %v5425 = vadd.f32 %v3535, %v5424
        %5426 = vmatprep.mubr.bf16.mxu0 %v3223
        %5427 = vmatmul.mubr.bf16.gmra.mrb[0].mxu0 %v3222
        %v5428 = vpop.f32.mrb[0].mxu0
        %v5429 = vadd.f32 %v3531, %v5428
        %v5430 = vpop.f32.mrb[0].mxu0
        %v5431 = vadd.f32 %v3535, %v5430
        %v5432 = vpop.f32.mrb[0].mxu0
        %v5433 = vadd.f32 %v3531, %v5432
        %v5434 = vpop.f32.mrb[0].mxu0
        %v5435 = vadd.f32 %v3535, %v5434
        %5436 = vmatprep.mubr.bf16.mxu0 %v3231
        %5437 = vmatmul.mubr.bf16.gmra.mrb[0].mxu0 %v3230
        %v5438 = vpop.f32.mrb[0].mxu0
        %v5439 = vadd.f32 %v3531, %v5438
        %v5440 = vpop.f32.mrb[0].mxu0
        %v5441 = vadd.f32 %v3535, %v5440
        %v5442 = vpop.f32.mrb[0].mxu0
        %v5443 = vadd.f32 %v3531, %v5442
        %v5444 = vpop.f32.mrb[0].mxu0
        %v5445 = vadd.f32 %v3535, %v5444
        %5446 = vmatprep.mubr.bf16.mxu0 %v3239
        %5447 = vmatmul.mubr.bf16.gmra.mrb[0].mxu0 %v3238
        %v5448 = vpop.f32.mrb[0].mxu0
        %v5449 = vadd.f32 %v3531, %v5448
        %v5450 = vpop.f32.mrb[0].mxu0
        %v5451 = vadd.f32 %v3535, %v5450
        %v5452 = vpop.f32.mrb[0].mxu0
        %v5453 = vadd.f32 %v3531, %v5452
        %v5454 = vpop.f32.mrb[0].mxu0
        %v5455 = vadd.f32 %v3535, %v5454
        %5456 = vmatprep.mubr.bf16.mxu0 %v3247
        %5457 = vmatmul.mubr.bf16.gmra.mrb[0].mxu0 %v3246
        %v5458 = vpop.f32.mrb[0].mxu0
        %v5459 = vadd.f32 %v3531, %v5458
        %v5460 = vpop.f32.mrb[0].mxu0
        %v5461 = vadd.f32 %v3535, %v5460
        %v5462 = vpop.f32.mrb[0].mxu0
        %v5463 = vadd.f32 %v3531, %v5462
        %v5464 = vpop.f32.mrb[0].mxu0
        %v5465 = vadd.f32 %v3535, %v5464
        %5466 = vmatprep.mubr.bf16.mxu0 %v3255
        %5467 = vmatmul.mubr.bf16.gmra.mrb[0].mxu0 %v3254
        %v5468 = vpop.f32.mrb[0].mxu0
        %v5469 = vadd.f32 %v3531, %v5468
        %v5470 = vpop.f32.mrb[0].mxu0
        %v5471 = vadd.f32 %v3535, %v5470
        %v5472 = vpop.f32.mrb[0].mxu0
        %v5473 = vpop.f32.mrb[0].mxu0
        %5474 = vdwg.mxu0
        %5475 = vmatprep.subr.bf16.mxu0 %v4375
        %5476 = vmatpush1.bf16.msra.mxu0 %v4374
        %5477 = vmatprep.subr.bf16.mxu0 %v4379
        %5478 = vmatpush1.bf16.msra.mxu0 %v4378
        %5479 = vmatprep.subr.bf16.mxu0 %v4383
        %5480 = vmatpush1.bf16.msra.mxu0 %v4382
        %5481 = vmatprep.subr.bf16.mxu0 %v4387
        %5482 = vmatpush1.bf16.msra.mxu0 %v4386
        %5483 = vmatprep.subr.bf16.mxu0 %v4391
        %5484 = vmatpush1.bf16.msra.mxu0 %v4390
        %5485 = vmatprep.subr.bf16.mxu0 %v4395
        %5486 = vmatpush1.bf16.msra.mxu0 %v4394
        %5487 = vmatprep.subr.bf16.mxu0 %v4399
        %5488 = vmatpush1.bf16.msra.mxu0 %v4398
        %5489 = vmatprep.subr.bf16.mxu0 %v4403
        %5490 = vmatpush1.bf16.msra.mxu0 %v4402
        %5491 = vmatprep.subr.bf16.mxu0 %v4407
        %5492 = vmatpush1.bf16.msra.mxu0 %v4406
        %5493 = vmatprep.subr.bf16.mxu0 %v4411
        %5494 = vmatpush1.bf16.msra.mxu0 %v4410
        %5495 = vmatprep.subr.bf16.mxu0 %v4415
        %5496 = vmatpush1.bf16.msra.mxu0 %v4414
        %5497 = vmatprep.subr.bf16.mxu0 %v4419
        %5498 = vmatpush1.bf16.msra.mxu0 %v4418
        %5499 = vmatprep.subr.bf16.mxu0 %v4423
        %5500 = vmatpush1.bf16.msra.mxu0 %v4422
        %5501 = vmatprep.subr.bf16.mxu0 %v4427
        %5502 = vmatpush1.bf16.msra.mxu0 %v4426
        %5503 = vmatprep.subr.bf16.mxu0 %v4431
        %5504 = vmatpush1.bf16.msra.mxu0 %v4430
        %5505 = vmatprep.subr.bf16.mxu0 %v4435
        %5506 = vmatpush1.bf16.msra.mxu0 %v4434
        %5507 = vmatprep.mubr.bf16.mxu0 %v3185
        %5508 = vmatmul.mubr.bf16.gmra.mrb[0].mxu0 %v3184
        %v5509 = vpop.f32.mrb[0].mxu0
        %v5510 = vadd.f32 %v5379, %v5509
        %v5511 = vpop.f32.mrb[0].mxu0
        %v5512 = vadd.f32 %v5381, %v5511
        %v5513 = vpop.f32.mrb[0].mxu0
        %v5514 = vadd.f32 %v5383, %v5513
        %v5515 = vpop.f32.mrb[0].mxu0
        %v5516 = vadd.f32 %v5385, %v5515
        %5517 = vmatprep.mubr.bf16.mxu0 %v3193
        %5518 = vmatmul.mubr.bf16.gmra.mrb[0].mxu0 %v3192
        %v5519 = vpop.f32.mrb[0].mxu0
        %v5520 = vadd.f32 %v5389, %v5519
        %v5521 = vpop.f32.mrb[0].mxu0
        %v5522 = vadd.f32 %v5391, %v5521
        %v5523 = vpop.f32.mrb[0].mxu0
        %v5524 = vadd.f32 %v5393, %v5523
        %v5525 = vpop.f32.mrb[0].mxu0
        %v5526 = vadd.f32 %v5395, %v5525
        %5527 = vmatprep.mubr.bf16.mxu0 %v3201
        %5528 = vmatmul.mubr.bf16.gmra.mrb[0].mxu0 %v3200
        %v5529 = vpop.f32.mrb[0].mxu0
        %v5530 = vadd.f32 %v5399, %v5529
        %v5531 = vpop.f32.mrb[0].mxu0
        %v5532 = vadd.f32 %v5401, %v5531
        %v5533 = vpop.f32.mrb[0].mxu0
        %v5534 = vadd.f32 %v5403, %v5533
        %v5535 = vpop.f32.mrb[0].mxu0
        %v5536 = vadd.f32 %v5405, %v5535
        %5537 = vmatprep.mubr.bf16.mxu0 %v3209
        %5538 = vmatmul.mubr.bf16.gmra.mrb[0].mxu0 %v3208
        %v5539 = vpop.f32.mrb[0].mxu0
        %v5540 = vadd.f32 %v5409, %v5539
        %v5541 = vpop.f32.mrb[0].mxu0
        %v5542 = vadd.f32 %v5411, %v5541
        %v5543 = vpop.f32.mrb[0].mxu0
        %v5544 = vadd.f32 %v5413, %v5543
        %v5545 = vpop.f32.mrb[0].mxu0
        %v5546 = vadd.f32 %v5415, %v5545
        %5547 = vmatprep.mubr.bf16.mxu0 %v3217
        %5548 = vmatmul.mubr.bf16.gmra.mrb[0].mxu0 %v3216
        %v5549 = vpop.f32.mrb[0].mxu0
        %v5550 = vadd.f32 %v5419, %v5549
        %v5551 = vpop.f32.mrb[0].mxu0
        %v5552 = vadd.f32 %v5421, %v5551
        %v5553 = vpop.f32.mrb[0].mxu0
        %v5554 = vadd.f32 %v5423, %v5553
        %v5555 = vpop.f32.mrb[0].mxu0
        %v5556 = vadd.f32 %v5425, %v5555
        %5557 = vmatprep.mubr.bf16.mxu0 %v3225
        %5558 = vmatmul.mubr.bf16.gmra.mrb[0].mxu0 %v3224
        %v5559 = vpop.f32.mrb[0].mxu0
        %v5560 = vadd.f32 %v5429, %v5559
        %v5561 = vpop.f32.mrb[0].mxu0
        %v5562 = vadd.f32 %v5431, %v5561
        %v5563 = vpop.f32.mrb[0].mxu0
        %v5564 = vadd.f32 %v5433, %v5563
        %v5565 = vpop.f32.mrb[0].mxu0
        %v5566 = vadd.f32 %v5435, %v5565
        %5567 = vmatprep.mubr.bf16.mxu0 %v3233
        %5568 = vmatmul.mubr.bf16.gmra.mrb[0].mxu0 %v3232
        %v5569 = vpop.f32.mrb[0].mxu0
        %v5570 = vadd.f32 %v5439, %v5569
        %v5571 = vpop.f32.mrb[0].mxu0
        %v5572 = vadd.f32 %v5441, %v5571
        %v5573 = vpop.f32.mrb[0].mxu0
        %v5574 = vadd.f32 %v5443, %v5573
        %v5575 = vpop.f32.mrb[0].mxu0
        %v5576 = vadd.f32 %v5445, %v5575
        %5577 = vmatprep.mubr.bf16.mxu0 %v3241
        %5578 = vmatmul.mubr.bf16.gmra.mrb[0].mxu0 %v3240
        %v5579 = vpop.f32.mrb[0].mxu0
        %v5580 = vadd.f32 %v5449, %v5579
        %v5581 = vpop.f32.mrb[0].mxu0
        %v5582 = vadd.f32 %v5451, %v5581
        %v5583 = vpop.f32.mrb[0].mxu0
        %v5584 = vadd.f32 %v5453, %v5583
        %v5585 = vpop.f32.mrb[0].mxu0
        %v5586 = vadd.f32 %v5455, %v5585
        %5587 = vmatprep.mubr.bf16.mxu0 %v3249
        %5588 = vmatmul.mubr.bf16.gmra.mrb[0].mxu0 %v3248
        %v5589 = vpop.f32.mrb[0].mxu0
        %v5590 = vadd.f32 %v5459, %v5589
        %v5591 = vpop.f32.mrb[0].mxu0
        %v5592 = vadd.f32 %v5461, %v5591
        %v5593 = vpop.f32.mrb[0].mxu0
        %v5594 = vadd.f32 %v5463, %v5593
        %v5595 = vpop.f32.mrb[0].mxu0
        %v5596 = vadd.f32 %v5465, %v5595
        %5597 = vmatprep.mubr.bf16.mxu0 %v3257
        %5598 = vmatmul.mubr.bf16.gmra.mrb[0].mxu0 %v3256
        %v5599 = vpop.f32.mrb[0].mxu0
        %v5600 = vadd.f32 %v5469, %v5599
        %v5601 = vpop.f32.mrb[0].mxu0
        %v5602 = vadd.f32 %v5471, %v5601
        %v5603 = vpop.f32.mrb[0].mxu0
        %v5604 = vpop.f32.mrb[0].mxu0
        %5605 = vdwg.mxu0
        %5606 = vmatprep.subr.bf16.mxu0 %v4439
        %5607 = vmatpush1.bf16.msra.mxu0 %v4438
        %5608 = vmatprep.subr.bf16.mxu0 %v4443
        %5609 = vmatpush1.bf16.msra.mxu0 %v4442
        %5610 = vmatprep.subr.bf16.mxu0 %v4447
        %5611 = vmatpush1.bf16.msra.mxu0 %v4446
        %5612 = vmatprep.subr.bf16.mxu0 %v4451
        %5613 = vmatpush1.bf16.msra.mxu0 %v4450
        %5614 = vmatprep.subr.bf16.mxu0 %v4455
        %5615 = vmatpush1.bf16.msra.mxu0 %v4454
        %5616 = vmatprep.subr.bf16.mxu0 %v4459
        %5617 = vmatpush1.bf16.msra.mxu0 %v4458
        %5618 = vmatprep.subr.bf16.mxu0 %v4463
        %5619 = vmatpush1.bf16.msra.mxu0 %v4462
        %5620 = vmatprep.subr.bf16.mxu0 %v4467
        %5621 = vmatpush1.bf16.msra.mxu0 %v4466
        %5622 = vmatprep.subr.bf16.mxu0 %v4471
        %5623 = vmatpush1.bf16.msra.mxu0 %v4470
        %5624 = vmatprep.subr.bf16.mxu0 %v4475
        %5625 = vmatpush1.bf16.msra.mxu0 %v4474
        %5626 = vmatprep.subr.bf16.mxu0 %v4479
        %5627 = vmatpush1.bf16.msra.mxu0 %v4478
        %5628 = vmatprep.subr.bf16.mxu0 %v4483
        %5629 = vmatpush1.bf16.msra.mxu0 %v4482
        %5630 = vmatprep.subr.bf16.mxu0 %v4487
        %5631 = vmatpush1.bf16.msra.mxu0 %v4486
        %5632 = vmatprep.subr.bf16.mxu0 %v4491
        %5633 = vmatpush1.bf16.msra.mxu0 %v4490
        %5634 = vmatprep.subr.bf16.mxu0 %v4495
        %5635 = vmatpush1.bf16.msra.mxu0 %v4494
        %5636 = vmatprep.subr.bf16.mxu0 %v4499
        %5637 = vmatpush1.bf16.msra.mxu0 %v4498
        %5638 = vmatprep.mubr.bf16.mxu0 %v3187
        %5639 = vmatmul.mubr.bf16.gmra.mrb[0].mxu0 %v3186
        %v5640 = vpop.f32.mrb[0].mxu0
        %v5641 = vadd.f32 %v5510, %v5640
        %v5642 = vpop.f32.mrb[0].mxu0
        %v5643 = vadd.f32 %v5512, %v5642
        %v5644 = vpop.f32.mrb[0].mxu0
        %v5645 = vadd.f32 %v5514, %v5644
        %v5646 = vpop.f32.mrb[0].mxu0
        %v5647 = vadd.f32 %v5516, %v5646
        %5648 = vmatprep.mubr.bf16.mxu0 %v3195
        %5649 = vmatmul.mubr.bf16.gmra.mrb[0].mxu0 %v3194
        %v5650 = vpop.f32.mrb[0].mxu0
        %v5651 = vadd.f32 %v5520, %v5650
        %v5652 = vpop.f32.mrb[0].mxu0
        %v5653 = vadd.f32 %v5522, %v5652
        %v5654 = vpop.f32.mrb[0].mxu0
        %v5655 = vadd.f32 %v5524, %v5654
        %v5656 = vpop.f32.mrb[0].mxu0
        %v5657 = vadd.f32 %v5526, %v5656
        %5658 = vmatprep.mubr.bf16.mxu0 %v3203
        %5659 = vmatmul.mubr.bf16.gmra.mrb[0].mxu0 %v3202
        %v5660 = vpop.f32.mrb[0].mxu0
        %v5661 = vadd.f32 %v5530, %v5660
        %v5662 = vpop.f32.mrb[0].mxu0
        %v5663 = vadd.f32 %v5532, %v5662
        %v5664 = vpop.f32.mrb[0].mxu0
        %v5665 = vadd.f32 %v5534, %v5664
        %v5666 = vpop.f32.mrb[0].mxu0
        %v5667 = vadd.f32 %v5536, %v5666
        %5668 = vmatprep.mubr.bf16.mxu0 %v3211
        %5669 = vmatmul.mubr.bf16.gmra.mrb[0].mxu0 %v3210
        %v5670 = vpop.f32.mrb[0].mxu0
        %v5671 = vadd.f32 %v5540, %v5670
        %v5672 = vpop.f32.mrb[0].mxu0
        %v5673 = vadd.f32 %v5542, %v5672
        %v5674 = vpop.f32.mrb[0].mxu0
        %v5675 = vadd.f32 %v5544, %v5674
        %v5676 = vpop.f32.mrb[0].mxu0
        %v5677 = vadd.f32 %v5546, %v5676
        %5678 = vmatprep.mubr.bf16.mxu0 %v3219
        %5679 = vmatmul.mubr.bf16.gmra.mrb[0].mxu0 %v3218
        %v5680 = vpop.f32.mrb[0].mxu0
        %v5681 = vadd.f32 %v5550, %v5680
        %v5682 = vpop.f32.mrb[0].mxu0
        %v5683 = vadd.f32 %v5552, %v5682
        %v5684 = vpop.f32.mrb[0].mxu0
        %v5685 = vadd.f32 %v5554, %v5684
        %v5686 = vpop.f32.mrb[0].mxu0
        %v5687 = vadd.f32 %v5556, %v5686
        %5688 = vmatprep.mubr.bf16.mxu0 %v3227
        %5689 = vmatmul.mubr.bf16.gmra.mrb[0].mxu0 %v3226
        %v5690 = vpop.f32.mrb[0].mxu0
        %v5691 = vadd.f32 %v5560, %v5690
        %v5692 = vpop.f32.mrb[0].mxu0
        %v5693 = vadd.f32 %v5562, %v5692
        %v5694 = vpop.f32.mrb[0].mxu0
        %v5695 = vadd.f32 %v5564, %v5694
        %v5696 = vpop.f32.mrb[0].mxu0
        %v5697 = vadd.f32 %v5566, %v5696
        %5698 = vmatprep.mubr.bf16.mxu0 %v3235
        %5699 = vmatmul.mubr.bf16.gmra.mrb[0].mxu0 %v3234
        %v5700 = vpop.f32.mrb[0].mxu0
        %v5701 = vadd.f32 %v5570, %v5700
        %v5702 = vpop.f32.mrb[0].mxu0
        %v5703 = vadd.f32 %v5572, %v5702
        %v5704 = vpop.f32.mrb[0].mxu0
        %v5705 = vadd.f32 %v5574, %v5704
        %v5706 = vpop.f32.mrb[0].mxu0
        %v5707 = vadd.f32 %v5576, %v5706
        %5708 = vmatprep.mubr.bf16.mxu0 %v3243
        %5709 = vmatmul.mubr.bf16.gmra.mrb[0].mxu0 %v3242
        %v5710 = vpop.f32.mrb[0].mxu0
        %v5711 = vadd.f32 %v5580, %v5710
        %v5712 = vpop.f32.mrb[0].mxu0
        %v5713 = vadd.f32 %v5582, %v5712
        %v5714 = vpop.f32.mrb[0].mxu0
        %v5715 = vadd.f32 %v5584, %v5714
        %v5716 = vpop.f32.mrb[0].mxu0
        %v5717 = vadd.f32 %v5586, %v5716
        %5718 = vmatprep.mubr.bf16.mxu0 %v3251
        %5719 = vmatmul.mubr.bf16.gmra.mrb[0].mxu0 %v3250
        %v5720 = vpop.f32.mrb[0].mxu0
        %v5721 = vadd.f32 %v5590, %v5720
        %v5722 = vpop.f32.mrb[0].mxu0
        %v5723 = vadd.f32 %v5592, %v5722
        %v5724 = vpop.f32.mrb[0].mxu0
        %v5725 = vadd.f32 %v5594, %v5724
        %v5726 = vpop.f32.mrb[0].mxu0
        %v5727 = vadd.f32 %v5596, %v5726
        %5728 = vmatprep.mubr.bf16.mxu0 %v3259
        %5729 = vmatmul.mubr.bf16.gmra.mrb[0].mxu0 %v3258
        %v5730 = vpop.f32.mrb[0].mxu0
        %v5731 = vadd.f32 %v5600, %v5730
        %v5732 = vpop.f32.mrb[0].mxu0
        %v5733 = vadd.f32 %v5602, %v5732
        %v5734 = vpop.f32.mrb[0].mxu0
        %v5735 = vpop.f32.mrb[0].mxu0
        %5736 = vdwg.mxu0
        %5737 = vmatprep.subr.bf16.mxu0 %v4503
        %5738 = vmatpush1.bf16.msra.mxu0 %v4502
        %5739 = vmatprep.subr.bf16.mxu0 %v4507
        %5740 = vmatpush1.bf16.msra.mxu0 %v4506
        %5741 = vmatprep.subr.bf16.mxu0 %v4511
        %5742 = vmatpush1.bf16.msra.mxu0 %v4510
        %5743 = vmatprep.subr.bf16.mxu0 %v4515
        %5744 = vmatpush1.bf16.msra.mxu0 %v4514
        %5745 = vmatprep.subr.bf16.mxu0 %v4519
        %5746 = vmatpush1.bf16.msra.mxu0 %v4518
        %5747 = vmatprep.subr.bf16.mxu0 %v4523
        %5748 = vmatpush1.bf16.msra.mxu0 %v4522
        %5749 = vmatprep.subr.bf16.mxu0 %v4527
        %5750 = vmatpush1.bf16.msra.mxu0 %v4526
        %5751 = vmatprep.subr.bf16.mxu0 %v4531
        %5752 = vmatpush1.bf16.msra.mxu0 %v4530
        %5753 = vmatprep.subr.bf16.mxu0 %v4535
        %5754 = vmatpush1.bf16.msra.mxu0 %v4534
        %5755 = vmatprep.subr.bf16.mxu0 %v4539
        %5756 = vmatpush1.bf16.msra.mxu0 %v4538
        %5757 = vmatprep.subr.bf16.mxu0 %v4543
        %5758 = vmatpush1.bf16.msra.mxu0 %v4542
        %5759 = vmatprep.subr.bf16.mxu0 %v4547
        %5760 = vmatpush1.bf16.msra.mxu0 %v4546
        %5761 = vmatprep.subr.bf16.mxu0 %v4551
        %5762 = vmatpush1.bf16.msra.mxu0 %v4550
        %5763 = vmatprep.subr.bf16.mxu0 %v4555
        %5764 = vmatpush1.bf16.msra.mxu0 %v4554
        %5765 = vmatprep.subr.bf16.mxu0 %v4559
        %5766 = vmatpush1.bf16.msra.mxu0 %v4558
        %5767 = vmatprep.subr.bf16.mxu0 %v4563
        %5768 = vmatpush1.bf16.msra.mxu0 %v4562
        %5769 = vmatprep.mubr.bf16.mxu0 %v3189
        %5770 = vmatmul.mubr.bf16.gmra.mrb[0].mxu0 %v3188
        %v5771 = vpop.f32.mrb[0].mxu0
        %v5772 = vadd.f32 %v5641, %v5771
        %v5773 = vpop.f32.mrb[0].mxu0
        %v5774 = vadd.f32 %v5643, %v5773
        %v5775 = vpop.f32.mrb[0].mxu0
        %v5776 = vadd.f32 %v5645, %v5775
        %v5777 = vpop.f32.mrb[0].mxu0
        %v5778 = vadd.f32 %v5647, %v5777
        %5779 = vmatprep.mubr.bf16.mxu0 %v3197
        %5780 = vmatmul.mubr.bf16.gmra.mrb[0].mxu0 %v3196
        %v5781 = vpop.f32.mrb[0].mxu0
        %v5782 = vadd.f32 %v5651, %v5781
        %v5783 = vpop.f32.mrb[0].mxu0
        %v5784 = vadd.f32 %v5653, %v5783
        %v5785 = vpop.f32.mrb[0].mxu0
        %v5786 = vadd.f32 %v5655, %v5785
        %v5787 = vpop.f32.mrb[0].mxu0
        %v5788 = vadd.f32 %v5657, %v5787
        %5789 = vmatprep.mubr.bf16.mxu0 %v3205
        %5790 = vmatmul.mubr.bf16.gmra.mrb[0].mxu0 %v3204
        %v5791 = vpop.f32.mrb[0].mxu0
        %v5792 = vadd.f32 %v5661, %v5791
        %v5793 = vpop.f32.mrb[0].mxu0
        %v5794 = vadd.f32 %v5663, %v5793
        %v5795 = vpop.f32.mrb[0].mxu0
        %v5796 = vadd.f32 %v5665, %v5795
        %v5797 = vpop.f32.mrb[0].mxu0
        %v5798 = vadd.f32 %v5667, %v5797
        %5799 = vmatprep.mubr.bf16.mxu0 %v3213
        %5800 = vmatmul.mubr.bf16.gmra.mrb[0].mxu0 %v3212
        %v5801 = vpop.f32.mrb[0].mxu0
        %v5802 = vadd.f32 %v5671, %v5801
        %v5803 = vpop.f32.mrb[0].mxu0
        %v5804 = vadd.f32 %v5673, %v5803
        %v5805 = vpop.f32.mrb[0].mxu0
        %v5806 = vadd.f32 %v5675, %v5805
        %v5807 = vpop.f32.mrb[0].mxu0
        %v5808 = vadd.f32 %v5677, %v5807
        %5809 = vmatprep.mubr.bf16.mxu0 %v3221
        %5810 = vmatmul.mubr.bf16.gmra.mrb[0].mxu0 %v3220
        %v5811 = vpop.f32.mrb[0].mxu0
        %v5812 = vadd.f32 %v5681, %v5811
        %v5813 = vpop.f32.mrb[0].mxu0
        %v5814 = vadd.f32 %v5683, %v5813
        %v5815 = vpop.f32.mrb[0].mxu0
        %v5816 = vadd.f32 %v5685, %v5815
        %v5817 = vpop.f32.mrb[0].mxu0
        %v5818 = vadd.f32 %v5687, %v5817
        %5819 = vmatprep.mubr.bf16.mxu0 %v3229
        %5820 = vmatmul.mubr.bf16.gmra.mrb[0].mxu0 %v3228
        %v5821 = vpop.f32.mrb[0].mxu0
        %v5822 = vadd.f32 %v5691, %v5821
        %v5823 = vpop.f32.mrb[0].mxu0
        %v5824 = vadd.f32 %v5693, %v5823
        %v5825 = vpop.f32.mrb[0].mxu0
        %v5826 = vadd.f32 %v5695, %v5825
        %v5827 = vpop.f32.mrb[0].mxu0
        %v5828 = vadd.f32 %v5697, %v5827
        %5829 = vmatprep.mubr.bf16.mxu0 %v3237
        %5830 = vmatmul.mubr.bf16.gmra.mrb[0].mxu0 %v3236
        %v5831 = vpop.f32.mrb[0].mxu0
        %v5832 = vadd.f32 %v5701, %v5831
        %v5833 = vpop.f32.mrb[0].mxu0
        %v5834 = vadd.f32 %v5703, %v5833
        %v5835 = vpop.f32.mrb[0].mxu0
        %v5836 = vadd.f32 %v5705, %v5835
        %v5837 = vpop.f32.mrb[0].mxu0
        %v5838 = vadd.f32 %v5707, %v5837
        %5839 = vmatprep.mubr.bf16.mxu0 %v3245
        %5840 = vmatmul.mubr.bf16.gmra.mrb[0].mxu0 %v3244
        %v5841 = vpop.f32.mrb[0].mxu0
        %v5842 = vadd.f32 %v5711, %v5841
        %v5843 = vpop.f32.mrb[0].mxu0
        %v5844 = vadd.f32 %v5713, %v5843
        %v5845 = vpop.f32.mrb[0].mxu0
        %v5846 = vadd.f32 %v5715, %v5845
        %v5847 = vpop.f32.mrb[0].mxu0
        %v5848 = vadd.f32 %v5717, %v5847
        %5849 = vmatprep.mubr.bf16.mxu0 %v3253
        %5850 = vmatmul.mubr.bf16.gmra.mrb[0].mxu0 %v3252
        %v5851 = vpop.f32.mrb[0].mxu0
        %v5852 = vadd.f32 %v5721, %v5851
        %v5853 = vpop.f32.mrb[0].mxu0
        %v5854 = vadd.f32 %v5723, %v5853
        %v5855 = vpop.f32.mrb[0].mxu0
        %v5856 = vadd.f32 %v5725, %v5855
        %v5857 = vpop.f32.mrb[0].mxu0
        %v5858 = vadd.f32 %v5727, %v5857
        %5859 = vmatprep.mubr.bf16.mxu0 %v3261
        %5860 = vmatmul.mubr.bf16.gmra.mrb[0].mxu0 %v3260
        %v5861 = vpop.f32.mrb[0].mxu0
        %v5862 = vadd.f32 %v5731, %v5861
        %v5863 = vpop.f32.mrb[0].mxu0
        %v5864 = vadd.f32 %v5733, %v5863
        %v5865 = vpop.f32.mrb[0].mxu0
        %v5866 = vpop.f32.mrb[0].mxu0
        %5867 = vdwg.mxu0
        %5868 = vst [vmem:[%s285] sm:$0xff] %v5248
        %5869 = vst [vmem:[%s285 + $0x8] sm:$0xff] %v5250
        %5870 = vst [vmem:[%s285 + $0x10] sm:$0xff] %v5772
        %5871 = vst [vmem:[%s285 + $0x18] sm:$0xff] %v5774
        %5872 = vst [vmem:[%s285 + $0x20] sm:$0xff] %v5252
        %5873 = vst [vmem:[%s285 + $0x28] sm:$0xff] %v5254
        %5874 = vst [vmem:[%s285 + $0x30] sm:$0xff] %v5776
        %5875 = vst [vmem:[%s285 + $0x38] sm:$0xff] %v5778
        %5876 = vst [vmem:[%s285 + $0x40] sm:$0xff] %v5258
        %5877 = vst [vmem:[%s285 + $0x48] sm:$0xff] %v5260
        %5878 = vst [vmem:[%s285 + $0x50] sm:$0xff] %v5782
        %5879 = vst [vmem:[%s285 + $0x58] sm:$0xff] %v5784
        %5880 = vst [vmem:[%s285 + $0x60] sm:$0xff] %v5262
        %5881 = vst [vmem:[%s285 + $0x68] sm:$0xff] %v5264
        %5882 = vst [vmem:[%s285 + $0x70] sm:$0xff] %v5786
        %5883 = vst [vmem:[%s285 + $0x78] sm:$0xff] %v5788
        %5884 = vst [vmem:[%s285 + $0x80] sm:$0xff] %v5268
        %5885 = vst [vmem:[%s285 + $0x88] sm:$0xff] %v5270
        %5886 = vst [vmem:[%s285 + $0x90] sm:$0xff] %v5792
        %5887 = vst [vmem:[%s285 + $0x98] sm:$0xff] %v5794
        %5888 = vst [vmem:[%s285 + $0xa0] sm:$0xff] %v5272
        %5889 = vst [vmem:[%s285 + $0xa8] sm:$0xff] %v5274
        %5890 = vst [vmem:[%s285 + $0xb0] sm:$0xff] %v5796
        %5891 = vst [vmem:[%s285 + $0xb8] sm:$0xff] %v5798
        %5892 = vst [vmem:[%s285 + $0xc0] sm:$0xff] %v5278
        %5893 = vst [vmem:[%s285 + $0xc8] sm:$0xff] %v5280
        %5894 = vst [vmem:[%s285 + $0xd0] sm:$0xff] %v5802
        %5895 = vst [vmem:[%s285 + $0xd8] sm:$0xff] %v5804
        %5896 = vst [vmem:[%s285 + $0xe0] sm:$0xff] %v5282
        %5897 = vst [vmem:[%s285 + $0xe8] sm:$0xff] %v5284
        %5898 = vst [vmem:[%s285 + $0xf0] sm:$0xff] %v5806
        %5899 = vst [vmem:[%s285 + $0xf8] sm:$0xff] %v5808
        %5900 = vst [vmem:[%s285 + $0x100] sm:$0xff] %v5288
        %5901 = vst [vmem:[%s285 + $0x108] sm:$0xff] %v5290
        %5902 = vst [vmem:[%s285 + $0x110] sm:$0xff] %v5812
        %5903 = vst [vmem:[%s285 + $0x118] sm:$0xff] %v5814
        %5904 = vst [vmem:[%s285 + $0x120] sm:$0xff] %v5292
        %5905 = vst [vmem:[%s285 + $0x128] sm:$0xff] %v5294
        %5906 = vst [vmem:[%s285 + $0x130] sm:$0xff] %v5816
        %5907 = vst [vmem:[%s285 + $0x138] sm:$0xff] %v5818
        %5908 = vst [vmem:[%s285 + $0x140] sm:$0xff] %v5298
        %5909 = vst [vmem:[%s285 + $0x148] sm:$0xff] %v5300
        %5910 = vst [vmem:[%s285 + $0x150] sm:$0xff] %v5822
        %5911 = vst [vmem:[%s285 + $0x158] sm:$0xff] %v5824
        %5912 = vst [vmem:[%s285 + $0x160] sm:$0xff] %v5302
        %5913 = vst [vmem:[%s285 + $0x168] sm:$0xff] %v5304
        %5914 = vst [vmem:[%s285 + $0x170] sm:$0xff] %v5826
        %5915 = vst [vmem:[%s285 + $0x178] sm:$0xff] %v5828
        %5916 = vst [vmem:[%s285 + $0x180] sm:$0xff] %v5308
        %5917 = vst [vmem:[%s285 + $0x188] sm:$0xff] %v5310
        %5918 = vst [vmem:[%s285 + $0x190] sm:$0xff] %v5832
        %5919 = vst [vmem:[%s285 + $0x198] sm:$0xff] %v5834
        %5920 = vst [vmem:[%s285 + $0x1a0] sm:$0xff] %v5312
        %5921 = vst [vmem:[%s285 + $0x1a8] sm:$0xff] %v5314
        %5922 = vst [vmem:[%s285 + $0x1b0] sm:$0xff] %v5836
        %5923 = vst [vmem:[%s285 + $0x1b8] sm:$0xff] %v5838
        %5924 = vst [vmem:[%s285 + $0x1c0] sm:$0xff] %v5318
        %5925 = vst [vmem:[%s285 + $0x1c8] sm:$0xff] %v5320
        %5926 = vst [vmem:[%s285 + $0x1d0] sm:$0xff] %v5842
        %5927 = vst [vmem:[%s285 + $0x1d8] sm:$0xff] %v5844
        %5928 = vst [vmem:[%s285 + $0x1e0] sm:$0xff] %v5322
        %5929 = vst [vmem:[%s285 + $0x1e8] sm:$0xff] %v5324
        %5930 = vst [vmem:[%s285 + $0x1f0] sm:$0xff] %v5846
        %5931 = vst [vmem:[%s285 + $0x1f8] sm:$0xff] %v5848
        %5932 = vst [vmem:[%s285 + $0x200] sm:$0xff] %v5328
        %5933 = vst [vmem:[%s285 + $0x208] sm:$0xff] %v5330
        %5934 = vst [vmem:[%s285 + $0x210] sm:$0xff] %v5852
        %5935 = vst [vmem:[%s285 + $0x218] sm:$0xff] %v5854
        %5936 = vst [vmem:[%s285 + $0x220] sm:$0xff] %v5332
        %5937 = vst [vmem:[%s285 + $0x228] sm:$0xff] %v5334
        %5938 = vst [vmem:[%s285 + $0x230] sm:$0xff] %v5856
        %5939 = vst [vmem:[%s285 + $0x238] sm:$0xff] %v5858
        %5940 = vst [vmem:[%s285 + $0x240] sm:$0xff] %v5338
        %5941 = vst [vmem:[%s285 + $0x248] sm:$0xff] %v5340
        %5942 = vst [vmem:[%s285 + $0x250] sm:$0xff] %v5862
        %5943 = vst [vmem:[%s285 + $0x258] sm:$0xff] %v5864
        %s5944 = sand.u32 %s142, 1
        %s5945 = scalar_lea.sflag [#allocation4], %s5944
        %s5946 = sand.u32 %s142, 1
        %s5947 = smul.addr %s5946, 608
        %s5948 = scalar_lea.vmem [#allocation10], %s5947
        // Predicated region
        $region57: #{tpu_custom_call.1} parent=39 // pred_check
          %p5949 = pneg %p152
        $region58: #{tpu_custom_call.1} parent=39 // pred_check_branch
          %5951 = sbr.rel (%p5949) target = $region60
        $region59: #{tpu_custom_call.1} parent=39 // pred_region
          %s5952 = smul.u32 19, %s24
          %s5954 = ssub.s32 9728, 9728
          %5955 = vsyncadd %s5945, %s5954
          %s5956 = smul.addr %s5952, 4
          %s5957 = smul.addr %s5956, 128
          %s5958 = scalar_lea.hbm %s5, %s5957
          %s5959 = sshll.u32 %s5948, 4
          %s5960 = int_to_ptr.vmem [resolvable:$true] %s5959
          %5965 = dma.vmem_to_hbm [thread:$0]  %s5960, 9728, %s5958, %s5945, 512, 512, 32
        $region60: #{tpu_custom_call.1} parent=39 // pred_fallthru
          _
      $region40: #{tpu_custom_call.1} parent=5 // pred_fallthru
        _
      %p5966 = scmp.le.s32.totalorder 2, %s19
      // Predicated region
      $region61: #{tpu_custom_call.1} parent=5 // pred_check
        %p5967 = pneg %p5966
      $region62: #{tpu_custom_call.1} parent=5 // pred_check_branch
        %5969 = sbr.rel (%p5967) target = $region64
      $region63: #{tpu_custom_call.1} parent=5 // pred_region
        %s5970 = ssub.s32 %s19, 2
        // Predicated region
        $region65: #{tpu_custom_call.1} parent=63 // pred_check
          %p5971 = pneg %p158
        $region66: #{tpu_custom_call.1} parent=63 // pred_check_branch
          %5973 = sbr.rel (%p5971) target = $region68
        $region67: #{tpu_custom_call.1} parent=63 // pred_region
          %s5974 = sand.u32 %s143, 1
          %s5975 = scalar_lea.sflag [#allocation4], %s5974
          %s5976 = sand.u32 %s143, 1
          %s5977 = smul.addr %s5976, 608
          %s5978 = scalar_lea.vmem [#allocation10], %s5977
          %5979 = dma.done %s5975, 9728
        $region68: #{tpu_custom_call.1} parent=63 // pred_fallthru
          _
      $region64: #{tpu_custom_call.1} parent=5 // pred_fallthru
        _
    $region6: #{tpu_custom_call.1} parent=1 // loop_footer
      %s23 = sadd.s32 1, %s19
    $region7: #{tpu_custom_call.1} parent=1 // loop_footer_branch
      %18 = sbr.rel target = $region3
    $region8: #{tpu_custom_call.1} parent=1 // loop_exit
      _
    %5980 = vsyncpa [#allocation3], 1
    %s5981 = scalar_lea.sflag [#allocation3], 1
    %5982 = vsyncpa %s5981, 1
    %5983 = vsyncpa [#allocation6], 1
    %5984 = vsyncpa [#allocation9], 1
    %5985 = vsyncpa [#allocation4], 1
    %s5986 = scalar_lea.sflag [#allocation4], 1
    %5987 = vsyncpa %s5986, 1

</llo_original>
